<compile_context>
chip_gen: v5e
topology: v5e:2x2
jax: 0.10.0
libtpu: 0.0.40
codegen_flags: <defaults>
</compile_context>

<pallas_src>
import functools
import math

import numpy as np
import jax
import jax.numpy as jnp
from jax import lax
from jax.experimental import pallas as pl
from jax.experimental.pallas import tpu as pltpu

VIEW_SIZE = 5
AID_DIM = 4
CONV_HW = 2 * VIEW_SIZE + 1          # 11 (input spatial)
OUT_HW = 2 * VIEW_SIZE - 5           # 5  (spatial after three valid 3x3 convs)
FLAT = 32 * OUT_HW * OUT_HW          # 800

# 512 x 800 f32 activations ~1.6 MB -> far below the scoped VMEM default on
# all generations (v7x physical VMEM = 64 MiB), while amortizing per-step
# RHS re-staging and the ~0.35 us/step pipeline overhead.
MAX_BATCH_TILE = 512


def _cdiv(a, b):
    return -(-a // b)


def _round_up(x, m):
    return _cdiv(x, m) * m


def _choose_batch_tile(B):
    """Sublane-aligned, balanced batch tile; >=2 grid steps when B allows (v7x)."""
    tb = _round_up(_cdiv(B, _cdiv(B, MAX_BATCH_TILE)), 8)   # pad waste < 8 rows/tile
    if B > 8 and _round_up(B, tb) // tb < 2:
        tb = _round_up(_cdiv(B, 2), 8)                      # give both v7x TCs work
    return tb


# ---------------------------------------------------------------------------
# Host-side weight preparation: unroll each 3x3 VALID conv into a dense GEMM.
# Row order is the HWC flatten of the NHWC input, column order the HWC flatten
# of the NHWC output, so consecutive layers (and conv_dense) compose directly.
# (PyTorch flattens CHW; since weights are synthesized in-script this is just
#  an equivalent fixed permutation of the conv_dense rows.)
# ---------------------------------------------------------------------------
def _conv_as_matmul(w_hwio, hi, wi):
    kh, kw, cin, cout = w_hwio.shape
    ho, wo = hi - kh + 1, wi - kw + 1
    m = np.zeros((hi * wi * cin, ho * wo * cout), np.float32)
    w = np.asarray(w_hwio, np.float32)
    for oy in range(ho):
        for ox in range(wo):
            col = (oy * wo + ox) * cout
            for dy in range(kh):
                for dx in range(kw):
                    row = ((oy + dy) * wi + (ox + dx)) * cin
                    m[row:row + cin, col:col + cout] = w[dy, dx]
    return m


def _conv_bias(b, ho, wo):
    return np.tile(np.asarray(b, np.float32), ho * wo).reshape(1, -1)


# ---------------------------------------------------------------------------
# Kernel: one batch tile of the full forward pass, every layer one MXU matmul.
# ---------------------------------------------------------------------------
def snake_kernel(conv_ref, aid_ref, mask_ref,
                 w1_ref, b1_ref, w2_ref, b2_ref, w3_ref, b3_ref,
                 wd_ref, bd_ref, w1a_ref, w1b_ref, bd1_ref, w2d_ref, bd2_ref,
                 out_ref, *, inv_temperature):
    f32 = jnp.float32
    bf16 = jnp.bfloat16

    def dense_relu_bf16(x_f32, w_ref, b_ref):
        # bf16 x bf16 -> f32 accumulate on the MXU; bias + ReLU in f32.
        y = jnp.dot(x_f32.astype(bf16), w_ref[...],
                    preferred_element_type=f32) + b_ref[...]
        return jnp.maximum(y, 0.0)

    x = conv_ref[...]                            # (TB, 121) f32, flattened 11x11
    x = dense_relu_bf16(x, w1_ref, b1_ref)       # (TB, 648)  == conv1 + relu
    x = dense_relu_bf16(x, w2_ref, b2_ref)       # (TB, 784)  == conv2 + relu
    x = dense_relu_bf16(x, w3_ref, b3_ref)       # (TB, 800)  == conv3 + relu
    x = dense_relu_bf16(x, wd_ref, bd_ref)       # (TB, 32)   conv_dense + relu

    # dense1 over concat([x, aid]) == x @ W1a + aid @ W1b   (f32 head, no concat)
    h1 = (jnp.dot(x, w1a_ref[...], preferred_element_type=f32)
          + jnp.dot(aid_ref[...], w1b_ref[...], preferred_element_type=f32)
          + bd1_ref[...])
    h1 = jnp.maximum(h1, 0.0)                    # (TB, 16)

    logits = jnp.dot(h1, w2d_ref[...], preferred_element_type=f32) + bd2_ref[...]

    # score = sigmoid(logits[:, 0])  (reciprocal on the EUP slot)
    score = pl.reciprocal(1.0 + jnp.exp(-logits[:, 0:1]), approx=True)   # (TB, 1)

    # policy = softmax(masked(logits[:, 1:]) / temperature); exact normalization
    pol = logits[:, 1:4]                                                  # (TB, 3)
    pol = jnp.where(mask_ref[...] > 0.0, pol, f32(-jnp.inf))
    pol = pol * f32(inv_temperature)
    m = jnp.max(pol, axis=-1, keepdims=True)
    e = jnp.exp(pol - m)
    policy = e / jnp.sum(e, axis=-1, keepdims=True)

    # Write straight into the (TB, 4) output slab: [score | policy]
    out_ref[:, 0:1] = score
    out_ref[:, 1:4] = policy


# ---------------------------------------------------------------------------
# Wrapper
# ---------------------------------------------------------------------------
def snake_net_pallas(params, conv, aid, possible_actions, temperature=1.0):
    """conv: (B, 11, 11) float, aid: (B, 4) float, possible_actions: (B, 3) bool."""
    B = conv.shape[0]
    tb = _choose_batch_tile(B)
    pad_b = _round_up(B, tb)
    pad = pad_b - B

    x = conv.astype(jnp.float32).reshape(B, CONV_HW * CONV_HW)
    aid_f = aid.astype(jnp.float32)
    mask = possible_actions.astype(jnp.float32)
    if pad:
        x = jnp.pad(x, ((0, pad), (0, 0)))
        aid_f = jnp.pad(aid_f, ((0, pad), (0, 0)))
        mask = jnp.pad(mask, ((0, pad), (0, 0)), constant_values=1.0)  # pad rows NaN-free

    weight_names = ("w1", "b1", "w2", "b2", "w3", "b3", "wd", "bd",
                    "w1a", "w1b", "bd1", "w2d", "bd2")
    weights = [params[n] for n in weight_names]

    row_spec = lambda i: (i, 0)      # batch-tiled operands
    const_spec = lambda i: (0, 0)    # weights: resident across all grid steps
    in_specs = ([pl.BlockSpec((tb, CONV_HW * CONV_HW), row_spec),
                 pl.BlockSpec((tb, AID_DIM), row_spec),
                 pl.BlockSpec((tb, 3), row_spec)]
                + [pl.BlockSpec(w.shape, const_spec) for w in weights])

    kernel = functools.partial(snake_kernel,
                               inv_temperature=1.0 / float(temperature))
    out = pl.pallas_call(
        kernel,
        out_shape=jax.ShapeDtypeStruct((pad_b, 4), jnp.float32),
        grid=(pad_b // tb,),
        in_specs=in_specs,
        out_specs=pl.BlockSpec((tb, 4), row_spec),
        compiler_params=pltpu.CompilerParams(
            dimension_semantics=("parallel",)),   # v7x: split batch over both TCs
    )(x, aid_f, mask, *weights)

    out = out[:B]
    return out[:, 0], out[:, 1:4]


# ---------------------------------------------------------------------------
# Parameter synthesis + plain-JAX reference
# ---------------------------------------------------------------------------
def init_params(key):
    ks = jax.random.split(key, 12)

    def u(k, shape, fan_in):
        bound = 1.0 / math.sqrt(fan_in)
        return jax.random.uniform(k, shape, jnp.float32, -bound, bound)

    raw = dict(
        w1=u(ks[0], (3, 3, 1, 8), 9),        b1=u(ks[1], (8,), 9),
        w2=u(ks[2], (3, 3, 8, 16), 72),      b2=u(ks[3], (16,), 72),
        w3=u(ks[4], (3, 3, 16, 32), 144),    b3=u(ks[5], (32,), 144),
        wd=u(ks[6], (FLAT, 32), FLAT),       bd=u(ks[7], (32,), FLAT),
        wdense1=u(ks[8], (32 + AID_DIM, 16), 32 + AID_DIM),
        bd1=u(ks[9], (16,), 32 + AID_DIM),
        wdense2=u(ks[10], (16, 4), 16),
        bd2=u(ks[11], (4,), 16),
    )

    bf16 = jnp.bfloat16
    params = dict(
        # convs unrolled to dense GEMM operands (built once, host-side);
        # big GEMM weights stored bf16 for the MXU fast path, biases f32.
        w1=jnp.asarray(_conv_as_matmul(raw["w1"], CONV_HW, CONV_HW)).astype(bf16),          # (121, 648)
        b1=jnp.asarray(_conv_bias(raw["b1"], CONV_HW - 2, CONV_HW - 2)),                    # (1, 648)
        w2=jnp.asarray(_conv_as_matmul(raw["w2"], CONV_HW - 2, CONV_HW - 2)).astype(bf16),  # (648, 784)
        b2=jnp.asarray(_conv_bias(raw["b2"], CONV_HW - 4, CONV_HW - 4)),                    # (1, 784)
        w3=jnp.asarray(_conv_as_matmul(raw["w3"], CONV_HW - 4, CONV_HW - 4)).astype(bf16),  # (784, 800)
        b3=jnp.asarray(_conv_bias(raw["b3"], OUT_HW, OUT_HW)),                              # (1, 800)
        wd=raw["wd"].astype(bf16), bd=raw["bd"].reshape(1, 32),
        # tiny f32 head
        w1a=raw["wdense1"][:32], w1b=raw["wdense1"][32:],
        bd1=raw["bd1"].reshape(1, 16),
        w2d=raw["wdense2"], bd2=raw["bd2"].reshape(1, 4),
    )
    return params, raw


def reference(raw, conv, aid, mask_bool, temperature=1.0):
    """Plain-JAX f32 reference with identical parameterization."""
    x = conv.astype(jnp.float32)[..., None]
    dn = ("NHWC", "HWIO", "NHWC")
    for w, b in ((raw["w1"], raw["b1"]), (raw["w2"], raw["b2"]), (raw["w3"], raw["b3"])):
        x = jax.nn.relu(lax.conv_general_dilated(x, w, (1, 1), "VALID",
                                                 dimension_numbers=dn) + b)
    x = x.reshape(x.shape[0], -1)                      # HWC flatten == wd row order
    x = jax.nn.relu(x @ raw["wd"] + raw["bd"])
    x = jnp.concatenate([x, aid.astype(jnp.float32)], axis=1)
    x = jax.nn.relu(x @ raw["wdense1"] + raw["bd1"])
    logits = x @ raw["wdense2"] + raw["bd2"]
    score = jax.nn.sigmoid(logits[:, 0])
    pol = jnp.where(mask_bool, logits[:, 1:], -jnp.inf) / temperature
    return score, jax.nn.softmax(pol, axis=1)


if __name__ == "__main__":
    key = jax.random.PRNGKey(0)
    kp, kd = jax.random.split(key)
    params, raw = init_params(kp)

    # B=2 exercises the small single-tile path; B=130 exercises the balanced
    # 2-step grid (tb=72, 14 pad rows) and the "parallel" batch axis.
    for B in (2, 130):
        kc, ka, km, kd = jax.random.split(kd, 4)
        conv = jax.random.normal(kc, (B, CONV_HW, CONV_HW), jnp.float32)
        aid = jax.random.normal(ka, (B, AID_DIM), jnp.float32)
        possible_actions = jax.random.bernoulli(km, 0.7, (B, 3))
        possible_actions = possible_actions.at[:, 0].set(True)  # >=1 legal action/row
        # TODO(synk): like the PyTorch module, an all-masked row yields NaN policy.

        score, policy = snake_net_pallas(params, conv, aid, possible_actions,
                                         temperature=1.0)
        jax.block_until_ready((score, policy))

        ref_score, ref_policy = reference(raw, conv, aid, possible_actions, 1.0)
        assert score.shape == (B,) and policy.shape == (B, 3)
        assert bool(jnp.allclose(score, ref_score, atol=2e-3, rtol=2e-3))
        assert bool(jnp.allclose(policy, ref_policy, atol=2e-3, rtol=2e-3))

    print("KERNEL_OK")
</pallas_src>

<mosaic_0001>
module attributes {stable_mosaic.version = 11 : i64} {
  func.func @snake_kernel(%arg0: i32, %arg1: memref<8x121xf32, #tpu.memory_space<vmem>>, %arg2: memref<8x4xf32, #tpu.memory_space<vmem>>, %arg3: memref<8x3xf32, #tpu.memory_space<vmem>>, %arg4: memref<121x648xbf16, #tpu.memory_space<vmem>>, %arg5: memref<1x648xf32, #tpu.memory_space<vmem>>, %arg6: memref<648x784xbf16, #tpu.memory_space<vmem>>, %arg7: memref<1x784xf32, #tpu.memory_space<vmem>>, %arg8: memref<784x800xbf16, #tpu.memory_space<vmem>>, %arg9: memref<1x800xf32, #tpu.memory_space<vmem>>, %arg10: memref<800x32xbf16, #tpu.memory_space<vmem>>, %arg11: memref<1x32xf32, #tpu.memory_space<vmem>>, %arg12: memref<32x16xf32, #tpu.memory_space<vmem>>, %arg13: memref<4x16xf32, #tpu.memory_space<vmem>>, %arg14: memref<1x16xf32, #tpu.memory_space<vmem>>, %arg15: memref<16x4xf32, #tpu.memory_space<vmem>>, %arg16: memref<1x4xf32, #tpu.memory_space<vmem>>, %arg17: memref<8x4xf32, #tpu.memory_space<vmem>>) attributes {dimension_semantics = [#tpu.dimension_semantics<parallel>], iteration_bounds = array<i64: 1>, scalar_prefetch = 0 : i64, scratch_operands = 0 : i64, tpu.core_type = #tpu.core_type<tc>, window_params = [{transform_indices = @transform_0, window_bounds = array<i64: 8, 121>}, {transform_indices = @transform_1, window_bounds = array<i64: 8, 4>}, {transform_indices = @transform_2, window_bounds = array<i64: 8, 3>}, {pipeline_mode = #tpu.pipeline_mode<synchronous>, transform_indices = @transform_3, window_bounds = array<i64: 121, 648>}, {pipeline_mode = #tpu.pipeline_mode<synchronous>, transform_indices = @transform_4, window_bounds = array<i64: 1, 648>}, {pipeline_mode = #tpu.pipeline_mode<synchronous>, transform_indices = @transform_5, window_bounds = array<i64: 648, 784>}, {pipeline_mode = #tpu.pipeline_mode<synchronous>, transform_indices = @transform_6, window_bounds = array<i64: 1, 784>}, {pipeline_mode = #tpu.pipeline_mode<synchronous>, transform_indices = @transform_7, window_bounds = array<i64: 784, 800>}, {pipeline_mode = #tpu.pipeline_mode<synchronous>, transform_indices = @transform_8, window_bounds = array<i64: 1, 800>}, {pipeline_mode = #tpu.pipeline_mode<synchronous>, transform_indices = @transform_9, window_bounds = array<i64: 800, 32>}, {pipeline_mode = #tpu.pipeline_mode<synchronous>, transform_indices = @transform_10, window_bounds = array<i64: 1, 32>}, {pipeline_mode = #tpu.pipeline_mode<synchronous>, transform_indices = @transform_11, window_bounds = array<i64: 32, 16>}, {pipeline_mode = #tpu.pipeline_mode<synchronous>, transform_indices = @transform_12, window_bounds = array<i64: 4, 16>}, {pipeline_mode = #tpu.pipeline_mode<synchronous>, transform_indices = @transform_13, window_bounds = array<i64: 1, 16>}, {pipeline_mode = #tpu.pipeline_mode<synchronous>, transform_indices = @transform_14, window_bounds = array<i64: 16, 4>}, {pipeline_mode = #tpu.pipeline_mode<synchronous>, transform_indices = @transform_15, window_bounds = array<i64: 1, 4>}, {transform_indices = @transform_16, window_bounds = array<i64: 8, 4>}]} {
    %c0 = arith.constant 0 : index
    %c0_0 = arith.constant 0 : index
    %0 = vector.load %arg1[%c0, %c0_0] : memref<8x121xf32, #tpu.memory_space<vmem>>, vector<8x121xf32>
    %1 = arith.truncf %0 : vector<8x121xf32> to vector<8x121xbf16>
    %c0_1 = arith.constant 0 : index
    %c0_2 = arith.constant 0 : index
    %2 = vector.load %arg4[%c0_1, %c0_2] : memref<121x648xbf16, #tpu.memory_space<vmem>>, vector<121x648xbf16>
    %cst = arith.constant dense<0.000000e+00> : vector<8x648xf32>
    %3 = tpu.matmul %1, %2, %cst {dimension_numbers = #tpu.dot_dimension_numbers<[1], [0], [0], [1], [0, 0, 1, 1], [], []>} : vector<8x121xbf16>, vector<121x648xbf16>, vector<8x648xf32> -> vector<8x648xf32>
    %c0_3 = arith.constant 0 : index
    %c0_4 = arith.constant 0 : index
    %4 = vector.load %arg5[%c0_3, %c0_4] : memref<1x648xf32, #tpu.memory_space<vmem>>, vector<1x648xf32>
    %5 = vector.broadcast %4 : vector<1x648xf32> to vector<8x648xf32>
    %6 = arith.addf %3, %5 : vector<8x648xf32>
    %cst_5 = arith.constant 0.000000e+00 : f32
    %7 = vector.broadcast %cst_5 : f32 to vector<8x648xf32>
    %8 = arith.maximumf %6, %7 : vector<8x648xf32>
    %9 = arith.truncf %8 : vector<8x648xf32> to vector<8x648xbf16>
    %c0_6 = arith.constant 0 : index
    %c0_7 = arith.constant 0 : index
    %10 = vector.load %arg6[%c0_6, %c0_7] : memref<648x784xbf16, #tpu.memory_space<vmem>>, vector<648x784xbf16>
    %cst_8 = arith.constant dense<0.000000e+00> : vector<8x784xf32>
    %11 = tpu.matmul %9, %10, %cst_8 {dimension_numbers = #tpu.dot_dimension_numbers<[1], [0], [0], [1], [0, 0, 1, 1], [], []>} : vector<8x648xbf16>, vector<648x784xbf16>, vector<8x784xf32> -> vector<8x784xf32>
    %c0_9 = arith.constant 0 : index
    %c0_10 = arith.constant 0 : index
    %12 = vector.load %arg7[%c0_9, %c0_10] : memref<1x784xf32, #tpu.memory_space<vmem>>, vector<1x784xf32>
    %13 = vector.broadcast %12 : vector<1x784xf32> to vector<8x784xf32>
    %14 = arith.addf %11, %13 : vector<8x784xf32>
    %cst_11 = arith.constant 0.000000e+00 : f32
    %15 = vector.broadcast %cst_11 : f32 to vector<8x784xf32>
    %16 = arith.maximumf %14, %15 : vector<8x784xf32>
    %17 = arith.truncf %16 : vector<8x784xf32> to vector<8x784xbf16>
    %c0_12 = arith.constant 0 : index
    %c0_13 = arith.constant 0 : index
    %18 = vector.load %arg8[%c0_12, %c0_13] : memref<784x800xbf16, #tpu.memory_space<vmem>>, vector<784x800xbf16>
    %cst_14 = arith.constant dense<0.000000e+00> : vector<8x800xf32>
    %19 = tpu.matmul %17, %18, %cst_14 {dimension_numbers = #tpu.dot_dimension_numbers<[1], [0], [0], [1], [0, 0, 1, 1], [], []>} : vector<8x784xbf16>, vector<784x800xbf16>, vector<8x800xf32> -> vector<8x800xf32>
    %c0_15 = arith.constant 0 : index
    %c0_16 = arith.constant 0 : index
    %20 = vector.load %arg9[%c0_15, %c0_16] : memref<1x800xf32, #tpu.memory_space<vmem>>, vector<1x800xf32>
    %21 = vector.broadcast %20 : vector<1x800xf32> to vector<8x800xf32>
    %22 = arith.addf %19, %21 : vector<8x800xf32>
    %cst_17 = arith.constant 0.000000e+00 : f32
    %23 = vector.broadcast %cst_17 : f32 to vector<8x800xf32>
    %24 = arith.maximumf %22, %23 : vector<8x800xf32>
    %25 = arith.truncf %24 : vector<8x800xf32> to vector<8x800xbf16>
    %c0_18 = arith.constant 0 : index
    %c0_19 = arith.constant 0 : index
    %26 = vector.load %arg10[%c0_18, %c0_19] : memref<800x32xbf16, #tpu.memory_space<vmem>>, vector<800x32xbf16>
    %cst_20 = arith.constant dense<0.000000e+00> : vector<8x32xf32>
    %27 = tpu.matmul %25, %26, %cst_20 {dimension_numbers = #tpu.dot_dimension_numbers<[1], [0], [0], [1], [0, 0, 1, 1], [], []>} : vector<8x800xbf16>, vector<800x32xbf16>, vector<8x32xf32> -> vector<8x32xf32>
    %c0_21 = arith.constant 0 : index
    %c0_22 = arith.constant 0 : index
    %28 = vector.load %arg11[%c0_21, %c0_22] : memref<1x32xf32, #tpu.memory_space<vmem>>, vector<1x32xf32>
    %29 = vector.broadcast %28 : vector<1x32xf32> to vector<8x32xf32>
    %30 = arith.addf %27, %29 : vector<8x32xf32>
    %cst_23 = arith.constant 0.000000e+00 : f32
    %31 = vector.broadcast %cst_23 : f32 to vector<8x32xf32>
    %32 = arith.maximumf %30, %31 : vector<8x32xf32>
    %c0_24 = arith.constant 0 : index
    %c0_25 = arith.constant 0 : index
    %33 = vector.load %arg12[%c0_24, %c0_25] : memref<32x16xf32, #tpu.memory_space<vmem>>, vector<32x16xf32>
    %cst_26 = arith.constant dense<0.000000e+00> : vector<8x16xf32>
    %34 = tpu.matmul %32, %33, %cst_26 {dimension_numbers = #tpu.dot_dimension_numbers<[1], [0], [0], [1], [0, 0, 1, 1], [], []>} : vector<8x32xf32>, vector<32x16xf32>, vector<8x16xf32> -> vector<8x16xf32>
    %c0_27 = arith.constant 0 : index
    %c0_28 = arith.constant 0 : index
    %35 = vector.load %arg2[%c0_27, %c0_28] : memref<8x4xf32, #tpu.memory_space<vmem>>, vector<8x4xf32>
    %c0_29 = arith.constant 0 : index
    %c0_30 = arith.constant 0 : index
    %36 = vector.load %arg13[%c0_29, %c0_30] : memref<4x16xf32, #tpu.memory_space<vmem>>, vector<4x16xf32>
    %cst_31 = arith.constant dense<0.000000e+00> : vector<8x16xf32>
    %37 = tpu.matmul %35, %36, %cst_31 {dimension_numbers = #tpu.dot_dimension_numbers<[1], [0], [0], [1], [0, 0, 1, 1], [], []>} : vector<8x4xf32>, vector<4x16xf32>, vector<8x16xf32> -> vector<8x16xf32>
    %38 = arith.addf %34, %37 : vector<8x16xf32>
    %c0_32 = arith.constant 0 : index
    %c0_33 = arith.constant 0 : index
    %39 = vector.load %arg14[%c0_32, %c0_33] : memref<1x16xf32, #tpu.memory_space<vmem>>, vector<1x16xf32>
    %40 = vector.broadcast %39 : vector<1x16xf32> to vector<8x16xf32>
    %41 = arith.addf %38, %40 : vector<8x16xf32>
    %cst_34 = arith.constant 0.000000e+00 : f32
    %42 = vector.broadcast %cst_34 : f32 to vector<8x16xf32>
    %43 = arith.maximumf %41, %42 : vector<8x16xf32>
    %c0_35 = arith.constant 0 : index
    %c0_36 = arith.constant 0 : index
    %44 = vector.load %arg15[%c0_35, %c0_36] : memref<16x4xf32, #tpu.memory_space<vmem>>, vector<16x4xf32>
    %cst_37 = arith.constant dense<0.000000e+00> : vector<8x4xf32>
    %45 = tpu.matmul %43, %44, %cst_37 {dimension_numbers = #tpu.dot_dimension_numbers<[1], [0], [0], [1], [0, 0, 1, 1], [], []>} : vector<8x16xf32>, vector<16x4xf32>, vector<8x4xf32> -> vector<8x4xf32>
    %c0_38 = arith.constant 0 : index
    %c0_39 = arith.constant 0 : index
    %46 = vector.load %arg16[%c0_38, %c0_39] : memref<1x4xf32, #tpu.memory_space<vmem>>, vector<1x4xf32>
    %47 = vector.broadcast %46 : vector<1x4xf32> to vector<8x4xf32>
    %48 = arith.addf %45, %47 : vector<8x4xf32>
    %49 = vector.extract_strided_slice %48 {offsets = [0, 0], sizes = [8, 1], strides = [1, 1]} : vector<8x4xf32> to vector<8x1xf32>
    %cst_40 = arith.constant 0.000000e+00 : f32
    %50 = vector.broadcast %cst_40 : f32 to vector<8x1xf32>
    %51 = arith.subf %50, %49 : vector<8x1xf32>
    %52 = math.exp %51 : vector<8x1xf32>
    %cst_41 = arith.constant 1.000000e+00 : f32
    %53 = vector.broadcast %cst_41 : f32 to vector<8x1xf32>
    %54 = arith.addf %53, %52 : vector<8x1xf32>
    %55 = tpu.reciprocal %54 {approx = true} : vector<8x1xf32> -> vector<8x1xf32>
    %56 = vector.extract_strided_slice %48 {offsets = [0, 1], sizes = [8, 3], strides = [1, 1]} : vector<8x4xf32> to vector<8x3xf32>
    %c0_42 = arith.constant 0 : index
    %c0_43 = arith.constant 0 : index
    %57 = vector.load %arg3[%c0_42, %c0_43] : memref<8x3xf32, #tpu.memory_space<vmem>>, vector<8x3xf32>
    %cst_44 = arith.constant 0.000000e+00 : f32
    %58 = vector.broadcast %cst_44 : f32 to vector<8x3xf32>
    %59 = arith.cmpf ogt, %57, %58 : vector<8x3xf32>
    %cst_45 = arith.constant 0xFF800000 : f32
    %60 = vector.broadcast %cst_45 : f32 to vector<8x3xf32>
    %61 = arith.select %59, %56, %60 : vector<8x3xi1>, vector<8x3xf32>
    %cst_46 = arith.constant 1.000000e+00 : f32
    %62 = vector.broadcast %cst_46 : f32 to vector<8x3xf32>
    %63 = arith.mulf %61, %62 : vector<8x3xf32>
    %cst_47 = arith.constant dense<0xFF800000> : vector<8xf32>
    %64 = vector.multi_reduction <maximumf>, %63, %cst_47 [1] : vector<8x3xf32> to vector<8xf32>
    %65 = vector.shape_cast %64 : vector<8xf32> to vector<8x1xf32>
    %66 = vector.broadcast %65 : vector<8x1xf32> to vector<8x3xf32>
    %67 = arith.subf %63, %66 : vector<8x3xf32>
    %68 = math.exp %67 : vector<8x3xf32>
    %cst_48 = arith.constant dense<0.000000e+00> : vector<8xf32>
    %69 = vector.multi_reduction <add>, %68, %cst_48 [1] : vector<8x3xf32> to vector<8xf32>
    %70 = vector.shape_cast %69 : vector<8xf32> to vector<8x1xf32>
    %71 = vector.broadcast %70 : vector<8x1xf32> to vector<8x3xf32>
    %72 = arith.divf %68, %71 : vector<8x3xf32>
    %c0_49 = arith.constant 0 : index
    %c0_50 = arith.constant 0 : index
    %73 = vector.load %arg17[%c0_49, %c0_50] : memref<8x4xf32, #tpu.memory_space<vmem>>, vector<8x1xf32>
    tpu.vector_store %arg17[%c0_49, %c0_50], %55 {strides = array<i32>} : memref<8x4xf32, #tpu.memory_space<vmem>>, vector<8x1xf32>,
    %c0_51 = arith.constant 0 : index
    %c1 = arith.constant 1 : index
    %74 = vector.load %arg17[%c0_51, %c1] : memref<8x4xf32, #tpu.memory_space<vmem>>, vector<8x3xf32>
    tpu.vector_store %arg17[%c0_51, %c1], %72 {strides = array<i32>} : memref<8x4xf32, #tpu.memory_space<vmem>>, vector<8x3xf32>,
    return
  }
  func.func @transform_0(%arg0: i32) -> (i32, i32) {
    %c0_i32 = arith.constant 0 : i32
    %c0_i32_0 = arith.constant 0 : i32
    return %arg0, %c0_i32 : i32, i32
  }
  func.func @transform_1(%arg0: i32) -> (i32, i32) {
    %c0_i32 = arith.constant 0 : i32
    %c0_i32_0 = arith.constant 0 : i32
    return %arg0, %c0_i32 : i32, i32
  }
  func.func @transform_2(%arg0: i32) -> (i32, i32) {
    %c0_i32 = arith.constant 0 : i32
    %c0_i32_0 = arith.constant 0 : i32
    return %arg0, %c0_i32 : i32, i32
  }
  func.func @transform_3(%arg0: i32) -> (i32, i32) {
    %c0_i32 = arith.constant 0 : i32
    %c0_i32_0 = arith.constant 0 : i32
    %c0_i32_1 = arith.constant 0 : i32
    return %c0_i32, %c0_i32_0 : i32, i32
  }
  func.func @transform_4(%arg0: i32) -> (i32, i32) {
    %c0_i32 = arith.constant 0 : i32
    %c0_i32_0 = arith.constant 0 : i32
    %c0_i32_1 = arith.constant 0 : i32
    return %c0_i32, %c0_i32_0 : i32, i32
  }
  func.func @transform_5(%arg0: i32) -> (i32, i32) {
    %c0_i32 = arith.constant 0 : i32
    %c0_i32_0 = arith.constant 0 : i32
    %c0_i32_1 = arith.constant 0 : i32
    return %c0_i32, %c0_i32_0 : i32, i32
  }
  func.func @transform_6(%arg0: i32) -> (i32, i32) {
    %c0_i32 = arith.constant 0 : i32
    %c0_i32_0 = arith.constant 0 : i32
    %c0_i32_1 = arith.constant 0 : i32
    return %c0_i32, %c0_i32_0 : i32, i32
  }
  func.func @transform_7(%arg0: i32) -> (i32, i32) {
    %c0_i32 = arith.constant 0 : i32
    %c0_i32_0 = arith.constant 0 : i32
    %c0_i32_1 = arith.constant 0 : i32
    return %c0_i32, %c0_i32_0 : i32, i32
  }
  func.func @transform_8(%arg0: i32) -> (i32, i32) {
    %c0_i32 = arith.constant 0 : i32
    %c0_i32_0 = arith.constant 0 : i32
    %c0_i32_1 = arith.constant 0 : i32
    return %c0_i32, %c0_i32_0 : i32, i32
  }
  func.func @transform_9(%arg0: i32) -> (i32, i32) {
    %c0_i32 = arith.constant 0 : i32
    %c0_i32_0 = arith.constant 0 : i32
    %c0_i32_1 = arith.constant 0 : i32
    return %c0_i32, %c0_i32_0 : i32, i32
  }
  func.func @transform_10(%arg0: i32) -> (i32, i32) {
    %c0_i32 = arith.constant 0 : i32
    %c0_i32_0 = arith.constant 0 : i32
    %c0_i32_1 = arith.constant 0 : i32
    return %c0_i32, %c0_i32_0 : i32, i32
  }
  func.func @transform_11(%arg0: i32) -> (i32, i32) {
    %c0_i32 = arith.constant 0 : i32
    %c0_i32_0 = arith.constant 0 : i32
    %c0_i32_1 = arith.constant 0 : i32
    return %c0_i32, %c0_i32_0 : i32, i32
  }
  func.func @transform_12(%arg0: i32) -> (i32, i32) {
    %c0_i32 = arith.constant 0 : i32
    %c0_i32_0 = arith.constant 0 : i32
    %c0_i32_1 = arith.constant 0 : i32
    return %c0_i32, %c0_i32_0 : i32, i32
  }
  func.func @transform_13(%arg0: i32) -> (i32, i32) {
    %c0_i32 = arith.constant 0 : i32
    %c0_i32_0 = arith.constant 0 : i32
    %c0_i32_1 = arith.constant 0 : i32
    return %c0_i32, %c0_i32_0 : i32, i32
  }
  func.func @transform_14(%arg0: i32) -> (i32, i32) {
    %c0_i32 = arith.constant 0 : i32
    %c0_i32_0 = arith.constant 0 : i32
    %c0_i32_1 = arith.constant 0 : i32
    return %c0_i32, %c0_i32_0 : i32, i32
  }
  func.func @transform_15(%arg0: i32) -> (i32, i32) {
    %c0_i32 = arith.constant 0 : i32
    %c0_i32_0 = arith.constant 0 : i32
    %c0_i32_1 = arith.constant 0 : i32
    return %c0_i32, %c0_i32_0 : i32, i32
  }
  func.func @transform_16(%arg0: i32) -> (i32, i32) {
    %c0_i32 = arith.constant 0 : i32
    %c0_i32_0 = arith.constant 0 : i32
    return %arg0, %c0_i32 : i32, i32
  }
}

</mosaic_0001>

<llo_original>
// kernel: tpu_custom_call.1
$region0: #{tpu_custom_call.1}
  #allocation0 [shape = 'u32[]', space=smem, size = 0x4, offset = 0x4, fixed_abs, tag = 'smem constant byte address 0x4 - core index']
  #allocation1 [shape = 'u32[72,128]{1,0:T(1,128)}', space=vmem, size = 0x9000, scoped, tag = 'internal scratch']
  %s0 = inlined_call_operand.hbm [shape: f32[8,121], index: 0, kind: input, shape index: {}]
  %s1 = inlined_call_operand.vmem [shape: f32[8,4], index: 1, kind: input, shape index: {}]
  %s2 = inlined_call_operand.vmem [shape: f32[8,3], index: 2, kind: input, shape index: {}]
  %s3 = inlined_call_operand.vmem [shape: bf16[121,648], index: 3, kind: input, shape index: {}]
  %s4 = inlined_call_operand.hbm [shape: f32[1,648], index: 4, kind: input, shape index: {}]
  %s5 = inlined_call_operand.hbm [shape: bf16[648,784], index: 5, kind: input, shape index: {}]
  %s6 = inlined_call_operand.hbm [shape: f32[1,784], index: 6, kind: input, shape index: {}]
  %s7 = inlined_call_operand.hbm [shape: bf16[784,800], index: 7, kind: input, shape index: {}]
  %s8 = inlined_call_operand.hbm [shape: f32[1,800], index: 8, kind: input, shape index: {}]
  %s9 = inlined_call_operand.vmem [shape: bf16[800,32], index: 9, kind: input, shape index: {}]
  %s10 = inlined_call_operand.hbm [shape: f32[1,32], index: 10, kind: input, shape index: {}]
  %s11 = inlined_call_operand.vmem [shape: f32[32,16], index: 11, kind: input, shape index: {}]
  %s12 = inlined_call_operand.hbm [shape: f32[4,16], index: 12, kind: input, shape index: {}]
  %s13 = inlined_call_operand.hbm [shape: f32[1,16], index: 13, kind: input, shape index: {}]
  %s14 = inlined_call_operand.vmem [shape: f32[16,4], index: 14, kind: input, shape index: {}]
  %s15 = inlined_call_operand.hbm [shape: f32[1,4], index: 15, kind: input, shape index: {}]
  %s16 = inlined_call_operand.vmem [shape: f32[8,4], index: 16, kind: output, shape index: {}]
  %s17 = sld [smem:[#allocation0]]
  $region114: #{tpu_custom_call.1} parent=0
    _
  %s19 = ssub.s32 1, %s17
  %s20 = scalar_select 0, %s19, %s17
  $region1: #{tpu_custom_call.1} parent=0
    #allocation2 [shape = 'u8[4096]{0}', space=vmem, size = 0x1000, scoped, tag = 'input window, operand 0, single buffered']
    #allocation3 [shape = 's32[1]{0}', space=sflag, size = 0x4, scoped, tag = 'scoped memory for tpu_custom_call.1']
    #allocation4 [shape = 'u8[3072]{0}', space=vmem, size = 0xc00, scoped, tag = 'input window, operand 4, single buffered']
    #allocation5 [shape = 's32[1]{0}', space=sflag, size = 0x4, scoped, tag = 'scoped memory for tpu_custom_call.1']
    #allocation6 [shape = 'u8[1161216]{0}', space=vmem, size = 0x11b800, scoped, tag = 'input window, operand 5, single buffered']
    #allocation7 [shape = 'u8[3584]{0}', space=vmem, size = 0x1000, scoped, tag = 'input window, operand 6, single buffered']
    #allocation8 [shape = 's32[1]{0}', space=sflag, size = 0x4, scoped, tag = 'scoped memory for tpu_custom_call.1']
    #allocation9 [shape = 'u8[1404928]{0}', space=vmem, size = 0x157000, scoped, tag = 'input window, operand 7, single buffered']
    #allocation10 [shape = 'u8[3584]{0}', space=vmem, size = 0x1000, scoped, tag = 'input window, operand 8, single buffered']
    #allocation11 [shape = 's32[1]{0}', space=sflag, size = 0x4, scoped, tag = 'scoped memory for tpu_custom_call.1']
    #allocation12 [shape = 'u8[512]{0}', space=vmem, size = 0x400, scoped, tag = 'input window, operand 10, single buffered']
    #allocation13 [shape = 'u8[2048]{0}', space=vmem, size = 0x800, scoped, tag = 'input window, operand 12, single buffered']
    #allocation14 [shape = 's32[1]{0}', space=sflag, size = 0x4, scoped, tag = 'scoped memory for tpu_custom_call.1']
    #allocation15 [shape = 'u8[512]{0}', space=vmem, size = 0x400, scoped, tag = 'input window, operand 13, single buffered']
    #allocation16 [shape = 'u8[512]{0}', space=vmem, size = 0x400, scoped, tag = 'input window, operand 15, single buffered']
    #allocation17 [shape = 's32[1]{0}', space=sflag, size = 0x4, scoped, tag = 'scoped memory for tpu_custom_call.1']
    %21 = vsyncpa [#allocation3], 0
    %22 = vsyncpa [#allocation5], 0
    %23 = vsyncpa [#allocation8], 0
    %24 = vsyncpa [#allocation11], 0
    %25 = vsyncpa [#allocation14], 0
    %26 = vsyncpa [#allocation17], 0
    // Predicated region
    $region2: #{tpu_custom_call.1} parent=1 // pred_check
      _
    $region3: #{tpu_custom_call.1} parent=1 // pred_check_branch
      %28 = sbr.rel (0) target = $region5
    $region4: #{tpu_custom_call.1} parent=1 // pred_region
      %30 = vsyncadd [#allocation3], 0
      %s32 = sshll.u32 %s0, 4
      %s33 = int_to_ptr.hbm [resolvable:$true] %s32
      %s34 = sshll.u32 [#allocation2], 4
      %s35 = int_to_ptr.vmem [resolvable:$true] %s34
      %37 = dma.hbm_to_vmem [thread:$0]  %s33, 128, %s35, [#allocation3]
    $region5: #{tpu_custom_call.1} parent=1 // pred_fallthru
      _
    // Predicated region
    $region6: #{tpu_custom_call.1} parent=1 // pred_check
      _
    $region7: #{tpu_custom_call.1} parent=1 // pred_check_branch
      %39 = sbr.rel (0) target = $region9
    $region8: #{tpu_custom_call.1} parent=1 // pred_region
      _
    $region9: #{tpu_custom_call.1} parent=1 // pred_fallthru
      _
    // Predicated region
    $region10: #{tpu_custom_call.1} parent=1 // pred_check
      _
    $region11: #{tpu_custom_call.1} parent=1 // pred_check_branch
      %41 = sbr.rel (0) target = $region13
    $region12: #{tpu_custom_call.1} parent=1 // pred_region
      _
    $region13: #{tpu_custom_call.1} parent=1 // pred_fallthru
      _
    // Predicated region
    $region14: #{tpu_custom_call.1} parent=1 // pred_check
      _
    $region15: #{tpu_custom_call.1} parent=1 // pred_check_branch
      %43 = sbr.rel (0) target = $region17
    $region16: #{tpu_custom_call.1} parent=1 // pred_region
      _
    $region17: #{tpu_custom_call.1} parent=1 // pred_fallthru
      _
    // Predicated region
    $region18: #{tpu_custom_call.1} parent=1 // pred_check
      _
    $region19: #{tpu_custom_call.1} parent=1 // pred_check_branch
      %45 = sbr.rel (0) target = $region21
    $region20: #{tpu_custom_call.1} parent=1 // pred_region
      %47 = vsyncadd [#allocation5], 0
      %s49 = sshll.u32 %s4, 4
      %s50 = int_to_ptr.hbm [resolvable:$true] %s49
      %s51 = sshll.u32 [#allocation4], 4
      %s52 = int_to_ptr.vmem [resolvable:$true] %s51
      %54 = dma.hbm_to_vmem [thread:$0]  %s50, 96, %s52, [#allocation5]
    $region21: #{tpu_custom_call.1} parent=1 // pred_fallthru
      _
    // Predicated region
    $region22: #{tpu_custom_call.1} parent=1 // pred_check
      _
    $region23: #{tpu_custom_call.1} parent=1 // pred_check_branch
      %56 = sbr.rel (0) target = $region25
    $region24: #{tpu_custom_call.1} parent=1 // pred_region
      %58 = vsyncadd [#allocation5], 0
      %s59 = sshll.u32 %s5, 4
      %s60 = int_to_ptr.hbm [resolvable:$true] %s59
      %s61 = sshll.u32 [#allocation6], 4
      %s62 = int_to_ptr.vmem [resolvable:$true] %s61
      %67 = dma.hbm_to_vmem [thread:$0]  %s60, 36288, %s62, [#allocation5], 448, 448, 28
    $region25: #{tpu_custom_call.1} parent=1 // pred_fallthru
      _
    // Predicated region
    $region26: #{tpu_custom_call.1} parent=1 // pred_check
      _
    $region27: #{tpu_custom_call.1} parent=1 // pred_check_branch
      %69 = sbr.rel (0) target = $region29
    $region28: #{tpu_custom_call.1} parent=1 // pred_region
      %71 = vsyncadd [#allocation8], 0
      %s73 = sshll.u32 %s6, 4
      %s74 = int_to_ptr.hbm [resolvable:$true] %s73
      %s75 = sshll.u32 [#allocation7], 4
      %s76 = int_to_ptr.vmem [resolvable:$true] %s75
      %78 = dma.hbm_to_vmem [thread:$0]  %s74, 112, %s76, [#allocation8]
    $region29: #{tpu_custom_call.1} parent=1 // pred_fallthru
      _
    // Predicated region
    $region30: #{tpu_custom_call.1} parent=1 // pred_check
      _
    $region31: #{tpu_custom_call.1} parent=1 // pred_check_branch
      %80 = sbr.rel (0) target = $region33
    $region32: #{tpu_custom_call.1} parent=1 // pred_region
      %82 = vsyncadd [#allocation8], 0
      %s83 = sshll.u32 %s7, 4
      %s84 = int_to_ptr.hbm [resolvable:$true] %s83
      %s85 = sshll.u32 [#allocation9], 4
      %s86 = int_to_ptr.vmem [resolvable:$true] %s85
      %91 = dma.hbm_to_vmem [thread:$0]  %s84, 43904, %s86, [#allocation8], 448, 448, 28
    $region33: #{tpu_custom_call.1} parent=1 // pred_fallthru
      _
    // Predicated region
    $region34: #{tpu_custom_call.1} parent=1 // pred_check
      _
    $region35: #{tpu_custom_call.1} parent=1 // pred_check_branch
      %93 = sbr.rel (0) target = $region37
    $region36: #{tpu_custom_call.1} parent=1 // pred_region
      %95 = vsyncadd [#allocation11], 0
      %s97 = sshll.u32 %s8, 4
      %s98 = int_to_ptr.hbm [resolvable:$true] %s97
      %s99 = sshll.u32 [#allocation10], 4
      %s100 = int_to_ptr.vmem [resolvable:$true] %s99
      %102 = dma.hbm_to_vmem [thread:$0]  %s98, 112, %s100, [#allocation11]
    $region37: #{tpu_custom_call.1} parent=1 // pred_fallthru
      _
    // Predicated region
    $region38: #{tpu_custom_call.1} parent=1 // pred_check
      _
    $region39: #{tpu_custom_call.1} parent=1 // pred_check_branch
      %104 = sbr.rel (0) target = $region41
    $region40: #{tpu_custom_call.1} parent=1 // pred_region
      _
    $region41: #{tpu_custom_call.1} parent=1 // pred_fallthru
      _
    // Predicated region
    $region42: #{tpu_custom_call.1} parent=1 // pred_check
      _
    $region43: #{tpu_custom_call.1} parent=1 // pred_check_branch
      %106 = sbr.rel (0) target = $region45
    $region44: #{tpu_custom_call.1} parent=1 // pred_region
      %108 = vsyncadd [#allocation11], 0
      %s110 = sshll.u32 %s10, 4
      %s111 = int_to_ptr.hbm [resolvable:$true] %s110
      %s112 = sshll.u32 [#allocation12], 4
      %s113 = int_to_ptr.vmem [resolvable:$true] %s112
      %115 = dma.hbm_to_vmem [thread:$0]  %s111, 16, %s113, [#allocation11]
    $region45: #{tpu_custom_call.1} parent=1 // pred_fallthru
      _
    // Predicated region
    $region46: #{tpu_custom_call.1} parent=1 // pred_check
      _
    $region47: #{tpu_custom_call.1} parent=1 // pred_check_branch
      %117 = sbr.rel (0) target = $region49
    $region48: #{tpu_custom_call.1} parent=1 // pred_region
      _
    $region49: #{tpu_custom_call.1} parent=1 // pred_fallthru
      _
    // Predicated region
    $region50: #{tpu_custom_call.1} parent=1 // pred_check
      _
    $region51: #{tpu_custom_call.1} parent=1 // pred_check_branch
      %119 = sbr.rel (0) target = $region53
    $region52: #{tpu_custom_call.1} parent=1 // pred_region
      %121 = vsyncadd [#allocation14], 0
      %s123 = sshll.u32 %s12, 4
      %s124 = int_to_ptr.hbm [resolvable:$true] %s123
      %s125 = sshll.u32 [#allocation13], 4
      %s126 = int_to_ptr.vmem [resolvable:$true] %s125
      %128 = dma.hbm_to_vmem [thread:$0]  %s124, 64, %s126, [#allocation14]
    $region53: #{tpu_custom_call.1} parent=1 // pred_fallthru
      _
    // Predicated region
    $region54: #{tpu_custom_call.1} parent=1 // pred_check
      _
    $region55: #{tpu_custom_call.1} parent=1 // pred_check_branch
      %130 = sbr.rel (0) target = $region57
    $region56: #{tpu_custom_call.1} parent=1 // pred_region
      %132 = vsyncadd [#allocation14], 0
      %s134 = sshll.u32 %s13, 4
      %s135 = int_to_ptr.hbm [resolvable:$true] %s134
      %s136 = sshll.u32 [#allocation15], 4
      %s137 = int_to_ptr.vmem [resolvable:$true] %s136
      %139 = dma.hbm_to_vmem [thread:$0]  %s135, 16, %s137, [#allocation14]
    $region57: #{tpu_custom_call.1} parent=1 // pred_fallthru
      _
    // Predicated region
    $region58: #{tpu_custom_call.1} parent=1 // pred_check
      _
    $region59: #{tpu_custom_call.1} parent=1 // pred_check_branch
      %141 = sbr.rel (0) target = $region61
    $region60: #{tpu_custom_call.1} parent=1 // pred_region
      _
    $region61: #{tpu_custom_call.1} parent=1 // pred_fallthru
      _
    // Predicated region
    $region62: #{tpu_custom_call.1} parent=1 // pred_check
      _
    $region63: #{tpu_custom_call.1} parent=1 // pred_check_branch
      %143 = sbr.rel (0) target = $region65
    $region64: #{tpu_custom_call.1} parent=1 // pred_region
      %145 = vsyncadd [#allocation17], 0
      %s147 = sshll.u32 %s15, 4
      %s148 = int_to_ptr.hbm [resolvable:$true] %s147
      %s149 = sshll.u32 [#allocation16], 4
      %s150 = int_to_ptr.vmem [resolvable:$true] %s149
      %152 = dma.hbm_to_vmem [thread:$0]  %s148, 16, %s150, [#allocation17]
    $region65: #{tpu_custom_call.1} parent=1 // pred_fallthru
      _
    // Predicated region
    $region66: #{tpu_custom_call.1} parent=1 // pred_check
      _
    $region67: #{tpu_custom_call.1} parent=1 // pred_check_branch
      %154 = sbr.rel (0) target = $region69
    $region68: #{tpu_custom_call.1} parent=1 // pred_region
      %156 = dma.done [#allocation3], 128
    $region69: #{tpu_custom_call.1} parent=1 // pred_fallthru
      _
    // Predicated region
    $region70: #{tpu_custom_call.1} parent=1 // pred_check
      _
    $region71: #{tpu_custom_call.1} parent=1 // pred_check_branch
      %158 = sbr.rel (0) target = $region73
    $region72: #{tpu_custom_call.1} parent=1 // pred_region
      %160 = dma.done [#allocation5], 96
    $region73: #{tpu_custom_call.1} parent=1 // pred_fallthru
      _
    // Predicated region
    $region74: #{tpu_custom_call.1} parent=1 // pred_check
      _
    $region75: #{tpu_custom_call.1} parent=1 // pred_check_branch
      %162 = sbr.rel (0) target = $region77
    $region76: #{tpu_custom_call.1} parent=1 // pred_region
      %164 = dma.done [#allocation5], 36288
    $region77: #{tpu_custom_call.1} parent=1 // pred_fallthru
      _
    // Predicated region
    $region78: #{tpu_custom_call.1} parent=1 // pred_check
      _
    $region79: #{tpu_custom_call.1} parent=1 // pred_check_branch
      %166 = sbr.rel (0) target = $region81
    $region80: #{tpu_custom_call.1} parent=1 // pred_region
      %168 = dma.done [#allocation8], 112
    $region81: #{tpu_custom_call.1} parent=1 // pred_fallthru
      _
    // Predicated region
    $region82: #{tpu_custom_call.1} parent=1 // pred_check
      _
    $region83: #{tpu_custom_call.1} parent=1 // pred_check_branch
      %170 = sbr.rel (0) target = $region85
    $region84: #{tpu_custom_call.1} parent=1 // pred_region
      %172 = dma.done [#allocation8], 43904
    $region85: #{tpu_custom_call.1} parent=1 // pred_fallthru
      _
    // Predicated region
    $region86: #{tpu_custom_call.1} parent=1 // pred_check
      _
    $region87: #{tpu_custom_call.1} parent=1 // pred_check_branch
      %174 = sbr.rel (0) target = $region89
    $region88: #{tpu_custom_call.1} parent=1 // pred_region
      %176 = dma.done [#allocation11], 112
    $region89: #{tpu_custom_call.1} parent=1 // pred_fallthru
      _
    // Predicated region
    $region90: #{tpu_custom_call.1} parent=1 // pred_check
      _
    $region91: #{tpu_custom_call.1} parent=1 // pred_check_branch
      %178 = sbr.rel (0) target = $region93
    $region92: #{tpu_custom_call.1} parent=1 // pred_region
      %180 = dma.done [#allocation11], 16
    $region93: #{tpu_custom_call.1} parent=1 // pred_fallthru
      _
    // Predicated region
    $region94: #{tpu_custom_call.1} parent=1 // pred_check
      _
    $region95: #{tpu_custom_call.1} parent=1 // pred_check_branch
      %182 = sbr.rel (0) target = $region97
    $region96: #{tpu_custom_call.1} parent=1 // pred_region
      %184 = dma.done [#allocation14], 64
    $region97: #{tpu_custom_call.1} parent=1 // pred_fallthru
      _
    // Predicated region
    $region98: #{tpu_custom_call.1} parent=1 // pred_check
      _
    $region99: #{tpu_custom_call.1} parent=1 // pred_check_branch
      %186 = sbr.rel (0) target = $region101
    $region100: #{tpu_custom_call.1} parent=1 // pred_region
      %188 = dma.done [#allocation14], 16
    $region101: #{tpu_custom_call.1} parent=1 // pred_fallthru
      _
    // Predicated region
    $region102: #{tpu_custom_call.1} parent=1 // pred_check
      _
    $region103: #{tpu_custom_call.1} parent=1 // pred_check_branch
      %190 = sbr.rel (0) target = $region105
    $region104: #{tpu_custom_call.1} parent=1 // pred_region
      %192 = dma.done [#allocation17], 16
    $region105: #{tpu_custom_call.1} parent=1 // pred_fallthru
      _
    %v194 = vld [vmem:[#allocation2] sm:$0xff]
    %v195 = vpack.c.bf16 %v194, %v194
    %v196 = vld [vmem:[%s3] sm:$0xff]
    %v197 = vld [vmem:[%s3 + $0x8] sm:$0xff]
    %v198 = vld [vmem:[%s3 + $0x10] sm:$0xff]
    %v199 = vld [vmem:[%s3 + $0x18] sm:$0xff]
    %v200 = vld [vmem:[%s3 + $0x20] sm:$0xff]
    %v201 = vld [vmem:[%s3 + $0x28] sm:$0xff]
    %v202 = vld [vmem:[%s3 + $0x30] sm:$0xff]
    %v203 = vld [vmem:[%s3 + $0x38] sm:$0xff]
    %v204 = vld [vmem:[%s3 + $0x40] sm:$0xff]
    %v205 = vld [vmem:[%s3 + $0x48] sm:$0xff]
    %v206 = vld [vmem:[%s3 + $0x50] sm:$0xff]
    %v207 = vld [vmem:[%s3 + $0x58] sm:$0xff]
    %v208 = vld [vmem:[%s3 + $0x60] sm:$0xff]
    %v209 = vld [vmem:[%s3 + $0x68] sm:$0xff]
    %v210 = vld [vmem:[%s3 + $0x70] sm:$0xff]
    %v211 = vld [vmem:[%s3 + $0x78] sm:$0xff]
    %v212 = vld [vmem:[%s3 + $0x80] sm:$0xff]
    %v213 = vld [vmem:[%s3 + $0x88] sm:$0xff]
    %v214 = vld [vmem:[%s3 + $0x90] sm:$0xff]
    %v215 = vld [vmem:[%s3 + $0x98] sm:$0xff]
    %v216 = vld [vmem:[%s3 + $0xa0] sm:$0xff]
    %v217 = vld [vmem:[%s3 + $0xa8] sm:$0xff]
    %v218 = vld [vmem:[%s3 + $0xb0] sm:$0xff]
    %v219 = vld [vmem:[%s3 + $0xb8] sm:$0xff]
    %v220 = vld [vmem:[%s3 + $0xc0] sm:$0xff]
    %v221 = vld [vmem:[%s3 + $0xc8] sm:$0xff]
    %v222 = vld [vmem:[%s3 + $0xd0] sm:$0xff]
    %v223 = vld [vmem:[%s3 + $0xd8] sm:$0xff]
    %v224 = vld [vmem:[%s3 + $0xe0] sm:$0xff]
    %v225 = vld [vmem:[%s3 + $0xe8] sm:$0xff]
    %v226 = vld [vmem:[%s3 + $0xf0] sm:$0xff]
    %v227 = vld [vmem:[%s3 + $0xf8] sm:$0xff]
    %v228 = vld [vmem:[%s3 + $0x100] sm:$0xff]
    %v229 = vld [vmem:[%s3 + $0x108] sm:$0xff]
    %v230 = vld [vmem:[%s3 + $0x110] sm:$0xff]
    %v231 = vld [vmem:[%s3 + $0x118] sm:$0xff]
    %v232 = vld [vmem:[%s3 + $0x120] sm:$0xff]
    %v233 = vld [vmem:[%s3 + $0x128] sm:$0xff]
    %v234 = vld [vmem:[%s3 + $0x130] sm:$0xff]
    %v235 = vld [vmem:[%s3 + $0x138] sm:$0xff]
    %v236 = vld [vmem:[%s3 + $0x140] sm:$0xff]
    %v237 = vld [vmem:[%s3 + $0x148] sm:$0xff]
    %v238 = vld [vmem:[%s3 + $0x150] sm:$0xff]
    %v239 = vld [vmem:[%s3 + $0x158] sm:$0xff]
    %v240 = vld [vmem:[%s3 + $0x160] sm:$0xff]
    %v241 = vld [vmem:[%s3 + $0x168] sm:$0x11]
    %v242 = vld [vmem:[%s3 + $0x170] sm:$0x11]
    %v243 = vld [vmem:[%s3 + $0x178] sm:$0x11]
    %v244 = vld [vmem:[#allocation4] sm:$0x3f]
    %v246 = vperm.slane %v244, 0
    %v247 = vperm.slane %v244, 1
    %v248 = vperm.slane %v244, 2
    %v249 = vperm.slane %v244, 3
    %v250 = vperm.slane %v244, 4
    %v251 = vperm.slane %v244, 5
    %v306 = vunpack.c.l.b16 %v196
    %v307 = vunpack.c.h.b16 %v196
    %v308 = vunpack.c.l.b16 %v197
    %v309 = vunpack.c.h.b16 %v197
    %v310 = vunpack.c.l.b16 %v198
    %v311 = vunpack.c.h.b16 %v198
    %v312 = vunpack.c.l.b16 %v199
    %v313 = vunpack.c.h.b16 %v199
    %v314 = vunpack.c.l.b16 %v200
    %v315 = vunpack.c.h.b16 %v200
    %v316 = vunpack.c.l.b16 %v201
    %v317 = vunpack.c.h.b16 %v201
    %v318 = vunpack.c.l.b16 %v202
    %v319 = vunpack.c.h.b16 %v202
    %v320 = vunpack.c.l.b16 %v203
    %v321 = vunpack.c.h.b16 %v203
    %v322 = vunpack.c.l.b16 %v204
    %v323 = vunpack.c.h.b16 %v204
    %v324 = vunpack.c.l.b16 %v205
    %v325 = vunpack.c.h.b16 %v205
    %v326 = vunpack.c.l.b16 %v206
    %v327 = vunpack.c.h.b16 %v206
    %v328 = vunpack.c.l.b16 %v207
    %v329 = vunpack.c.h.b16 %v207
    %v330 = vunpack.c.l.b16 %v208
    %v331 = vunpack.c.h.b16 %v208
    %v332 = vunpack.c.l.b16 %v209
    %v333 = vunpack.c.h.b16 %v209
    %v334 = vunpack.c.l.b16 %v210
    %v335 = vunpack.c.h.b16 %v210
    %v336 = vunpack.c.l.b16 %v211
    %v337 = vunpack.c.h.b16 %v211
    %v338 = vunpack.c.l.b16 %v212
    %v339 = vunpack.c.h.b16 %v212
    %v340 = vunpack.c.l.b16 %v213
    %v341 = vunpack.c.h.b16 %v213
    %v342 = vunpack.c.l.b16 %v214
    %v343 = vunpack.c.h.b16 %v214
    %v344 = vunpack.c.l.b16 %v215
    %v345 = vunpack.c.h.b16 %v215
    %v346 = vunpack.c.l.b16 %v216
    %v347 = vunpack.c.h.b16 %v216
    %v348 = vunpack.c.l.b16 %v217
    %v349 = vunpack.c.h.b16 %v217
    %v350 = vunpack.c.l.b16 %v218
    %v351 = vunpack.c.h.b16 %v218
    %v352 = vunpack.c.l.b16 %v219
    %v353 = vunpack.c.h.b16 %v219
    %v354 = vunpack.c.l.b16 %v220
    %v355 = vunpack.c.h.b16 %v220
    %v356 = vunpack.c.l.b16 %v221
    %v357 = vunpack.c.h.b16 %v221
    %v358 = vunpack.c.l.b16 %v222
    %v359 = vunpack.c.h.b16 %v222
    %v360 = vunpack.c.l.b16 %v223
    %v361 = vunpack.c.h.b16 %v223
    %v362 = vunpack.c.l.b16 %v224
    %v363 = vunpack.c.h.b16 %v224
    %v364 = vunpack.c.l.b16 %v225
    %v365 = vunpack.c.h.b16 %v225
    %v366 = vunpack.c.l.b16 %v226
    %v367 = vunpack.c.h.b16 %v226
    %v368 = vunpack.c.l.b16 %v227
    %v369 = vunpack.c.h.b16 %v227
    %v370 = vunpack.c.l.b16 %v228
    %v371 = vunpack.c.h.b16 %v228
    %v372 = vunpack.c.l.b16 %v229
    %v373 = vunpack.c.h.b16 %v229
    %v374 = vunpack.c.l.b16 %v230
    %v375 = vunpack.c.h.b16 %v230
    %v376 = vunpack.c.l.b16 %v231
    %v377 = vunpack.c.h.b16 %v231
    %v378 = vunpack.c.l.b16 %v232
    %v379 = vunpack.c.h.b16 %v232
    %v380 = vunpack.c.l.b16 %v233
    %v381 = vunpack.c.h.b16 %v233
    %v382 = vunpack.c.l.b16 %v234
    %v383 = vunpack.c.h.b16 %v234
    %v384 = vunpack.c.l.b16 %v235
    %v385 = vunpack.c.h.b16 %v235
    %v386 = vunpack.c.l.b16 %v236
    %v387 = vunpack.c.h.b16 %v236
    %v388 = vunpack.c.l.b16 %v237
    %v389 = vunpack.c.h.b16 %v237
    %v390 = vunpack.c.l.b16 %v238
    %v391 = vunpack.c.h.b16 %v238
    %v392 = vunpack.c.l.b16 %v239
    %v393 = vunpack.c.h.b16 %v239
    %v394 = vunpack.c.l.b16 %v240
    %v395 = vunpack.c.h.b16 %v240
    %v396 = vunpack.c.l.b16 %v241
    %v397 = vunpack.c.h.b16 %v241
    %v398 = vunpack.c.l.b16 %v242
    %v399 = vunpack.c.h.b16 %v242
    %v400 = vunpack.c.l.b16 %v243
    %v401 = vunpack.c.h.b16 %v243
    %v402 = vpack.c.b16 %v312, %v306
    %v403 = vpack.c.b16 %v313, %v307
    %v404 = vpack.c.b16 %v314, %v308
    %v405 = vpack.c.b16 %v315, %v309
    %v406 = vpack.c.b16 %v316, %v310
    %v407 = vpack.c.b16 %v317, %v311
    %v408 = vpack.c.b16 %v324, %v318
    %v409 = vpack.c.b16 %v325, %v319
    %v410 = vpack.c.b16 %v326, %v320
    %v411 = vpack.c.b16 %v327, %v321
    %v412 = vpack.c.b16 %v328, %v322
    %v413 = vpack.c.b16 %v329, %v323
    %v414 = vpack.c.b16 %v336, %v330
    %v415 = vpack.c.b16 %v337, %v331
    %v416 = vpack.c.b16 %v338, %v332
    %v417 = vpack.c.b16 %v339, %v333
    %v418 = vpack.c.b16 %v340, %v334
    %v419 = vpack.c.b16 %v341, %v335
    %v420 = vpack.c.b16 %v348, %v342
    %v421 = vpack.c.b16 %v349, %v343
    %v422 = vpack.c.b16 %v350, %v344
    %v423 = vpack.c.b16 %v351, %v345
    %v424 = vpack.c.b16 %v352, %v346
    %v425 = vpack.c.b16 %v353, %v347
    %v426 = vpack.c.b16 %v360, %v354
    %v427 = vpack.c.b16 %v361, %v355
    %v428 = vpack.c.b16 %v362, %v356
    %v429 = vpack.c.b16 %v363, %v357
    %v430 = vpack.c.b16 %v364, %v358
    %v431 = vpack.c.b16 %v365, %v359
    %v432 = vpack.c.b16 %v372, %v366
    %v433 = vpack.c.b16 %v373, %v367
    %v434 = vpack.c.b16 %v374, %v368
    %v435 = vpack.c.b16 %v375, %v369
    %v436 = vpack.c.b16 %v376, %v370
    %v437 = vpack.c.b16 %v377, %v371
    %v438 = vpack.c.b16 %v384, %v378
    %v439 = vpack.c.b16 %v385, %v379
    %v440 = vpack.c.b16 %v386, %v380
    %v441 = vpack.c.b16 %v387, %v381
    %v442 = vpack.c.b16 %v388, %v382
    %v443 = vpack.c.b16 %v389, %v383
    %v444 = vpack.c.b16 %v396, %v390
    %v445 = vpack.c.b16 %v397, %v391
    %v446 = vpack.c.b16 %v398, %v392
    %v447 = vpack.c.b16 %v399, %v393
    %v448 = vpack.c.b16 %v400, %v394
    %v449 = vpack.c.b16 %v401, %v395
    %vm492 = vcmask 990208
    %v494 = vsel %vm492, %v195, 0
    %vm496 = vcmask 1043456
    %vm497 = vcmask 1044480
    %v498 = vsel %vm496, 4294967295, 65535
    %v499 = vsel %vm497, %v498, 0
    %v501 = vand.u32 %v444, %v499
    %v504 = vand.u32 %v445, %v499
    %v507 = vand.u32 %v446, %v499
    %v510 = vand.u32 %v447, %v499
    %v513 = vand.u32 %v448, %v499
    %v516 = vand.u32 %v449, %v499
    %518 = vmatpush.bf16.msra.mxu0 %v501
    %519 = vmatpush.bf16.msra.mxu0 %v438
    %520 = vmatpush.bf16.msra.mxu0 %v432
    %521 = vmatpush.bf16.msra.mxu0 %v426
    %522 = vmatpush.bf16.msra.mxu0 %v420
    %523 = vmatpush.bf16.msra.mxu0 %v414
    %524 = vmatpush.bf16.msra.mxu0 %v408
    %525 = vmatpush.bf16.msra.mxu0 %v402
    %526 = vmatmul.bf16.gmra.mxu0 %v494
    %v527 = vpop.f32.mrf.mxu0
    %v528 = vadd.f32 %v246, %v527
    %v529 = vpop.f32.mrf.mxu0
    %530 = vdwg.mxu0
    %531 = vmatpush.bf16.msra.mxu0 %v504
    %532 = vmatpush.bf16.msra.mxu0 %v439
    %533 = vmatpush.bf16.msra.mxu0 %v433
    %534 = vmatpush.bf16.msra.mxu0 %v427
    %535 = vmatpush.bf16.msra.mxu0 %v421
    %536 = vmatpush.bf16.msra.mxu0 %v415
    %537 = vmatpush.bf16.msra.mxu0 %v409
    %538 = vmatpush.bf16.msra.mxu0 %v403
    %539 = vmatmul.bf16.gmra.mxu0 %v494
    %v540 = vpop.f32.mrf.mxu0
    %v541 = vadd.f32 %v247, %v540
    %v542 = vpop.f32.mrf.mxu0
    %543 = vdwg.mxu0
    %544 = vmatpush.bf16.msra.mxu0 %v507
    %545 = vmatpush.bf16.msra.mxu0 %v440
    %546 = vmatpush.bf16.msra.mxu0 %v434
    %547 = vmatpush.bf16.msra.mxu0 %v428
    %548 = vmatpush.bf16.msra.mxu0 %v422
    %549 = vmatpush.bf16.msra.mxu0 %v416
    %550 = vmatpush.bf16.msra.mxu0 %v410
    %551 = vmatpush.bf16.msra.mxu0 %v404
    %552 = vmatmul.bf16.gmra.mxu0 %v494
    %v553 = vpop.f32.mrf.mxu0
    %v554 = vadd.f32 %v248, %v553
    %v555 = vpop.f32.mrf.mxu0
    %556 = vdwg.mxu0
    %557 = vmatpush.bf16.msra.mxu0 %v510
    %558 = vmatpush.bf16.msra.mxu0 %v441
    %559 = vmatpush.bf16.msra.mxu0 %v435
    %560 = vmatpush.bf16.msra.mxu0 %v429
    %561 = vmatpush.bf16.msra.mxu0 %v423
    %562 = vmatpush.bf16.msra.mxu0 %v417
    %563 = vmatpush.bf16.msra.mxu0 %v411
    %564 = vmatpush.bf16.msra.mxu0 %v405
    %565 = vmatmul.bf16.gmra.mxu0 %v494
    %v566 = vpop.f32.mrf.mxu0
    %v567 = vadd.f32 %v249, %v566
    %v568 = vpop.f32.mrf.mxu0
    %569 = vdwg.mxu0
    %570 = vmatpush.bf16.msra.mxu0 %v513
    %571 = vmatpush.bf16.msra.mxu0 %v442
    %572 = vmatpush.bf16.msra.mxu0 %v436
    %573 = vmatpush.bf16.msra.mxu0 %v430
    %574 = vmatpush.bf16.msra.mxu0 %v424
    %575 = vmatpush.bf16.msra.mxu0 %v418
    %576 = vmatpush.bf16.msra.mxu0 %v412
    %577 = vmatpush.bf16.msra.mxu0 %v406
    %578 = vmatmul.bf16.gmra.mxu0 %v494
    %v579 = vpop.f32.mrf.mxu0
    %v580 = vadd.f32 %v250, %v579
    %v581 = vpop.f32.mrf.mxu0
    %582 = vdwg.mxu0
    %583 = vmatpush.bf16.msra.mxu0 %v516
    %584 = vmatpush.bf16.msra.mxu0 %v443
    %585 = vmatpush.bf16.msra.mxu0 %v437
    %586 = vmatpush.bf16.msra.mxu0 %v431
    %587 = vmatpush.bf16.msra.mxu0 %v425
    %588 = vmatpush.bf16.msra.mxu0 %v419
    %589 = vmatpush.bf16.msra.mxu0 %v413
    %590 = vmatpush.bf16.msra.mxu0 %v407
    %591 = vmatmul.bf16.gmra.mxu0 %v494
    %v592 = vpop.f32.mrf.mxu0
    %v593 = vadd.f32 %v251, %v592
    %v594 = vpop.f32.mrf.mxu0
    %595 = vdwg.mxu0
    %v596 = vmax.f32 %v528, 0.0
    %v597 = vmax.f32 %v541, 0.0
    %v598 = vmax.f32 %v554, 0.0
    %v599 = vmax.f32 %v567, 0.0
    %v600 = vmax.f32 %v580, 0.0
    %v601 = vmax.f32 %v593, 0.0
    %v602 = vpack.c.bf16 %v596, %v596
    %v603 = vpack.c.bf16 %v597, %v597
    %v604 = vpack.c.bf16 %v598, %v598
    %v605 = vpack.c.bf16 %v599, %v599
    %v606 = vpack.c.bf16 %v600, %v600
    %v607 = vpack.c.bf16 %v601, %v601
    %v608 = vld [vmem:[#allocation6] sm:$0xff]
    %v609 = vld [vmem:[#allocation6 + $0x8] sm:$0xff]
    %v610 = vld [vmem:[#allocation6 + $0x10] sm:$0xff]
    %v611 = vld [vmem:[#allocation6 + $0x18] sm:$0xf]
    %v612 = vld [vmem:[#allocation6 + $0x1c] sm:$0xff]
    %v613 = vld [vmem:[#allocation6 + $0x24] sm:$0xff]
    %v614 = vld [vmem:[#allocation6 + $0x2c] sm:$0xff]
    %v615 = vld [vmem:[#allocation6 + $0x34] sm:$0xf]
    %v616 = vld [vmem:[#allocation6 + $0x38] sm:$0xff]
    %v617 = vld [vmem:[#allocation6 + $0x40] sm:$0xff]
    %v618 = vld [vmem:[#allocation6 + $0x48] sm:$0xff]
    %v619 = vld [vmem:[#allocation6 + $0x50] sm:$0xf]
    %v620 = vld [vmem:[#allocation6 + $0x54] sm:$0xff]
    %v621 = vld [vmem:[#allocation6 + $0x5c] sm:$0xff]
    %v622 = vld [vmem:[#allocation6 + $0x64] sm:$0xff]
    %v623 = vld [vmem:[#allocation6 + $0x6c] sm:$0xf]
    %v624 = vld [vmem:[#allocation6 + $0x70] sm:$0xff]
    %v625 = vld [vmem:[#allocation6 + $0x78] sm:$0xff]
    %v626 = vld [vmem:[#allocation6 + $0x80] sm:$0xff]
    %v627 = vld [vmem:[#allocation6 + $0x88] sm:$0xf]
    %v628 = vld [vmem:[#allocation6 + $0x8c] sm:$0xff]
    %v629 = vld [vmem:[#allocation6 + $0x94] sm:$0xff]
    %v630 = vld [vmem:[#allocation6 + $0x9c] sm:$0xff]
    %v631 = vld [vmem:[#allocation6 + $0xa4] sm:$0xf]
    %v632 = vld [vmem:[#allocation6 + $0xa8] sm:$0xff]
    %v633 = vld [vmem:[#allocation6 + $0xb0] sm:$0xff]
    %v634 = vld [vmem:[#allocation6 + $0xb8] sm:$0xff]
    %v635 = vld [vmem:[#allocation6 + $0xc0] sm:$0xf]
    %v636 = vld [vmem:[#allocation6 + $0xc4] sm:$0xff]
    %v637 = vld [vmem:[#allocation6 + $0xcc] sm:$0xff]
    %v638 = vld [vmem:[#allocation6 + $0xd4] sm:$0xff]
    %v639 = vld [vmem:[#allocation6 + $0xdc] sm:$0xf]
    %v640 = vld [vmem:[#allocation6 + $0xe0] sm:$0xff]
    %v641 = vld [vmem:[#allocation6 + $0xe8] sm:$0xff]
    %v642 = vld [vmem:[#allocation6 + $0xf0] sm:$0xff]
    %v643 = vld [vmem:[#allocation6 + $0xf8] sm:$0xf]
    %v644 = vld [vmem:[#allocation6 + $0xfc] sm:$0xff]
    %v645 = vld [vmem:[#allocation6 + $0x104] sm:$0xff]
    %v646 = vld [vmem:[#allocation6 + $0x10c] sm:$0xff]
    %v647 = vld [vmem:[#allocation6 + $0x114] sm:$0xf]
    %v648 = vld [vmem:[#allocation6 + $0x118] sm:$0xff]
    %v649 = vld [vmem:[#allocation6 + $0x120] sm:$0xff]
    %v650 = vld [vmem:[#allocation6 + $0x128] sm:$0xff]
    %v651 = vld [vmem:[#allocation6 + $0x130] sm:$0xf]
    %v652 = vld [vmem:[#allocation6 + $0x134] sm:$0xff]
    %v653 = vld [vmem:[#allocation6 + $0x13c] sm:$0xff]
    %v654 = vld [vmem:[#allocation6 + $0x144] sm:$0xff]
    %v655 = vld [vmem:[#allocation6 + $0x14c] sm:$0xf]
    %v656 = vld [vmem:[#allocation6 + $0x150] sm:$0xff]
    %v657 = vld [vmem:[#allocation6 + $0x158] sm:$0xff]
    %v658 = vld [vmem:[#allocation6 + $0x160] sm:$0xff]
    %v659 = vld [vmem:[#allocation6 + $0x168] sm:$0xf]
    %v660 = vld [vmem:[#allocation6 + $0x16c] sm:$0xff]
    %v661 = vld [vmem:[#allocation6 + $0x174] sm:$0xff]
    %v662 = vld [vmem:[#allocation6 + $0x17c] sm:$0xff]
    %v663 = vld [vmem:[#allocation6 + $0x184] sm:$0xf]
    %v664 = vld [vmem:[#allocation6 + $0x188] sm:$0xff]
    %v665 = vld [vmem:[#allocation6 + $0x190] sm:$0xff]
    %v666 = vld [vmem:[#allocation6 + $0x198] sm:$0xff]
    %v667 = vld [vmem:[#allocation6 + $0x1a0] sm:$0xf]
    %v668 = vld [vmem:[#allocation6 + $0x1a4] sm:$0xff]
    %v669 = vld [vmem:[#allocation6 + $0x1ac] sm:$0xff]
    %v670 = vld [vmem:[#allocation6 + $0x1b4] sm:$0xff]
    %v671 = vld [vmem:[#allocation6 + $0x1bc] sm:$0xf]
    %v672 = vld [vmem:[#allocation6 + $0x1c0] sm:$0xff]
    %v673 = vld [vmem:[#allocation6 + $0x1c8] sm:$0xff]
    %v674 = vld [vmem:[#allocation6 + $0x1d0] sm:$0xff]
    %v675 = vld [vmem:[#allocation6 + $0x1d8] sm:$0xf]
    %v676 = vld [vmem:[#allocation6 + $0x1dc] sm:$0xff]
    %v677 = vld [vmem:[#allocation6 + $0x1e4] sm:$0xff]
    %v678 = vld [vmem:[#allocation6 + $0x1ec] sm:$0xff]
    %v679 = vld [vmem:[#allocation6 + $0x1f4] sm:$0xf]
    %v680 = vld [vmem:[#allocation6 + $0x1f8] sm:$0xff]
    %v681 = vld [vmem:[#allocation6 + $0x200] sm:$0xff]
    %v682 = vld [vmem:[#allocation6 + $0x208] sm:$0xff]
    %v683 = vld [vmem:[#allocation6 + $0x210] sm:$0xf]
    %v684 = vld [vmem:[#allocation6 + $0x214] sm:$0xff]
    %v685 = vld [vmem:[#allocation6 + $0x21c] sm:$0xff]
    %v686 = vld [vmem:[#allocation6 + $0x224] sm:$0xff]
    %v687 = vld [vmem:[#allocation6 + $0x22c] sm:$0xf]
    %v688 = vld [vmem:[#allocation6 + $0x230] sm:$0xff]
    %v689 = vld [vmem:[#allocation6 + $0x238] sm:$0xff]
    %v690 = vld [vmem:[#allocation6 + $0x240] sm:$0xff]
    %v691 = vld [vmem:[#allocation6 + $0x248] sm:$0xf]
    %v692 = vld [vmem:[#allocation6 + $0x24c] sm:$0xff]
    %v693 = vld [vmem:[#allocation6 + $0x254] sm:$0xff]
    %v694 = vld [vmem:[#allocation6 + $0x25c] sm:$0xff]
    %v695 = vld [vmem:[#allocation6 + $0x264] sm:$0xf]
    %v696 = vld [vmem:[#allocation6 + $0x268] sm:$0xff]
    %v697 = vld [vmem:[#allocation6 + $0x270] sm:$0xff]
    %v698 = vld [vmem:[#allocation6 + $0x278] sm:$0xff]
    %v699 = vld [vmem:[#allocation6 + $0x280] sm:$0xf]
    %v700 = vld [vmem:[#allocation6 + $0x284] sm:$0xff]
    %v701 = vld [vmem:[#allocation6 + $0x28c] sm:$0xff]
    %v702 = vld [vmem:[#allocation6 + $0x294] sm:$0xff]
    %v703 = vld [vmem:[#allocation6 + $0x29c] sm:$0xf]
    %v704 = vld [vmem:[#allocation6 + $0x2a0] sm:$0xff]
    %v705 = vld [vmem:[#allocation6 + $0x2a8] sm:$0xff]
    %v706 = vld [vmem:[#allocation6 + $0x2b0] sm:$0xff]
    %v707 = vld [vmem:[#allocation6 + $0x2b8] sm:$0xf]
    %v708 = vld [vmem:[#allocation6 + $0x2bc] sm:$0xff]
    %v709 = vld [vmem:[#allocation6 + $0x2c4] sm:$0xff]
    %v710 = vld [vmem:[#allocation6 + $0x2cc] sm:$0xff]
    %v711 = vld [vmem:[#allocation6 + $0x2d4] sm:$0xf]
    %v712 = vld [vmem:[#allocation6 + $0x2d8] sm:$0xff]
    %v713 = vld [vmem:[#allocation6 + $0x2e0] sm:$0xff]
    %v714 = vld [vmem:[#allocation6 + $0x2e8] sm:$0xff]
    %v715 = vld [vmem:[#allocation6 + $0x2f0] sm:$0xf]
    %v716 = vld [vmem:[#allocation6 + $0x2f4] sm:$0xff]
    %v717 = vld [vmem:[#allocation6 + $0x2fc] sm:$0xff]
    %v718 = vld [vmem:[#allocation6 + $0x304] sm:$0xff]
    %v719 = vld [vmem:[#allocation6 + $0x30c] sm:$0xf]
    %v720 = vld [vmem:[#allocation6 + $0x310] sm:$0xff]
    %v721 = vld [vmem:[#allocation6 + $0x318] sm:$0xff]
    %v722 = vld [vmem:[#allocation6 + $0x320] sm:$0xff]
    %v723 = vld [vmem:[#allocation6 + $0x328] sm:$0xf]
    %v724 = vld [vmem:[#allocation6 + $0x32c] sm:$0xff]
    %v725 = vld [vmem:[#allocation6 + $0x334] sm:$0xff]
    %v726 = vld [vmem:[#allocation6 + $0x33c] sm:$0xff]
    %v727 = vld [vmem:[#allocation6 + $0x344] sm:$0xf]
    %v728 = vld [vmem:[#allocation6 + $0x348] sm:$0xff]
    %v729 = vld [vmem:[#allocation6 + $0x350] sm:$0xff]
    %v730 = vld [vmem:[#allocation6 + $0x358] sm:$0xff]
    %v731 = vld [vmem:[#allocation6 + $0x360] sm:$0xf]
    %v732 = vld [vmem:[#allocation6 + $0x364] sm:$0xff]
    %v733 = vld [vmem:[#allocation6 + $0x36c] sm:$0xff]
    %v734 = vld [vmem:[#allocation6 + $0x374] sm:$0xff]
    %v735 = vld [vmem:[#allocation6 + $0x37c] sm:$0xf]
    %v736 = vld [vmem:[#allocation6 + $0x380] sm:$0xff]
    %v737 = vld [vmem:[#allocation6 + $0x388] sm:$0xff]
    %v738 = vld [vmem:[#allocation6 + $0x390] sm:$0xff]
    %v739 = vld [vmem:[#allocation6 + $0x398] sm:$0xf]
    %v740 = vld [vmem:[#allocation6 + $0x39c] sm:$0xff]
    %v741 = vld [vmem:[#allocation6 + $0x3a4] sm:$0xff]
    %v742 = vld [vmem:[#allocation6 + $0x3ac] sm:$0xff]
    %v743 = vld [vmem:[#allocation6 + $0x3b4] sm:$0xf]
    %v744 = vld [vmem:[#allocation6 + $0x3b8] sm:$0xff]
    %v745 = vld [vmem:[#allocation6 + $0x3c0] sm:$0xff]
    %v746 = vld [vmem:[#allocation6 + $0x3c8] sm:$0xff]
    %v747 = vld [vmem:[#allocation6 + $0x3d0] sm:$0xf]
    %v748 = vld [vmem:[#allocation6 + $0x3d4] sm:$0xff]
    %v749 = vld [vmem:[#allocation6 + $0x3dc] sm:$0xff]
    %v750 = vld [vmem:[#allocation6 + $0x3e4] sm:$0xff]
    %v751 = vld [vmem:[#allocation6 + $0x3ec] sm:$0xf]
    %v752 = vld [vmem:[#allocation6 + $0x3f0] sm:$0xff]
    %v753 = vld [vmem:[#allocation6 + $0x3f8] sm:$0xff]
    %v754 = vld [vmem:[#allocation6 + $0x400] sm:$0xff]
    %v755 = vld [vmem:[#allocation6 + $0x408] sm:$0xf]
    %v756 = vld [vmem:[#allocation6 + $0x40c] sm:$0xff]
    %v757 = vld [vmem:[#allocation6 + $0x414] sm:$0xff]
    %v758 = vld [vmem:[#allocation6 + $0x41c] sm:$0xff]
    %v759 = vld [vmem:[#allocation6 + $0x424] sm:$0xf]
    %v760 = vld [vmem:[#allocation6 + $0x428] sm:$0xff]
    %v761 = vld [vmem:[#allocation6 + $0x430] sm:$0xff]
    %v762 = vld [vmem:[#allocation6 + $0x438] sm:$0xff]
    %v763 = vld [vmem:[#allocation6 + $0x440] sm:$0xf]
    %v764 = vld [vmem:[#allocation6 + $0x444] sm:$0xff]
    %v765 = vld [vmem:[#allocation6 + $0x44c] sm:$0xff]
    %v766 = vld [vmem:[#allocation6 + $0x454] sm:$0xff]
    %v767 = vld [vmem:[#allocation6 + $0x45c] sm:$0xf]
    %v768 = vld [vmem:[#allocation6 + $0x460] sm:$0xff]
    %v769 = vld [vmem:[#allocation6 + $0x468] sm:$0xff]
    %v770 = vld [vmem:[#allocation6 + $0x470] sm:$0xff]
    %v771 = vld [vmem:[#allocation6 + $0x478] sm:$0xf]
    %v772 = vld [vmem:[#allocation6 + $0x47c] sm:$0xff]
    %v773 = vld [vmem:[#allocation6 + $0x484] sm:$0xff]
    %v774 = vld [vmem:[#allocation6 + $0x48c] sm:$0xff]
    %v775 = vld [vmem:[#allocation6 + $0x494] sm:$0xf]
    %v776 = vld [vmem:[#allocation6 + $0x498] sm:$0xff]
    %v777 = vld [vmem:[#allocation6 + $0x4a0] sm:$0xff]
    %v778 = vld [vmem:[#allocation6 + $0x4a8] sm:$0xff]
    %v779 = vld [vmem:[#allocation6 + $0x4b0] sm:$0xf]
    %v780 = vld [vmem:[#allocation6 + $0x4b4] sm:$0xff]
    %v781 = vld [vmem:[#allocation6 + $0x4bc] sm:$0xff]
    %v782 = vld [vmem:[#allocation6 + $0x4c4] sm:$0xff]
    %v783 = vld [vmem:[#allocation6 + $0x4cc] sm:$0xf]
    %v784 = vld [vmem:[#allocation6 + $0x4d0] sm:$0xff]
    %v785 = vld [vmem:[#allocation6 + $0x4d8] sm:$0xff]
    %v786 = vld [vmem:[#allocation6 + $0x4e0] sm:$0xff]
    %v787 = vld [vmem:[#allocation6 + $0x4e8] sm:$0xf]
    %v788 = vld [vmem:[#allocation6 + $0x4ec] sm:$0xff]
    %v789 = vld [vmem:[#allocation6 + $0x4f4] sm:$0xff]
    %v790 = vld [vmem:[#allocation6 + $0x4fc] sm:$0xff]
    %v791 = vld [vmem:[#allocation6 + $0x504] sm:$0xf]
    %v792 = vld [vmem:[#allocation6 + $0x508] sm:$0xff]
    %v793 = vld [vmem:[#allocation6 + $0x510] sm:$0xff]
    %v794 = vld [vmem:[#allocation6 + $0x518] sm:$0xff]
    %v795 = vld [vmem:[#allocation6 + $0x520] sm:$0xf]
    %v796 = vld [vmem:[#allocation6 + $0x524] sm:$0xff]
    %v797 = vld [vmem:[#allocation6 + $0x52c] sm:$0xff]
    %v798 = vld [vmem:[#allocation6 + $0x534] sm:$0xff]
    %v799 = vld [vmem:[#allocation6 + $0x53c] sm:$0xf]
    %v800 = vld [vmem:[#allocation6 + $0x540] sm:$0xff]
    %v801 = vld [vmem:[#allocation6 + $0x548] sm:$0xff]
    %v802 = vld [vmem:[#allocation6 + $0x550] sm:$0xff]
    %v803 = vld [vmem:[#allocation6 + $0x558] sm:$0xf]
    %v804 = vld [vmem:[#allocation6 + $0x55c] sm:$0xff]
    %v805 = vld [vmem:[#allocation6 + $0x564] sm:$0xff]
    %v806 = vld [vmem:[#allocation6 + $0x56c] sm:$0xff]
    %v807 = vld [vmem:[#allocation6 + $0x574] sm:$0xf]
    %v808 = vld [vmem:[#allocation6 + $0x578] sm:$0xff]
    %v809 = vld [vmem:[#allocation6 + $0x580] sm:$0xff]
    %v810 = vld [vmem:[#allocation6 + $0x588] sm:$0xff]
    %v811 = vld [vmem:[#allocation6 + $0x590] sm:$0xf]
    %v812 = vld [vmem:[#allocation6 + $0x594] sm:$0xff]
    %v813 = vld [vmem:[#allocation6 + $0x59c] sm:$0xff]
    %v814 = vld [vmem:[#allocation6 + $0x5a4] sm:$0xff]
    %v815 = vld [vmem:[#allocation6 + $0x5ac] sm:$0xf]
    %v816 = vld [vmem:[#allocation6 + $0x5b0] sm:$0xff]
    %v817 = vld [vmem:[#allocation6 + $0x5b8] sm:$0xff]
    %v818 = vld [vmem:[#allocation6 + $0x5c0] sm:$0xff]
    %v819 = vld [vmem:[#allocation6 + $0x5c8] sm:$0xf]
    %v820 = vld [vmem:[#allocation6 + $0x5cc] sm:$0xff]
    %v821 = vld [vmem:[#allocation6 + $0x5d4] sm:$0xff]
    %v822 = vld [vmem:[#allocation6 + $0x5dc] sm:$0xff]
    %v823 = vld [vmem:[#allocation6 + $0x5e4] sm:$0xf]
    %v824 = vld [vmem:[#allocation6 + $0x5e8] sm:$0xff]
    %v825 = vld [vmem:[#allocation6 + $0x5f0] sm:$0xff]
    %v826 = vld [vmem:[#allocation6 + $0x5f8] sm:$0xff]
    %v827 = vld [vmem:[#allocation6 + $0x600] sm:$0xf]
    %v828 = vld [vmem:[#allocation6 + $0x604] sm:$0xff]
    %v829 = vld [vmem:[#allocation6 + $0x60c] sm:$0xff]
    %v830 = vld [vmem:[#allocation6 + $0x614] sm:$0xff]
    %v831 = vld [vmem:[#allocation6 + $0x61c] sm:$0xf]
    %v832 = vld [vmem:[#allocation6 + $0x620] sm:$0xff]
    %v833 = vld [vmem:[#allocation6 + $0x628] sm:$0xff]
    %v834 = vld [vmem:[#allocation6 + $0x630] sm:$0xff]
    %v835 = vld [vmem:[#allocation6 + $0x638] sm:$0xf]
    %v836 = vld [vmem:[#allocation6 + $0x63c] sm:$0xff]
    %v837 = vld [vmem:[#allocation6 + $0x644] sm:$0xff]
    %v838 = vld [vmem:[#allocation6 + $0x64c] sm:$0xff]
    %v839 = vld [vmem:[#allocation6 + $0x654] sm:$0xf]
    %v840 = vld [vmem:[#allocation6 + $0x658] sm:$0xff]
    %v841 = vld [vmem:[#allocation6 + $0x660] sm:$0xff]
    %v842 = vld [vmem:[#allocation6 + $0x668] sm:$0xff]
    %v843 = vld [vmem:[#allocation6 + $0x670] sm:$0xf]
    %v844 = vld [vmem:[#allocation6 + $0x674] sm:$0xff]
    %v845 = vld [vmem:[#allocation6 + $0x67c] sm:$0xff]
    %v846 = vld [vmem:[#allocation6 + $0x684] sm:$0xff]
    %v847 = vld [vmem:[#allocation6 + $0x68c] sm:$0xf]
    %v848 = vld [vmem:[#allocation6 + $0x690] sm:$0xff]
    %v849 = vld [vmem:[#allocation6 + $0x698] sm:$0xff]
    %v850 = vld [vmem:[#allocation6 + $0x6a0] sm:$0xff]
    %v851 = vld [vmem:[#allocation6 + $0x6a8] sm:$0xf]
    %v852 = vld [vmem:[#allocation6 + $0x6ac] sm:$0xff]
    %v853 = vld [vmem:[#allocation6 + $0x6b4] sm:$0xff]
    %v854 = vld [vmem:[#allocation6 + $0x6bc] sm:$0xff]
    %v855 = vld [vmem:[#allocation6 + $0x6c4] sm:$0xf]
    %v856 = vld [vmem:[#allocation6 + $0x6c8] sm:$0xff]
    %v857 = vld [vmem:[#allocation6 + $0x6d0] sm:$0xff]
    %v858 = vld [vmem:[#allocation6 + $0x6d8] sm:$0xff]
    %v859 = vld [vmem:[#allocation6 + $0x6e0] sm:$0xf]
    %v860 = vld [vmem:[#allocation6 + $0x6e4] sm:$0xff]
    %v861 = vld [vmem:[#allocation6 + $0x6ec] sm:$0xff]
    %v862 = vld [vmem:[#allocation6 + $0x6f4] sm:$0xff]
    %v863 = vld [vmem:[#allocation6 + $0x6fc] sm:$0xf]
    %v864 = vld [vmem:[#allocation6 + $0x700] sm:$0xff]
    %v865 = vld [vmem:[#allocation6 + $0x708] sm:$0xff]
    %v866 = vld [vmem:[#allocation6 + $0x710] sm:$0xff]
    %v867 = vld [vmem:[#allocation6 + $0x718] sm:$0xf]
    %v868 = vld [vmem:[#allocation6 + $0x71c] sm:$0xff]
    %v869 = vld [vmem:[#allocation6 + $0x724] sm:$0xff]
    %v870 = vld [vmem:[#allocation6 + $0x72c] sm:$0xff]
    %v871 = vld [vmem:[#allocation6 + $0x734] sm:$0xf]
    %v872 = vld [vmem:[#allocation6 + $0x738] sm:$0xff]
    %v873 = vld [vmem:[#allocation6 + $0x740] sm:$0xff]
    %v874 = vld [vmem:[#allocation6 + $0x748] sm:$0xff]
    %v875 = vld [vmem:[#allocation6 + $0x750] sm:$0xf]
    %v876 = vld [vmem:[#allocation6 + $0x754] sm:$0xff]
    %v877 = vld [vmem:[#allocation6 + $0x75c] sm:$0xff]
    %v878 = vld [vmem:[#allocation6 + $0x764] sm:$0xff]
    %v879 = vld [vmem:[#allocation6 + $0x76c] sm:$0xf]
    %v880 = vld [vmem:[#allocation6 + $0x770] sm:$0xff]
    %v881 = vld [vmem:[#allocation6 + $0x778] sm:$0xff]
    %v882 = vld [vmem:[#allocation6 + $0x780] sm:$0xff]
    %v883 = vld [vmem:[#allocation6 + $0x788] sm:$0xf]
    %v884 = vld [vmem:[#allocation6 + $0x78c] sm:$0xff]
    %v885 = vld [vmem:[#allocation6 + $0x794] sm:$0xff]
    %v886 = vld [vmem:[#allocation6 + $0x79c] sm:$0xff]
    %v887 = vld [vmem:[#allocation6 + $0x7a4] sm:$0xf]
    %v888 = vld [vmem:[#allocation6 + $0x7a8] sm:$0xff]
    %v889 = vld [vmem:[#allocation6 + $0x7b0] sm:$0xff]
    %v890 = vld [vmem:[#allocation6 + $0x7b8] sm:$0xff]
    %v891 = vld [vmem:[#allocation6 + $0x7c0] sm:$0xf]
    %v892 = vld [vmem:[#allocation6 + $0x7c4] sm:$0xff]
    %v893 = vld [vmem:[#allocation6 + $0x7cc] sm:$0xff]
    %v894 = vld [vmem:[#allocation6 + $0x7d4] sm:$0xff]
    %v895 = vld [vmem:[#allocation6 + $0x7dc] sm:$0xf]
    %v896 = vld [vmem:[#allocation6 + $0x7e0] sm:$0xff]
    %v897 = vld [vmem:[#allocation6 + $0x7e8] sm:$0xff]
    %v898 = vld [vmem:[#allocation6 + $0x7f0] sm:$0xff]
    %v899 = vld [vmem:[#allocation6 + $0x7f8] sm:$0xf]
    %v900 = vld [vmem:[#allocation6 + $0x7fc] sm:$0xff]
    %v901 = vld [vmem:[#allocation6 + $0x804] sm:$0xff]
    %v902 = vld [vmem:[#allocation6 + $0x80c] sm:$0xff]
    %v903 = vld [vmem:[#allocation6 + $0x814] sm:$0xf]
    %v904 = vld [vmem:[#allocation6 + $0x818] sm:$0xff]
    %v905 = vld [vmem:[#allocation6 + $0x820] sm:$0xff]
    %v906 = vld [vmem:[#allocation6 + $0x828] sm:$0xff]
    %v907 = vld [vmem:[#allocation6 + $0x830] sm:$0xf]
    %v908 = vld [vmem:[#allocation6 + $0x834] sm:$0xff]
    %v909 = vld [vmem:[#allocation6 + $0x83c] sm:$0xff]
    %v910 = vld [vmem:[#allocation6 + $0x844] sm:$0xff]
    %v911 = vld [vmem:[#allocation6 + $0x84c] sm:$0xf]
    %v912 = vld [vmem:[#allocation6 + $0x850] sm:$0xff]
    %v913 = vld [vmem:[#allocation6 + $0x858] sm:$0xff]
    %v914 = vld [vmem:[#allocation6 + $0x860] sm:$0xff]
    %v915 = vld [vmem:[#allocation6 + $0x868] sm:$0xf]
    %v916 = vld [vmem:[#allocation6 + $0x86c] sm:$0xff]
    %v917 = vld [vmem:[#allocation6 + $0x874] sm:$0xff]
    %v918 = vld [vmem:[#allocation6 + $0x87c] sm:$0xff]
    %v919 = vld [vmem:[#allocation6 + $0x884] sm:$0xf]
    %v920 = vld [vmem:[#allocation6 + $0x888] sm:$0xff]
    %v921 = vld [vmem:[#allocation6 + $0x890] sm:$0xff]
    %v922 = vld [vmem:[#allocation6 + $0x898] sm:$0xff]
    %v923 = vld [vmem:[#allocation6 + $0x8a0] sm:$0xf]
    %v924 = vld [vmem:[#allocation6 + $0x8a4] sm:$0xff]
    %v925 = vld [vmem:[#allocation6 + $0x8ac] sm:$0xff]
    %v926 = vld [vmem:[#allocation6 + $0x8b4] sm:$0xff]
    %v927 = vld [vmem:[#allocation6 + $0x8bc] sm:$0xf]
    %v928 = vld [vmem:[#allocation6 + $0x8c0] sm:$0xff]
    %v929 = vld [vmem:[#allocation6 + $0x8c8] sm:$0xff]
    %v930 = vld [vmem:[#allocation6 + $0x8d0] sm:$0xff]
    %v931 = vld [vmem:[#allocation6 + $0x8d8] sm:$0xf]
    %v932 = vld [vmem:[#allocation7] sm:$0x7f]
    %v934 = vperm.slane %v932, 0
    %v935 = vperm.slane %v932, 1
    %v936 = vperm.slane %v932, 2
    %v937 = vperm.slane %v932, 3
    %v938 = vperm.slane %v932, 4
    %v939 = vperm.slane %v932, 5
    %v940 = vperm.slane %v932, 6
    %v1272 = vunpack.c.l.b16 %v608
    %v1273 = vunpack.c.h.b16 %v608
    %v1274 = vunpack.c.l.b16 %v609
    %v1275 = vunpack.c.h.b16 %v609
    %v1276 = vunpack.c.l.b16 %v610
    %v1277 = vunpack.c.h.b16 %v610
    %v1278 = vunpack.c.l.b16 %v611
    %v1279 = vunpack.c.l.b16 %v612
    %v1280 = vunpack.c.h.b16 %v612
    %v1281 = vunpack.c.l.b16 %v613
    %v1282 = vunpack.c.h.b16 %v613
    %v1283 = vunpack.c.l.b16 %v614
    %v1284 = vunpack.c.h.b16 %v614
    %v1285 = vunpack.c.l.b16 %v615
    %v1286 = vunpack.c.l.b16 %v616
    %v1287 = vunpack.c.h.b16 %v616
    %v1288 = vunpack.c.l.b16 %v617
    %v1289 = vunpack.c.h.b16 %v617
    %v1290 = vunpack.c.l.b16 %v618
    %v1291 = vunpack.c.h.b16 %v618
    %v1292 = vunpack.c.l.b16 %v619
    %v1293 = vunpack.c.l.b16 %v620
    %v1294 = vunpack.c.h.b16 %v620
    %v1295 = vunpack.c.l.b16 %v621
    %v1296 = vunpack.c.h.b16 %v621
    %v1297 = vunpack.c.l.b16 %v622
    %v1298 = vunpack.c.h.b16 %v622
    %v1299 = vunpack.c.l.b16 %v623
    %v1300 = vunpack.c.l.b16 %v624
    %v1301 = vunpack.c.h.b16 %v624
    %v1302 = vunpack.c.l.b16 %v625
    %v1303 = vunpack.c.h.b16 %v625
    %v1304 = vunpack.c.l.b16 %v626
    %v1305 = vunpack.c.h.b16 %v626
    %v1306 = vunpack.c.l.b16 %v627
    %v1307 = vunpack.c.l.b16 %v628
    %v1308 = vunpack.c.h.b16 %v628
    %v1309 = vunpack.c.l.b16 %v629
    %v1310 = vunpack.c.h.b16 %v629
    %v1311 = vunpack.c.l.b16 %v630
    %v1312 = vunpack.c.h.b16 %v630
    %v1313 = vunpack.c.l.b16 %v631
    %v1314 = vunpack.c.l.b16 %v632
    %v1315 = vunpack.c.h.b16 %v632
    %v1316 = vunpack.c.l.b16 %v633
    %v1317 = vunpack.c.h.b16 %v633
    %v1318 = vunpack.c.l.b16 %v634
    %v1319 = vunpack.c.h.b16 %v634
    %v1320 = vunpack.c.l.b16 %v635
    %v1321 = vunpack.c.l.b16 %v636
    %v1322 = vunpack.c.h.b16 %v636
    %v1323 = vunpack.c.l.b16 %v637
    %v1324 = vunpack.c.h.b16 %v637
    %v1325 = vunpack.c.l.b16 %v638
    %v1326 = vunpack.c.h.b16 %v638
    %v1327 = vunpack.c.l.b16 %v639
    %v1328 = vunpack.c.l.b16 %v640
    %v1329 = vunpack.c.h.b16 %v640
    %v1330 = vunpack.c.l.b16 %v641
    %v1331 = vunpack.c.h.b16 %v641
    %v1332 = vunpack.c.l.b16 %v642
    %v1333 = vunpack.c.h.b16 %v642
    %v1334 = vunpack.c.l.b16 %v643
    %v1335 = vunpack.c.l.b16 %v644
    %v1336 = vunpack.c.h.b16 %v644
    %v1337 = vunpack.c.l.b16 %v645
    %v1338 = vunpack.c.h.b16 %v645
    %v1339 = vunpack.c.l.b16 %v646
    %v1340 = vunpack.c.h.b16 %v646
    %v1341 = vunpack.c.l.b16 %v647
    %v1342 = vunpack.c.l.b16 %v648
    %v1343 = vunpack.c.h.b16 %v648
    %v1344 = vunpack.c.l.b16 %v649
    %v1345 = vunpack.c.h.b16 %v649
    %v1346 = vunpack.c.l.b16 %v650
    %v1347 = vunpack.c.h.b16 %v650
    %v1348 = vunpack.c.l.b16 %v651
    %v1349 = vunpack.c.l.b16 %v652
    %v1350 = vunpack.c.h.b16 %v652
    %v1351 = vunpack.c.l.b16 %v653
    %v1352 = vunpack.c.h.b16 %v653
    %v1353 = vunpack.c.l.b16 %v654
    %v1354 = vunpack.c.h.b16 %v654
    %v1355 = vunpack.c.l.b16 %v655
    %v1356 = vunpack.c.l.b16 %v656
    %v1357 = vunpack.c.h.b16 %v656
    %v1358 = vunpack.c.l.b16 %v657
    %v1359 = vunpack.c.h.b16 %v657
    %v1360 = vunpack.c.l.b16 %v658
    %v1361 = vunpack.c.h.b16 %v658
    %v1362 = vunpack.c.l.b16 %v659
    %v1363 = vunpack.c.l.b16 %v660
    %v1364 = vunpack.c.h.b16 %v660
    %v1365 = vunpack.c.l.b16 %v661
    %v1366 = vunpack.c.h.b16 %v661
    %v1367 = vunpack.c.l.b16 %v662
    %v1368 = vunpack.c.h.b16 %v662
    %v1369 = vunpack.c.l.b16 %v663
    %v1370 = vunpack.c.l.b16 %v664
    %v1371 = vunpack.c.h.b16 %v664
    %v1372 = vunpack.c.l.b16 %v665
    %v1373 = vunpack.c.h.b16 %v665
    %v1374 = vunpack.c.l.b16 %v666
    %v1375 = vunpack.c.h.b16 %v666
    %v1376 = vunpack.c.l.b16 %v667
    %v1377 = vunpack.c.l.b16 %v668
    %v1378 = vunpack.c.h.b16 %v668
    %v1379 = vunpack.c.l.b16 %v669
    %v1380 = vunpack.c.h.b16 %v669
    %v1381 = vunpack.c.l.b16 %v670
    %v1382 = vunpack.c.h.b16 %v670
    %v1383 = vunpack.c.l.b16 %v671
    %v1384 = vunpack.c.l.b16 %v672
    %v1385 = vunpack.c.h.b16 %v672
    %v1386 = vunpack.c.l.b16 %v673
    %v1387 = vunpack.c.h.b16 %v673
    %v1388 = vunpack.c.l.b16 %v674
    %v1389 = vunpack.c.h.b16 %v674
    %v1390 = vunpack.c.l.b16 %v675
    %v1391 = vunpack.c.l.b16 %v676
    %v1392 = vunpack.c.h.b16 %v676
    %v1393 = vunpack.c.l.b16 %v677
    %v1394 = vunpack.c.h.b16 %v677
    %v1395 = vunpack.c.l.b16 %v678
    %v1396 = vunpack.c.h.b16 %v678
    %v1397 = vunpack.c.l.b16 %v679
    %v1398 = vunpack.c.l.b16 %v680
    %v1399 = vunpack.c.h.b16 %v680
    %v1400 = vunpack.c.l.b16 %v681
    %v1401 = vunpack.c.h.b16 %v681
    %v1402 = vunpack.c.l.b16 %v682
    %v1403 = vunpack.c.h.b16 %v682
    %v1404 = vunpack.c.l.b16 %v683
    %v1405 = vunpack.c.l.b16 %v684
    %v1406 = vunpack.c.h.b16 %v684
    %v1407 = vunpack.c.l.b16 %v685
    %v1408 = vunpack.c.h.b16 %v685
    %v1409 = vunpack.c.l.b16 %v686
    %v1410 = vunpack.c.h.b16 %v686
    %v1411 = vunpack.c.l.b16 %v687
    %v1412 = vunpack.c.l.b16 %v688
    %v1413 = vunpack.c.h.b16 %v688
    %v1414 = vunpack.c.l.b16 %v689
    %v1415 = vunpack.c.h.b16 %v689
    %v1416 = vunpack.c.l.b16 %v690
    %v1417 = vunpack.c.h.b16 %v690
    %v1418 = vunpack.c.l.b16 %v691
    %v1419 = vunpack.c.l.b16 %v692
    %v1420 = vunpack.c.h.b16 %v692
    %v1421 = vunpack.c.l.b16 %v693
    %v1422 = vunpack.c.h.b16 %v693
    %v1423 = vunpack.c.l.b16 %v694
    %v1424 = vunpack.c.h.b16 %v694
    %v1425 = vunpack.c.l.b16 %v695
    %v1426 = vunpack.c.l.b16 %v696
    %v1427 = vunpack.c.h.b16 %v696
    %v1428 = vunpack.c.l.b16 %v697
    %v1429 = vunpack.c.h.b16 %v697
    %v1430 = vunpack.c.l.b16 %v698
    %v1431 = vunpack.c.h.b16 %v698
    %v1432 = vunpack.c.l.b16 %v699
    %v1433 = vunpack.c.l.b16 %v700
    %v1434 = vunpack.c.h.b16 %v700
    %v1435 = vunpack.c.l.b16 %v701
    %v1436 = vunpack.c.h.b16 %v701
    %v1437 = vunpack.c.l.b16 %v702
    %v1438 = vunpack.c.h.b16 %v702
    %v1439 = vunpack.c.l.b16 %v703
    %v1440 = vunpack.c.l.b16 %v704
    %v1441 = vunpack.c.h.b16 %v704
    %v1442 = vunpack.c.l.b16 %v705
    %v1443 = vunpack.c.h.b16 %v705
    %v1444 = vunpack.c.l.b16 %v706
    %v1445 = vunpack.c.h.b16 %v706
    %v1446 = vunpack.c.l.b16 %v707
    %v1447 = vunpack.c.l.b16 %v708
    %v1448 = vunpack.c.h.b16 %v708
    %v1449 = vunpack.c.l.b16 %v709
    %v1450 = vunpack.c.h.b16 %v709
    %v1451 = vunpack.c.l.b16 %v710
    %v1452 = vunpack.c.h.b16 %v710
    %v1453 = vunpack.c.l.b16 %v711
    %v1454 = vunpack.c.l.b16 %v712
    %v1455 = vunpack.c.h.b16 %v712
    %v1456 = vunpack.c.l.b16 %v713
    %v1457 = vunpack.c.h.b16 %v713
    %v1458 = vunpack.c.l.b16 %v714
    %v1459 = vunpack.c.h.b16 %v714
    %v1460 = vunpack.c.l.b16 %v715
    %v1461 = vunpack.c.l.b16 %v716
    %v1462 = vunpack.c.h.b16 %v716
    %v1463 = vunpack.c.l.b16 %v717
    %v1464 = vunpack.c.h.b16 %v717
    %v1465 = vunpack.c.l.b16 %v718
    %v1466 = vunpack.c.h.b16 %v718
    %v1467 = vunpack.c.l.b16 %v719
    %v1468 = vunpack.c.l.b16 %v720
    %v1469 = vunpack.c.h.b16 %v720
    %v1470 = vunpack.c.l.b16 %v721
    %v1471 = vunpack.c.h.b16 %v721
    %v1472 = vunpack.c.l.b16 %v722
    %v1473 = vunpack.c.h.b16 %v722
    %v1474 = vunpack.c.l.b16 %v723
    %v1475 = vunpack.c.l.b16 %v724
    %v1476 = vunpack.c.h.b16 %v724
    %v1477 = vunpack.c.l.b16 %v725
    %v1478 = vunpack.c.h.b16 %v725
    %v1479 = vunpack.c.l.b16 %v726
    %v1480 = vunpack.c.h.b16 %v726
    %v1481 = vunpack.c.l.b16 %v727
    %v1482 = vunpack.c.l.b16 %v728
    %v1483 = vunpack.c.h.b16 %v728
    %v1484 = vunpack.c.l.b16 %v729
    %v1485 = vunpack.c.h.b16 %v729
    %v1486 = vunpack.c.l.b16 %v730
    %v1487 = vunpack.c.h.b16 %v730
    %v1488 = vunpack.c.l.b16 %v731
    %v1489 = vunpack.c.l.b16 %v732
    %v1490 = vunpack.c.h.b16 %v732
    %v1491 = vunpack.c.l.b16 %v733
    %v1492 = vunpack.c.h.b16 %v733
    %v1493 = vunpack.c.l.b16 %v734
    %v1494 = vunpack.c.h.b16 %v734
    %v1495 = vunpack.c.l.b16 %v735
    %v1496 = vunpack.c.l.b16 %v736
    %v1497 = vunpack.c.h.b16 %v736
    %v1498 = vunpack.c.l.b16 %v737
    %v1499 = vunpack.c.h.b16 %v737
    %v1500 = vunpack.c.l.b16 %v738
    %v1501 = vunpack.c.h.b16 %v738
    %v1502 = vunpack.c.l.b16 %v739
    %v1503 = vunpack.c.l.b16 %v740
    %v1504 = vunpack.c.h.b16 %v740
    %v1505 = vunpack.c.l.b16 %v741
    %v1506 = vunpack.c.h.b16 %v741
    %v1507 = vunpack.c.l.b16 %v742
    %v1508 = vunpack.c.h.b16 %v742
    %v1509 = vunpack.c.l.b16 %v743
    %v1510 = vunpack.c.l.b16 %v744
    %v1511 = vunpack.c.h.b16 %v744
    %v1512 = vunpack.c.l.b16 %v745
    %v1513 = vunpack.c.h.b16 %v745
    %v1514 = vunpack.c.l.b16 %v746
    %v1515 = vunpack.c.h.b16 %v746
    %v1516 = vunpack.c.l.b16 %v747
    %v1517 = vunpack.c.l.b16 %v748
    %v1518 = vunpack.c.h.b16 %v748
    %v1519 = vunpack.c.l.b16 %v749
    %v1520 = vunpack.c.h.b16 %v749
    %v1521 = vunpack.c.l.b16 %v750
    %v1522 = vunpack.c.h.b16 %v750
    %v1523 = vunpack.c.l.b16 %v751
    %v1524 = vunpack.c.l.b16 %v752
    %v1525 = vunpack.c.h.b16 %v752
    %v1526 = vunpack.c.l.b16 %v753
    %v1527 = vunpack.c.h.b16 %v753
    %v1528 = vunpack.c.l.b16 %v754
    %v1529 = vunpack.c.h.b16 %v754
    %v1530 = vunpack.c.l.b16 %v755
    %v1531 = vunpack.c.l.b16 %v756
    %v1532 = vunpack.c.h.b16 %v756
    %v1533 = vunpack.c.l.b16 %v757
    %v1534 = vunpack.c.h.b16 %v757
    %v1535 = vunpack.c.l.b16 %v758
    %v1536 = vunpack.c.h.b16 %v758
    %v1537 = vunpack.c.l.b16 %v759
    %v1538 = vunpack.c.l.b16 %v760
    %v1539 = vunpack.c.h.b16 %v760
    %v1540 = vunpack.c.l.b16 %v761
    %v1541 = vunpack.c.h.b16 %v761
    %v1542 = vunpack.c.l.b16 %v762
    %v1543 = vunpack.c.h.b16 %v762
    %v1544 = vunpack.c.l.b16 %v763
    %v1545 = vunpack.c.l.b16 %v764
    %v1546 = vunpack.c.h.b16 %v764
    %v1547 = vunpack.c.l.b16 %v765
    %v1548 = vunpack.c.h.b16 %v765
    %v1549 = vunpack.c.l.b16 %v766
    %v1550 = vunpack.c.h.b16 %v766
    %v1551 = vunpack.c.l.b16 %v767
    %v1552 = vunpack.c.l.b16 %v768
    %v1553 = vunpack.c.h.b16 %v768
    %v1554 = vunpack.c.l.b16 %v769
    %v1555 = vunpack.c.h.b16 %v769
    %v1556 = vunpack.c.l.b16 %v770
    %v1557 = vunpack.c.h.b16 %v770
    %v1558 = vunpack.c.l.b16 %v771
    %v1559 = vunpack.c.l.b16 %v772
    %v1560 = vunpack.c.h.b16 %v772
    %v1561 = vunpack.c.l.b16 %v773
    %v1562 = vunpack.c.h.b16 %v773
    %v1563 = vunpack.c.l.b16 %v774
    %v1564 = vunpack.c.h.b16 %v774
    %v1565 = vunpack.c.l.b16 %v775
    %v1566 = vunpack.c.l.b16 %v776
    %v1567 = vunpack.c.h.b16 %v776
    %v1568 = vunpack.c.l.b16 %v777
    %v1569 = vunpack.c.h.b16 %v777
    %v1570 = vunpack.c.l.b16 %v778
    %v1571 = vunpack.c.h.b16 %v778
    %v1572 = vunpack.c.l.b16 %v779
    %v1573 = vunpack.c.l.b16 %v780
    %v1574 = vunpack.c.h.b16 %v780
    %v1575 = vunpack.c.l.b16 %v781
    %v1576 = vunpack.c.h.b16 %v781
    %v1577 = vunpack.c.l.b16 %v782
    %v1578 = vunpack.c.h.b16 %v782
    %v1579 = vunpack.c.l.b16 %v783
    %v1580 = vunpack.c.l.b16 %v784
    %v1581 = vunpack.c.h.b16 %v784
    %v1582 = vunpack.c.l.b16 %v785
    %v1583 = vunpack.c.h.b16 %v785
    %v1584 = vunpack.c.l.b16 %v786
    %v1585 = vunpack.c.h.b16 %v786
    %v1586 = vunpack.c.l.b16 %v787
    %v1587 = vunpack.c.l.b16 %v788
    %v1588 = vunpack.c.h.b16 %v788
    %v1589 = vunpack.c.l.b16 %v789
    %v1590 = vunpack.c.h.b16 %v789
    %v1591 = vunpack.c.l.b16 %v790
    %v1592 = vunpack.c.h.b16 %v790
    %v1593 = vunpack.c.l.b16 %v791
    %v1594 = vunpack.c.l.b16 %v792
    %v1595 = vunpack.c.h.b16 %v792
    %v1596 = vunpack.c.l.b16 %v793
    %v1597 = vunpack.c.h.b16 %v793
    %v1598 = vunpack.c.l.b16 %v794
    %v1599 = vunpack.c.h.b16 %v794
    %v1600 = vunpack.c.l.b16 %v795
    %v1601 = vunpack.c.l.b16 %v796
    %v1602 = vunpack.c.h.b16 %v796
    %v1603 = vunpack.c.l.b16 %v797
    %v1604 = vunpack.c.h.b16 %v797
    %v1605 = vunpack.c.l.b16 %v798
    %v1606 = vunpack.c.h.b16 %v798
    %v1607 = vunpack.c.l.b16 %v799
    %v1608 = vunpack.c.l.b16 %v800
    %v1609 = vunpack.c.h.b16 %v800
    %v1610 = vunpack.c.l.b16 %v801
    %v1611 = vunpack.c.h.b16 %v801
    %v1612 = vunpack.c.l.b16 %v802
    %v1613 = vunpack.c.h.b16 %v802
    %v1614 = vunpack.c.l.b16 %v803
    %v1615 = vunpack.c.l.b16 %v804
    %v1616 = vunpack.c.h.b16 %v804
    %v1617 = vunpack.c.l.b16 %v805
    %v1618 = vunpack.c.h.b16 %v805
    %v1619 = vunpack.c.l.b16 %v806
    %v1620 = vunpack.c.h.b16 %v806
    %v1621 = vunpack.c.l.b16 %v807
    %v1622 = vunpack.c.l.b16 %v808
    %v1623 = vunpack.c.h.b16 %v808
    %v1624 = vunpack.c.l.b16 %v809
    %v1625 = vunpack.c.h.b16 %v809
    %v1626 = vunpack.c.l.b16 %v810
    %v1627 = vunpack.c.h.b16 %v810
    %v1628 = vunpack.c.l.b16 %v811
    %v1629 = vunpack.c.l.b16 %v812
    %v1630 = vunpack.c.h.b16 %v812
    %v1631 = vunpack.c.l.b16 %v813
    %v1632 = vunpack.c.h.b16 %v813
    %v1633 = vunpack.c.l.b16 %v814
    %v1634 = vunpack.c.h.b16 %v814
    %v1635 = vunpack.c.l.b16 %v815
    %v1636 = vunpack.c.l.b16 %v816
    %v1637 = vunpack.c.h.b16 %v816
    %v1638 = vunpack.c.l.b16 %v817
    %v1639 = vunpack.c.h.b16 %v817
    %v1640 = vunpack.c.l.b16 %v818
    %v1641 = vunpack.c.h.b16 %v818
    %v1642 = vunpack.c.l.b16 %v819
    %v1643 = vunpack.c.l.b16 %v820
    %v1644 = vunpack.c.h.b16 %v820
    %v1645 = vunpack.c.l.b16 %v821
    %v1646 = vunpack.c.h.b16 %v821
    %v1647 = vunpack.c.l.b16 %v822
    %v1648 = vunpack.c.h.b16 %v822
    %v1649 = vunpack.c.l.b16 %v823
    %v1650 = vunpack.c.l.b16 %v824
    %v1651 = vunpack.c.h.b16 %v824
    %v1652 = vunpack.c.l.b16 %v825
    %v1653 = vunpack.c.h.b16 %v825
    %v1654 = vunpack.c.l.b16 %v826
    %v1655 = vunpack.c.h.b16 %v826
    %v1656 = vunpack.c.l.b16 %v827
    %v1657 = vunpack.c.l.b16 %v828
    %v1658 = vunpack.c.h.b16 %v828
    %v1659 = vunpack.c.l.b16 %v829
    %v1660 = vunpack.c.h.b16 %v829
    %v1661 = vunpack.c.l.b16 %v830
    %v1662 = vunpack.c.h.b16 %v830
    %v1663 = vunpack.c.l.b16 %v831
    %v1664 = vunpack.c.l.b16 %v832
    %v1665 = vunpack.c.h.b16 %v832
    %v1666 = vunpack.c.l.b16 %v833
    %v1667 = vunpack.c.h.b16 %v833
    %v1668 = vunpack.c.l.b16 %v834
    %v1669 = vunpack.c.h.b16 %v834
    %v1670 = vunpack.c.l.b16 %v835
    %v1671 = vunpack.c.l.b16 %v836
    %v1672 = vunpack.c.h.b16 %v836
    %v1673 = vunpack.c.l.b16 %v837
    %v1674 = vunpack.c.h.b16 %v837
    %v1675 = vunpack.c.l.b16 %v838
    %v1676 = vunpack.c.h.b16 %v838
    %v1677 = vunpack.c.l.b16 %v839
    %v1678 = vunpack.c.l.b16 %v840
    %v1679 = vunpack.c.h.b16 %v840
    %v1680 = vunpack.c.l.b16 %v841
    %v1681 = vunpack.c.h.b16 %v841
    %v1682 = vunpack.c.l.b16 %v842
    %v1683 = vunpack.c.h.b16 %v842
    %v1684 = vunpack.c.l.b16 %v843
    %v1685 = vunpack.c.l.b16 %v844
    %v1686 = vunpack.c.h.b16 %v844
    %v1687 = vunpack.c.l.b16 %v845
    %v1688 = vunpack.c.h.b16 %v845
    %v1689 = vunpack.c.l.b16 %v846
    %v1690 = vunpack.c.h.b16 %v846
    %v1691 = vunpack.c.l.b16 %v847
    %v1692 = vunpack.c.l.b16 %v848
    %v1693 = vunpack.c.h.b16 %v848
    %v1694 = vunpack.c.l.b16 %v849
    %v1695 = vunpack.c.h.b16 %v849
    %v1696 = vunpack.c.l.b16 %v850
    %v1697 = vunpack.c.h.b16 %v850
    %v1698 = vunpack.c.l.b16 %v851
    %v1699 = vunpack.c.l.b16 %v852
    %v1700 = vunpack.c.h.b16 %v852
    %v1701 = vunpack.c.l.b16 %v853
    %v1702 = vunpack.c.h.b16 %v853
    %v1703 = vunpack.c.l.b16 %v854
    %v1704 = vunpack.c.h.b16 %v854
    %v1705 = vunpack.c.l.b16 %v855
    %v1706 = vunpack.c.l.b16 %v856
    %v1707 = vunpack.c.h.b16 %v856
    %v1708 = vunpack.c.l.b16 %v857
    %v1709 = vunpack.c.h.b16 %v857
    %v1710 = vunpack.c.l.b16 %v858
    %v1711 = vunpack.c.h.b16 %v858
    %v1712 = vunpack.c.l.b16 %v859
    %v1713 = vunpack.c.l.b16 %v860
    %v1714 = vunpack.c.h.b16 %v860
    %v1715 = vunpack.c.l.b16 %v861
    %v1716 = vunpack.c.h.b16 %v861
    %v1717 = vunpack.c.l.b16 %v862
    %v1718 = vunpack.c.h.b16 %v862
    %v1719 = vunpack.c.l.b16 %v863
    %v1720 = vunpack.c.l.b16 %v864
    %v1721 = vunpack.c.h.b16 %v864
    %v1722 = vunpack.c.l.b16 %v865
    %v1723 = vunpack.c.h.b16 %v865
    %v1724 = vunpack.c.l.b16 %v866
    %v1725 = vunpack.c.h.b16 %v866
    %v1726 = vunpack.c.l.b16 %v867
    %v1727 = vunpack.c.l.b16 %v868
    %v1728 = vunpack.c.h.b16 %v868
    %v1729 = vunpack.c.l.b16 %v869
    %v1730 = vunpack.c.h.b16 %v869
    %v1731 = vunpack.c.l.b16 %v870
    %v1732 = vunpack.c.h.b16 %v870
    %v1733 = vunpack.c.l.b16 %v871
    %v1734 = vunpack.c.l.b16 %v872
    %v1735 = vunpack.c.h.b16 %v872
    %v1736 = vunpack.c.l.b16 %v873
    %v1737 = vunpack.c.h.b16 %v873
    %v1738 = vunpack.c.l.b16 %v874
    %v1739 = vunpack.c.h.b16 %v874
    %v1740 = vunpack.c.l.b16 %v875
    %v1741 = vunpack.c.l.b16 %v876
    %v1742 = vunpack.c.h.b16 %v876
    %v1743 = vunpack.c.l.b16 %v877
    %v1744 = vunpack.c.h.b16 %v877
    %v1745 = vunpack.c.l.b16 %v878
    %v1746 = vunpack.c.h.b16 %v878
    %v1747 = vunpack.c.l.b16 %v879
    %v1748 = vunpack.c.l.b16 %v880
    %v1749 = vunpack.c.h.b16 %v880
    %v1750 = vunpack.c.l.b16 %v881
    %v1751 = vunpack.c.h.b16 %v881
    %v1752 = vunpack.c.l.b16 %v882
    %v1753 = vunpack.c.h.b16 %v882
    %v1754 = vunpack.c.l.b16 %v883
    %v1755 = vunpack.c.l.b16 %v884
    %v1756 = vunpack.c.h.b16 %v884
    %v1757 = vunpack.c.l.b16 %v885
    %v1758 = vunpack.c.h.b16 %v885
    %v1759 = vunpack.c.l.b16 %v886
    %v1760 = vunpack.c.h.b16 %v886
    %v1761 = vunpack.c.l.b16 %v887
    %v1762 = vunpack.c.l.b16 %v888
    %v1763 = vunpack.c.h.b16 %v888
    %v1764 = vunpack.c.l.b16 %v889
    %v1765 = vunpack.c.h.b16 %v889
    %v1766 = vunpack.c.l.b16 %v890
    %v1767 = vunpack.c.h.b16 %v890
    %v1768 = vunpack.c.l.b16 %v891
    %v1769 = vunpack.c.l.b16 %v892
    %v1770 = vunpack.c.h.b16 %v892
    %v1771 = vunpack.c.l.b16 %v893
    %v1772 = vunpack.c.h.b16 %v893
    %v1773 = vunpack.c.l.b16 %v894
    %v1774 = vunpack.c.h.b16 %v894
    %v1775 = vunpack.c.l.b16 %v895
    %v1776 = vunpack.c.l.b16 %v896
    %v1777 = vunpack.c.h.b16 %v896
    %v1778 = vunpack.c.l.b16 %v897
    %v1779 = vunpack.c.h.b16 %v897
    %v1780 = vunpack.c.l.b16 %v898
    %v1781 = vunpack.c.h.b16 %v898
    %v1782 = vunpack.c.l.b16 %v899
    %v1783 = vunpack.c.l.b16 %v900
    %v1784 = vunpack.c.h.b16 %v900
    %v1785 = vunpack.c.l.b16 %v901
    %v1786 = vunpack.c.h.b16 %v901
    %v1787 = vunpack.c.l.b16 %v902
    %v1788 = vunpack.c.h.b16 %v902
    %v1789 = vunpack.c.l.b16 %v903
    %v1790 = vunpack.c.l.b16 %v904
    %v1791 = vunpack.c.h.b16 %v904
    %v1792 = vunpack.c.l.b16 %v905
    %v1793 = vunpack.c.h.b16 %v905
    %v1794 = vunpack.c.l.b16 %v906
    %v1795 = vunpack.c.h.b16 %v906
    %v1796 = vunpack.c.l.b16 %v907
    %v1797 = vunpack.c.l.b16 %v908
    %v1798 = vunpack.c.h.b16 %v908
    %v1799 = vunpack.c.l.b16 %v909
    %v1800 = vunpack.c.h.b16 %v909
    %v1801 = vunpack.c.l.b16 %v910
    %v1802 = vunpack.c.h.b16 %v910
    %v1803 = vunpack.c.l.b16 %v911
    %v1804 = vunpack.c.l.b16 %v912
    %v1805 = vunpack.c.h.b16 %v912
    %v1806 = vunpack.c.l.b16 %v913
    %v1807 = vunpack.c.h.b16 %v913
    %v1808 = vunpack.c.l.b16 %v914
    %v1809 = vunpack.c.h.b16 %v914
    %v1810 = vunpack.c.l.b16 %v915
    %v1811 = vunpack.c.l.b16 %v916
    %v1812 = vunpack.c.h.b16 %v916
    %v1813 = vunpack.c.l.b16 %v917
    %v1814 = vunpack.c.h.b16 %v917
    %v1815 = vunpack.c.l.b16 %v918
    %v1816 = vunpack.c.h.b16 %v918
    %v1817 = vunpack.c.l.b16 %v919
    %v1818 = vunpack.c.l.b16 %v920
    %v1819 = vunpack.c.h.b16 %v920
    %v1820 = vunpack.c.l.b16 %v921
    %v1821 = vunpack.c.h.b16 %v921
    %v1822 = vunpack.c.l.b16 %v922
    %v1823 = vunpack.c.h.b16 %v922
    %v1824 = vunpack.c.l.b16 %v923
    %v1825 = vunpack.c.l.b16 %v924
    %v1826 = vunpack.c.h.b16 %v924
    %v1827 = vunpack.c.l.b16 %v925
    %v1828 = vunpack.c.h.b16 %v925
    %v1829 = vunpack.c.l.b16 %v926
    %v1830 = vunpack.c.h.b16 %v926
    %v1831 = vunpack.c.l.b16 %v927
    %v1832 = vunpack.c.l.b16 %v928
    %v1833 = vunpack.c.h.b16 %v928
    %v1834 = vunpack.c.l.b16 %v929
    %v1835 = vunpack.c.h.b16 %v929
    %v1836 = vunpack.c.l.b16 %v930
    %v1837 = vunpack.c.h.b16 %v930
    %v1838 = vunpack.c.l.b16 %v931
    %v1839 = vpack.c.b16 %v1279, %v1272
    %v1840 = vpack.c.b16 %v1280, %v1273
    %v1841 = vpack.c.b16 %v1281, %v1274
    %v1842 = vpack.c.b16 %v1282, %v1275
    %v1843 = vpack.c.b16 %v1283, %v1276
    %v1844 = vpack.c.b16 %v1284, %v1277
    %v1845 = vpack.c.b16 %v1285, %v1278
    %v1846 = vpack.c.b16 %v1293, %v1286
    %v1847 = vpack.c.b16 %v1294, %v1287
    %v1848 = vpack.c.b16 %v1295, %v1288
    %v1849 = vpack.c.b16 %v1296, %v1289
    %v1850 = vpack.c.b16 %v1297, %v1290
    %v1851 = vpack.c.b16 %v1298, %v1291
    %v1852 = vpack.c.b16 %v1299, %v1292
    %v1853 = vpack.c.b16 %v1307, %v1300
    %v1854 = vpack.c.b16 %v1308, %v1301
    %v1855 = vpack.c.b16 %v1309, %v1302
    %v1856 = vpack.c.b16 %v1310, %v1303
    %v1857 = vpack.c.b16 %v1311, %v1304
    %v1858 = vpack.c.b16 %v1312, %v1305
    %v1859 = vpack.c.b16 %v1313, %v1306
    %v1860 = vpack.c.b16 %v1321, %v1314
    %v1861 = vpack.c.b16 %v1322, %v1315
    %v1862 = vpack.c.b16 %v1323, %v1316
    %v1863 = vpack.c.b16 %v1324, %v1317
    %v1864 = vpack.c.b16 %v1325, %v1318
    %v1865 = vpack.c.b16 %v1326, %v1319
    %v1866 = vpack.c.b16 %v1327, %v1320
    %v1867 = vpack.c.b16 %v1335, %v1328
    %v1868 = vpack.c.b16 %v1336, %v1329
    %v1869 = vpack.c.b16 %v1337, %v1330
    %v1870 = vpack.c.b16 %v1338, %v1331
    %v1871 = vpack.c.b16 %v1339, %v1332
    %v1872 = vpack.c.b16 %v1340, %v1333
    %v1873 = vpack.c.b16 %v1341, %v1334
    %v1874 = vpack.c.b16 %v1349, %v1342
    %v1875 = vpack.c.b16 %v1350, %v1343
    %v1876 = vpack.c.b16 %v1351, %v1344
    %v1877 = vpack.c.b16 %v1352, %v1345
    %v1878 = vpack.c.b16 %v1353, %v1346
    %v1879 = vpack.c.b16 %v1354, %v1347
    %v1880 = vpack.c.b16 %v1355, %v1348
    %v1881 = vpack.c.b16 %v1363, %v1356
    %v1882 = vpack.c.b16 %v1364, %v1357
    %v1883 = vpack.c.b16 %v1365, %v1358
    %v1884 = vpack.c.b16 %v1366, %v1359
    %v1885 = vpack.c.b16 %v1367, %v1360
    %v1886 = vpack.c.b16 %v1368, %v1361
    %v1887 = vpack.c.b16 %v1369, %v1362
    %v1888 = vpack.c.b16 %v1377, %v1370
    %v1889 = vpack.c.b16 %v1378, %v1371
    %v1890 = vpack.c.b16 %v1379, %v1372
    %v1891 = vpack.c.b16 %v1380, %v1373
    %v1892 = vpack.c.b16 %v1381, %v1374
    %v1893 = vpack.c.b16 %v1382, %v1375
    %v1894 = vpack.c.b16 %v1383, %v1376
    %v1895 = vpack.c.b16 %v1391, %v1384
    %v1896 = vpack.c.b16 %v1392, %v1385
    %v1897 = vpack.c.b16 %v1393, %v1386
    %v1898 = vpack.c.b16 %v1394, %v1387
    %v1899 = vpack.c.b16 %v1395, %v1388
    %v1900 = vpack.c.b16 %v1396, %v1389
    %v1901 = vpack.c.b16 %v1397, %v1390
    %v1902 = vpack.c.b16 %v1405, %v1398
    %v1903 = vpack.c.b16 %v1406, %v1399
    %v1904 = vpack.c.b16 %v1407, %v1400
    %v1905 = vpack.c.b16 %v1408, %v1401
    %v1906 = vpack.c.b16 %v1409, %v1402
    %v1907 = vpack.c.b16 %v1410, %v1403
    %v1908 = vpack.c.b16 %v1411, %v1404
    %v1909 = vpack.c.b16 %v1419, %v1412
    %v1910 = vpack.c.b16 %v1420, %v1413
    %v1911 = vpack.c.b16 %v1421, %v1414
    %v1912 = vpack.c.b16 %v1422, %v1415
    %v1913 = vpack.c.b16 %v1423, %v1416
    %v1914 = vpack.c.b16 %v1424, %v1417
    %v1915 = vpack.c.b16 %v1425, %v1418
    %v1916 = vpack.c.b16 %v1433, %v1426
    %v1917 = vpack.c.b16 %v1434, %v1427
    %v1918 = vpack.c.b16 %v1435, %v1428
    %v1919 = vpack.c.b16 %v1436, %v1429
    %v1920 = vpack.c.b16 %v1437, %v1430
    %v1921 = vpack.c.b16 %v1438, %v1431
    %v1922 = vpack.c.b16 %v1439, %v1432
    %v1923 = vpack.c.b16 %v1447, %v1440
    %v1924 = vpack.c.b16 %v1448, %v1441
    %v1925 = vpack.c.b16 %v1449, %v1442
    %v1926 = vpack.c.b16 %v1450, %v1443
    %v1927 = vpack.c.b16 %v1451, %v1444
    %v1928 = vpack.c.b16 %v1452, %v1445
    %v1929 = vpack.c.b16 %v1453, %v1446
    %v1930 = vpack.c.b16 %v1461, %v1454
    %v1931 = vpack.c.b16 %v1462, %v1455
    %v1932 = vpack.c.b16 %v1463, %v1456
    %v1933 = vpack.c.b16 %v1464, %v1457
    %v1934 = vpack.c.b16 %v1465, %v1458
    %v1935 = vpack.c.b16 %v1466, %v1459
    %v1936 = vpack.c.b16 %v1467, %v1460
    %v1937 = vpack.c.b16 %v1475, %v1468
    %v1938 = vpack.c.b16 %v1476, %v1469
    %v1939 = vpack.c.b16 %v1477, %v1470
    %v1940 = vpack.c.b16 %v1478, %v1471
    %v1941 = vpack.c.b16 %v1479, %v1472
    %v1942 = vpack.c.b16 %v1480, %v1473
    %v1943 = vpack.c.b16 %v1481, %v1474
    %v1944 = vpack.c.b16 %v1489, %v1482
    %v1945 = vpack.c.b16 %v1490, %v1483
    %v1946 = vpack.c.b16 %v1491, %v1484
    %v1947 = vpack.c.b16 %v1492, %v1485
    %v1948 = vpack.c.b16 %v1493, %v1486
    %v1949 = vpack.c.b16 %v1494, %v1487
    %v1950 = vpack.c.b16 %v1495, %v1488
    %v1951 = vpack.c.b16 %v1503, %v1496
    %v1952 = vpack.c.b16 %v1504, %v1497
    %v1953 = vpack.c.b16 %v1505, %v1498
    %v1954 = vpack.c.b16 %v1506, %v1499
    %v1955 = vpack.c.b16 %v1507, %v1500
    %v1956 = vpack.c.b16 %v1508, %v1501
    %v1957 = vpack.c.b16 %v1509, %v1502
    %v1958 = vpack.c.b16 %v1517, %v1510
    %v1959 = vpack.c.b16 %v1518, %v1511
    %v1960 = vpack.c.b16 %v1519, %v1512
    %v1961 = vpack.c.b16 %v1520, %v1513
    %v1962 = vpack.c.b16 %v1521, %v1514
    %v1963 = vpack.c.b16 %v1522, %v1515
    %v1964 = vpack.c.b16 %v1523, %v1516
    %v1965 = vpack.c.b16 %v1531, %v1524
    %v1966 = vpack.c.b16 %v1532, %v1525
    %v1967 = vpack.c.b16 %v1533, %v1526
    %v1968 = vpack.c.b16 %v1534, %v1527
    %v1969 = vpack.c.b16 %v1535, %v1528
    %v1970 = vpack.c.b16 %v1536, %v1529
    %v1971 = vpack.c.b16 %v1537, %v1530
    %v1972 = vpack.c.b16 %v1545, %v1538
    %v1973 = vpack.c.b16 %v1546, %v1539
    %v1974 = vpack.c.b16 %v1547, %v1540
    %v1975 = vpack.c.b16 %v1548, %v1541
    %v1976 = vpack.c.b16 %v1549, %v1542
    %v1977 = vpack.c.b16 %v1550, %v1543
    %v1978 = vpack.c.b16 %v1551, %v1544
    %v1979 = vpack.c.b16 %v1559, %v1552
    %v1980 = vpack.c.b16 %v1560, %v1553
    %v1981 = vpack.c.b16 %v1561, %v1554
    %v1982 = vpack.c.b16 %v1562, %v1555
    %v1983 = vpack.c.b16 %v1563, %v1556
    %v1984 = vpack.c.b16 %v1564, %v1557
    %v1985 = vpack.c.b16 %v1565, %v1558
    %v1986 = vpack.c.b16 %v1573, %v1566
    %v1987 = vpack.c.b16 %v1574, %v1567
    %v1988 = vpack.c.b16 %v1575, %v1568
    %v1989 = vpack.c.b16 %v1576, %v1569
    %v1990 = vpack.c.b16 %v1577, %v1570
    %v1991 = vpack.c.b16 %v1578, %v1571
    %v1992 = vpack.c.b16 %v1579, %v1572
    %v1993 = vpack.c.b16 %v1587, %v1580
    %v1994 = vpack.c.b16 %v1588, %v1581
    %v1995 = vpack.c.b16 %v1589, %v1582
    %v1996 = vpack.c.b16 %v1590, %v1583
    %v1997 = vpack.c.b16 %v1591, %v1584
    %v1998 = vpack.c.b16 %v1592, %v1585
    %v1999 = vpack.c.b16 %v1593, %v1586
    %v2000 = vpack.c.b16 %v1601, %v1594
    %v2001 = vpack.c.b16 %v1602, %v1595
    %v2002 = vpack.c.b16 %v1603, %v1596
    %v2003 = vpack.c.b16 %v1604, %v1597
    %v2004 = vpack.c.b16 %v1605, %v1598
    %v2005 = vpack.c.b16 %v1606, %v1599
    %v2006 = vpack.c.b16 %v1607, %v1600
    %v2007 = vpack.c.b16 %v1615, %v1608
    %v2008 = vpack.c.b16 %v1616, %v1609
    %v2009 = vpack.c.b16 %v1617, %v1610
    %v2010 = vpack.c.b16 %v1618, %v1611
    %v2011 = vpack.c.b16 %v1619, %v1612
    %v2012 = vpack.c.b16 %v1620, %v1613
    %v2013 = vpack.c.b16 %v1621, %v1614
    %v2014 = vpack.c.b16 %v1629, %v1622
    %v2015 = vpack.c.b16 %v1630, %v1623
    %v2016 = vpack.c.b16 %v1631, %v1624
    %v2017 = vpack.c.b16 %v1632, %v1625
    %v2018 = vpack.c.b16 %v1633, %v1626
    %v2019 = vpack.c.b16 %v1634, %v1627
    %v2020 = vpack.c.b16 %v1635, %v1628
    %v2021 = vpack.c.b16 %v1643, %v1636
    %v2022 = vpack.c.b16 %v1644, %v1637
    %v2023 = vpack.c.b16 %v1645, %v1638
    %v2024 = vpack.c.b16 %v1646, %v1639
    %v2025 = vpack.c.b16 %v1647, %v1640
    %v2026 = vpack.c.b16 %v1648, %v1641
    %v2027 = vpack.c.b16 %v1649, %v1642
    %v2028 = vpack.c.b16 %v1657, %v1650
    %v2029 = vpack.c.b16 %v1658, %v1651
    %v2030 = vpack.c.b16 %v1659, %v1652
    %v2031 = vpack.c.b16 %v1660, %v1653
    %v2032 = vpack.c.b16 %v1661, %v1654
    %v2033 = vpack.c.b16 %v1662, %v1655
    %v2034 = vpack.c.b16 %v1663, %v1656
    %v2035 = vpack.c.b16 %v1671, %v1664
    %v2036 = vpack.c.b16 %v1672, %v1665
    %v2037 = vpack.c.b16 %v1673, %v1666
    %v2038 = vpack.c.b16 %v1674, %v1667
    %v2039 = vpack.c.b16 %v1675, %v1668
    %v2040 = vpack.c.b16 %v1676, %v1669
    %v2041 = vpack.c.b16 %v1677, %v1670
    %v2042 = vpack.c.b16 %v1685, %v1678
    %v2043 = vpack.c.b16 %v1686, %v1679
    %v2044 = vpack.c.b16 %v1687, %v1680
    %v2045 = vpack.c.b16 %v1688, %v1681
    %v2046 = vpack.c.b16 %v1689, %v1682
    %v2047 = vpack.c.b16 %v1690, %v1683
    %v2048 = vpack.c.b16 %v1691, %v1684
    %v2049 = vpack.c.b16 %v1699, %v1692
    %v2050 = vpack.c.b16 %v1700, %v1693
    %v2051 = vpack.c.b16 %v1701, %v1694
    %v2052 = vpack.c.b16 %v1702, %v1695
    %v2053 = vpack.c.b16 %v1703, %v1696
    %v2054 = vpack.c.b16 %v1704, %v1697
    %v2055 = vpack.c.b16 %v1705, %v1698
    %v2056 = vpack.c.b16 %v1713, %v1706
    %v2057 = vpack.c.b16 %v1714, %v1707
    %v2058 = vpack.c.b16 %v1715, %v1708
    %v2059 = vpack.c.b16 %v1716, %v1709
    %v2060 = vpack.c.b16 %v1717, %v1710
    %v2061 = vpack.c.b16 %v1718, %v1711
    %v2062 = vpack.c.b16 %v1719, %v1712
    %v2063 = vpack.c.b16 %v1727, %v1720
    %v2064 = vpack.c.b16 %v1728, %v1721
    %v2065 = vpack.c.b16 %v1729, %v1722
    %v2066 = vpack.c.b16 %v1730, %v1723
    %v2067 = vpack.c.b16 %v1731, %v1724
    %v2068 = vpack.c.b16 %v1732, %v1725
    %v2069 = vpack.c.b16 %v1733, %v1726
    %v2070 = vpack.c.b16 %v1741, %v1734
    %v2071 = vpack.c.b16 %v1742, %v1735
    %v2072 = vpack.c.b16 %v1743, %v1736
    %v2073 = vpack.c.b16 %v1744, %v1737
    %v2074 = vpack.c.b16 %v1745, %v1738
    %v2075 = vpack.c.b16 %v1746, %v1739
    %v2076 = vpack.c.b16 %v1747, %v1740
    %v2077 = vpack.c.b16 %v1755, %v1748
    %v2078 = vpack.c.b16 %v1756, %v1749
    %v2079 = vpack.c.b16 %v1757, %v1750
    %v2080 = vpack.c.b16 %v1758, %v1751
    %v2081 = vpack.c.b16 %v1759, %v1752
    %v2082 = vpack.c.b16 %v1760, %v1753
    %v2083 = vpack.c.b16 %v1761, %v1754
    %v2084 = vpack.c.b16 %v1769, %v1762
    %v2085 = vpack.c.b16 %v1770, %v1763
    %v2086 = vpack.c.b16 %v1771, %v1764
    %v2087 = vpack.c.b16 %v1772, %v1765
    %v2088 = vpack.c.b16 %v1773, %v1766
    %v2089 = vpack.c.b16 %v1774, %v1767
    %v2090 = vpack.c.b16 %v1775, %v1768
    %v2091 = vpack.c.b16 %v1783, %v1776
    %v2092 = vpack.c.b16 %v1784, %v1777
    %v2093 = vpack.c.b16 %v1785, %v1778
    %v2094 = vpack.c.b16 %v1786, %v1779
    %v2095 = vpack.c.b16 %v1787, %v1780
    %v2096 = vpack.c.b16 %v1788, %v1781
    %v2097 = vpack.c.b16 %v1789, %v1782
    %v2098 = vpack.c.b16 %v1797, %v1790
    %v2099 = vpack.c.b16 %v1798, %v1791
    %v2100 = vpack.c.b16 %v1799, %v1792
    %v2101 = vpack.c.b16 %v1800, %v1793
    %v2102 = vpack.c.b16 %v1801, %v1794
    %v2103 = vpack.c.b16 %v1802, %v1795
    %v2104 = vpack.c.b16 %v1803, %v1796
    %v2105 = vpack.c.b16 %v1811, %v1804
    %v2106 = vpack.c.b16 %v1812, %v1805
    %v2107 = vpack.c.b16 %v1813, %v1806
    %v2108 = vpack.c.b16 %v1814, %v1807
    %v2109 = vpack.c.b16 %v1815, %v1808
    %v2110 = vpack.c.b16 %v1816, %v1809
    %v2111 = vpack.c.b16 %v1817, %v1810
    %v2112 = vpack.c.b16 %v1825, %v1818
    %v2113 = vpack.c.b16 %v1826, %v1819
    %v2114 = vpack.c.b16 %v1827, %v1820
    %v2115 = vpack.c.b16 %v1828, %v1821
    %v2116 = vpack.c.b16 %v1829, %v1822
    %v2117 = vpack.c.b16 %v1830, %v1823
    %v2118 = vpack.c.b16 %v1831, %v1824
    %v2119 = vpack.c.b16 %v1832, %v1832
    %v2120 = vpack.c.b16 %v1833, %v1833
    %v2121 = vpack.c.b16 %v1834, %v1834
    %v2122 = vpack.c.b16 %v1835, %v1835
    %v2123 = vpack.c.b16 %v1836, %v1836
    %v2124 = vpack.c.b16 %v1837, %v1837
    %v2125 = vpack.c.b16 %v1838, %v1838
    %vm2406 = vcmask 64512
    %v2408 = vsel %vm2406, %v607, 0
    %v2411 = vsel %vm496, %v2119, 0
    %v2414 = vsel %vm496, %v2120, 0
    %v2417 = vsel %vm496, %v2121, 0
    %v2420 = vsel %vm496, %v2122, 0
    %v2423 = vsel %vm496, %v2123, 0
    %v2426 = vsel %vm496, %v2124, 0
    %v2429 = vsel %vm496, %v2125, 0
    %2431 = vmatpush.bf16.msra.mxu0 %v1888
    %2432 = vmatpush.bf16.msra.mxu0 %v1881
    %2433 = vmatpush.bf16.msra.mxu0 %v1874
    %2434 = vmatpush.bf16.msra.mxu0 %v1867
    %2435 = vmatpush.bf16.msra.mxu0 %v1860
    %2436 = vmatpush.bf16.msra.mxu0 %v1853
    %2437 = vmatpush.bf16.msra.mxu0 %v1846
    %2438 = vmatpush.bf16.msra.mxu0 %v1839
    %2439 = vmatmul.bf16.gmra.mxu0 %v602
    %v2440 = vpop.f32.mrf.mxu0
    %v2441 = vadd.f32 %v934, %v2440
    %v2442 = vpop.f32.mrf.mxu0
    %2443 = vdwg.mxu0
    %2444 = vmatpush.bf16.msra.mxu0 %v1944
    %2445 = vmatpush.bf16.msra.mxu0 %v1937
    %2446 = vmatpush.bf16.msra.mxu0 %v1930
    %2447 = vmatpush.bf16.msra.mxu0 %v1923
    %2448 = vmatpush.bf16.msra.mxu0 %v1916
    %2449 = vmatpush.bf16.msra.mxu0 %v1909
    %2450 = vmatpush.bf16.msra.mxu0 %v1902
    %2451 = vmatpush.bf16.msra.mxu0 %v1895
    %2452 = vmatmul.bf16.gmra.mxu0 %v603
    %v2453 = vpop.f32.mrf.mxu0
    %v2454 = vadd.f32 %v2441, %v2453
    %v2455 = vpop.f32.mrf.mxu0
    %2456 = vdwg.mxu0
    %2457 = vmatpush.bf16.msra.mxu0 %v2000
    %2458 = vmatpush.bf16.msra.mxu0 %v1993
    %2459 = vmatpush.bf16.msra.mxu0 %v1986
    %2460 = vmatpush.bf16.msra.mxu0 %v1979
    %2461 = vmatpush.bf16.msra.mxu0 %v1972
    %2462 = vmatpush.bf16.msra.mxu0 %v1965
    %2463 = vmatpush.bf16.msra.mxu0 %v1958
    %2464 = vmatpush.bf16.msra.mxu0 %v1951
    %2465 = vmatmul.bf16.gmra.mxu0 %v604
    %v2466 = vpop.f32.mrf.mxu0
    %v2467 = vadd.f32 %v2454, %v2466
    %v2468 = vpop.f32.mrf.mxu0
    %2469 = vdwg.mxu0
    %2470 = vmatpush.bf16.msra.mxu0 %v2056
    %2471 = vmatpush.bf16.msra.mxu0 %v2049
    %2472 = vmatpush.bf16.msra.mxu0 %v2042
    %2473 = vmatpush.bf16.msra.mxu0 %v2035
    %2474 = vmatpush.bf16.msra.mxu0 %v2028
    %2475 = vmatpush.bf16.msra.mxu0 %v2021
    %2476 = vmatpush.bf16.msra.mxu0 %v2014
    %2477 = vmatpush.bf16.msra.mxu0 %v2007
    %2478 = vmatmul.bf16.gmra.mxu0 %v605
    %v2479 = vpop.f32.mrf.mxu0
    %v2480 = vadd.f32 %v2467, %v2479
    %v2481 = vpop.f32.mrf.mxu0
    %2482 = vdwg.mxu0
    %2483 = vmatpush.bf16.msra.mxu0 %v2112
    %2484 = vmatpush.bf16.msra.mxu0 %v2105
    %2485 = vmatpush.bf16.msra.mxu0 %v2098
    %2486 = vmatpush.bf16.msra.mxu0 %v2091
    %2487 = vmatpush.bf16.msra.mxu0 %v2084
    %2488 = vmatpush.bf16.msra.mxu0 %v2077
    %2489 = vmatpush.bf16.msra.mxu0 %v2070
    %2490 = vmatpush.bf16.msra.mxu0 %v2063
    %2491 = vmatmul.bf16.gmra.mxu0 %v606
    %v2492 = vpop.f32.mrf.mxu0
    %v2493 = vadd.f32 %v2480, %v2492
    %v2494 = vpop.f32.mrf.mxu0
    %2495 = vdwg.mxu0
    %2496 = vmatpush.bf16.msra.mxu0 0
    %2497 = vmatpush.bf16.msra.mxu0 0
    %2498 = vmatpush.bf16.msra.mxu0 0
    %2499 = vmatpush.bf16.msra.mxu0 0
    %2500 = vmatpush.bf16.msra.mxu0 0
    %2501 = vmatpush.bf16.msra.mxu0 0
    %2502 = vmatpush.bf16.msra.mxu0 0
    %2503 = vmatpush.bf16.msra.mxu0 %v2411
    %2504 = vmatmul.bf16.gmra.mxu0 %v2408
    %v2505 = vpop.f32.mrf.mxu0
    %v2506 = vadd.f32 %v2493, %v2505
    %v2507 = vpop.f32.mrf.mxu0
    %2508 = vdwg.mxu0
    %2509 = vmatpush.bf16.msra.mxu0 %v1889
    %2510 = vmatpush.bf16.msra.mxu0 %v1882
    %2511 = vmatpush.bf16.msra.mxu0 %v1875
    %2512 = vmatpush.bf16.msra.mxu0 %v1868
    %2513 = vmatpush.bf16.msra.mxu0 %v1861
    %2514 = vmatpush.bf16.msra.mxu0 %v1854
    %2515 = vmatpush.bf16.msra.mxu0 %v1847
    %2516 = vmatpush.bf16.msra.mxu0 %v1840
    %2517 = vmatmul.bf16.gmra.mxu0 %v602
    %v2518 = vpop.f32.mrf.mxu0
    %v2519 = vadd.f32 %v935, %v2518
    %v2520 = vpop.f32.mrf.mxu0
    %2521 = vdwg.mxu0
    %2522 = vmatpush.bf16.msra.mxu0 %v1945
    %2523 = vmatpush.bf16.msra.mxu0 %v1938
    %2524 = vmatpush.bf16.msra.mxu0 %v1931
    %2525 = vmatpush.bf16.msra.mxu0 %v1924
    %2526 = vmatpush.bf16.msra.mxu0 %v1917
    %2527 = vmatpush.bf16.msra.mxu0 %v1910
    %2528 = vmatpush.bf16.msra.mxu0 %v1903
    %2529 = vmatpush.bf16.msra.mxu0 %v1896
    %2530 = vmatmul.bf16.gmra.mxu0 %v603
    %v2531 = vpop.f32.mrf.mxu0
    %v2532 = vadd.f32 %v2519, %v2531
    %v2533 = vpop.f32.mrf.mxu0
    %2534 = vdwg.mxu0
    %2535 = vmatpush.bf16.msra.mxu0 %v2001
    %2536 = vmatpush.bf16.msra.mxu0 %v1994
    %2537 = vmatpush.bf16.msra.mxu0 %v1987
    %2538 = vmatpush.bf16.msra.mxu0 %v1980
    %2539 = vmatpush.bf16.msra.mxu0 %v1973
    %2540 = vmatpush.bf16.msra.mxu0 %v1966
    %2541 = vmatpush.bf16.msra.mxu0 %v1959
    %2542 = vmatpush.bf16.msra.mxu0 %v1952
    %2543 = vmatmul.bf16.gmra.mxu0 %v604
    %v2544 = vpop.f32.mrf.mxu0
    %v2545 = vadd.f32 %v2532, %v2544
    %v2546 = vpop.f32.mrf.mxu0
    %2547 = vdwg.mxu0
    %2548 = vmatpush.bf16.msra.mxu0 %v2057
    %2549 = vmatpush.bf16.msra.mxu0 %v2050
    %2550 = vmatpush.bf16.msra.mxu0 %v2043
    %2551 = vmatpush.bf16.msra.mxu0 %v2036
    %2552 = vmatpush.bf16.msra.mxu0 %v2029
    %2553 = vmatpush.bf16.msra.mxu0 %v2022
    %2554 = vmatpush.bf16.msra.mxu0 %v2015
    %2555 = vmatpush.bf16.msra.mxu0 %v2008
    %2556 = vmatmul.bf16.gmra.mxu0 %v605
    %v2557 = vpop.f32.mrf.mxu0
    %v2558 = vadd.f32 %v2545, %v2557
    %v2559 = vpop.f32.mrf.mxu0
    %2560 = vdwg.mxu0
    %2561 = vmatpush.bf16.msra.mxu0 %v2113
    %2562 = vmatpush.bf16.msra.mxu0 %v2106
    %2563 = vmatpush.bf16.msra.mxu0 %v2099
    %2564 = vmatpush.bf16.msra.mxu0 %v2092
    %2565 = vmatpush.bf16.msra.mxu0 %v2085
    %2566 = vmatpush.bf16.msra.mxu0 %v2078
    %2567 = vmatpush.bf16.msra.mxu0 %v2071
    %2568 = vmatpush.bf16.msra.mxu0 %v2064
    %2569 = vmatmul.bf16.gmra.mxu0 %v606
    %v2570 = vpop.f32.mrf.mxu0
    %v2571 = vadd.f32 %v2558, %v2570
    %v2572 = vpop.f32.mrf.mxu0
    %2573 = vdwg.mxu0
    %2574 = vmatpush.bf16.msra.mxu0 0
    %2575 = vmatpush.bf16.msra.mxu0 0
    %2576 = vmatpush.bf16.msra.mxu0 0
    %2577 = vmatpush.bf16.msra.mxu0 0
    %2578 = vmatpush.bf16.msra.mxu0 0
    %2579 = vmatpush.bf16.msra.mxu0 0
    %2580 = vmatpush.bf16.msra.mxu0 0
    %2581 = vmatpush.bf16.msra.mxu0 %v2414
    %2582 = vmatmul.bf16.gmra.mxu0 %v2408
    %v2583 = vpop.f32.mrf.mxu0
    %v2584 = vadd.f32 %v2571, %v2583
    %v2585 = vpop.f32.mrf.mxu0
    %2586 = vdwg.mxu0
    %2587 = vmatpush.bf16.msra.mxu0 %v1890
    %2588 = vmatpush.bf16.msra.mxu0 %v1883
    %2589 = vmatpush.bf16.msra.mxu0 %v1876
    %2590 = vmatpush.bf16.msra.mxu0 %v1869
    %2591 = vmatpush.bf16.msra.mxu0 %v1862
    %2592 = vmatpush.bf16.msra.mxu0 %v1855
    %2593 = vmatpush.bf16.msra.mxu0 %v1848
    %2594 = vmatpush.bf16.msra.mxu0 %v1841
    %2595 = vmatmul.bf16.gmra.mxu0 %v602
    %v2596 = vpop.f32.mrf.mxu0
    %v2597 = vadd.f32 %v936, %v2596
    %v2598 = vpop.f32.mrf.mxu0
    %2599 = vdwg.mxu0
    %2600 = vmatpush.bf16.msra.mxu0 %v1946
    %2601 = vmatpush.bf16.msra.mxu0 %v1939
    %2602 = vmatpush.bf16.msra.mxu0 %v1932
    %2603 = vmatpush.bf16.msra.mxu0 %v1925
    %2604 = vmatpush.bf16.msra.mxu0 %v1918
    %2605 = vmatpush.bf16.msra.mxu0 %v1911
    %2606 = vmatpush.bf16.msra.mxu0 %v1904
    %2607 = vmatpush.bf16.msra.mxu0 %v1897
    %2608 = vmatmul.bf16.gmra.mxu0 %v603
    %v2609 = vpop.f32.mrf.mxu0
    %v2610 = vadd.f32 %v2597, %v2609
    %v2611 = vpop.f32.mrf.mxu0
    %2612 = vdwg.mxu0
    %2613 = vmatpush.bf16.msra.mxu0 %v2002
    %2614 = vmatpush.bf16.msra.mxu0 %v1995
    %2615 = vmatpush.bf16.msra.mxu0 %v1988
    %2616 = vmatpush.bf16.msra.mxu0 %v1981
    %2617 = vmatpush.bf16.msra.mxu0 %v1974
    %2618 = vmatpush.bf16.msra.mxu0 %v1967
    %2619 = vmatpush.bf16.msra.mxu0 %v1960
    %2620 = vmatpush.bf16.msra.mxu0 %v1953
    %2621 = vmatmul.bf16.gmra.mxu0 %v604
    %v2622 = vpop.f32.mrf.mxu0
    %v2623 = vadd.f32 %v2610, %v2622
    %v2624 = vpop.f32.mrf.mxu0
    %2625 = vdwg.mxu0
    %2626 = vmatpush.bf16.msra.mxu0 %v2058
    %2627 = vmatpush.bf16.msra.mxu0 %v2051
    %2628 = vmatpush.bf16.msra.mxu0 %v2044
    %2629 = vmatpush.bf16.msra.mxu0 %v2037
    %2630 = vmatpush.bf16.msra.mxu0 %v2030
    %2631 = vmatpush.bf16.msra.mxu0 %v2023
    %2632 = vmatpush.bf16.msra.mxu0 %v2016
    %2633 = vmatpush.bf16.msra.mxu0 %v2009
    %2634 = vmatmul.bf16.gmra.mxu0 %v605
    %v2635 = vpop.f32.mrf.mxu0
    %v2636 = vadd.f32 %v2623, %v2635
    %v2637 = vpop.f32.mrf.mxu0
    %2638 = vdwg.mxu0
    %2639 = vmatpush.bf16.msra.mxu0 %v2114
    %2640 = vmatpush.bf16.msra.mxu0 %v2107
    %2641 = vmatpush.bf16.msra.mxu0 %v2100
    %2642 = vmatpush.bf16.msra.mxu0 %v2093
    %2643 = vmatpush.bf16.msra.mxu0 %v2086
    %2644 = vmatpush.bf16.msra.mxu0 %v2079
    %2645 = vmatpush.bf16.msra.mxu0 %v2072
    %2646 = vmatpush.bf16.msra.mxu0 %v2065
    %2647 = vmatmul.bf16.gmra.mxu0 %v606
    %v2648 = vpop.f32.mrf.mxu0
    %v2649 = vadd.f32 %v2636, %v2648
    %v2650 = vpop.f32.mrf.mxu0
    %2651 = vdwg.mxu0
    %2652 = vmatpush.bf16.msra.mxu0 0
    %2653 = vmatpush.bf16.msra.mxu0 0
    %2654 = vmatpush.bf16.msra.mxu0 0
    %2655 = vmatpush.bf16.msra.mxu0 0
    %2656 = vmatpush.bf16.msra.mxu0 0
    %2657 = vmatpush.bf16.msra.mxu0 0
    %2658 = vmatpush.bf16.msra.mxu0 0
    %2659 = vmatpush.bf16.msra.mxu0 %v2417
    %2660 = vmatmul.bf16.gmra.mxu0 %v2408
    %v2661 = vpop.f32.mrf.mxu0
    %v2662 = vadd.f32 %v2649, %v2661
    %v2663 = vpop.f32.mrf.mxu0
    %2664 = vdwg.mxu0
    %2665 = vmatpush.bf16.msra.mxu0 %v1891
    %2666 = vmatpush.bf16.msra.mxu0 %v1884
    %2667 = vmatpush.bf16.msra.mxu0 %v1877
    %2668 = vmatpush.bf16.msra.mxu0 %v1870
    %2669 = vmatpush.bf16.msra.mxu0 %v1863
    %2670 = vmatpush.bf16.msra.mxu0 %v1856
    %2671 = vmatpush.bf16.msra.mxu0 %v1849
    %2672 = vmatpush.bf16.msra.mxu0 %v1842
    %2673 = vmatmul.bf16.gmra.mxu0 %v602
    %v2674 = vpop.f32.mrf.mxu0
    %v2675 = vadd.f32 %v937, %v2674
    %v2676 = vpop.f32.mrf.mxu0
    %2677 = vdwg.mxu0
    %2678 = vmatpush.bf16.msra.mxu0 %v1947
    %2679 = vmatpush.bf16.msra.mxu0 %v1940
    %2680 = vmatpush.bf16.msra.mxu0 %v1933
    %2681 = vmatpush.bf16.msra.mxu0 %v1926
    %2682 = vmatpush.bf16.msra.mxu0 %v1919
    %2683 = vmatpush.bf16.msra.mxu0 %v1912
    %2684 = vmatpush.bf16.msra.mxu0 %v1905
    %2685 = vmatpush.bf16.msra.mxu0 %v1898
    %2686 = vmatmul.bf16.gmra.mxu0 %v603
    %v2687 = vpop.f32.mrf.mxu0
    %v2688 = vadd.f32 %v2675, %v2687
    %v2689 = vpop.f32.mrf.mxu0
    %2690 = vdwg.mxu0
    %2691 = vmatpush.bf16.msra.mxu0 %v2003
    %2692 = vmatpush.bf16.msra.mxu0 %v1996
    %2693 = vmatpush.bf16.msra.mxu0 %v1989
    %2694 = vmatpush.bf16.msra.mxu0 %v1982
    %2695 = vmatpush.bf16.msra.mxu0 %v1975
    %2696 = vmatpush.bf16.msra.mxu0 %v1968
    %2697 = vmatpush.bf16.msra.mxu0 %v1961
    %2698 = vmatpush.bf16.msra.mxu0 %v1954
    %2699 = vmatmul.bf16.gmra.mxu0 %v604
    %v2700 = vpop.f32.mrf.mxu0
    %v2701 = vadd.f32 %v2688, %v2700
    %v2702 = vpop.f32.mrf.mxu0
    %2703 = vdwg.mxu0
    %2704 = vmatpush.bf16.msra.mxu0 %v2059
    %2705 = vmatpush.bf16.msra.mxu0 %v2052
    %2706 = vmatpush.bf16.msra.mxu0 %v2045
    %2707 = vmatpush.bf16.msra.mxu0 %v2038
    %2708 = vmatpush.bf16.msra.mxu0 %v2031
    %2709 = vmatpush.bf16.msra.mxu0 %v2024
    %2710 = vmatpush.bf16.msra.mxu0 %v2017
    %2711 = vmatpush.bf16.msra.mxu0 %v2010
    %2712 = vmatmul.bf16.gmra.mxu0 %v605
    %v2713 = vpop.f32.mrf.mxu0
    %v2714 = vadd.f32 %v2701, %v2713
    %v2715 = vpop.f32.mrf.mxu0
    %2716 = vdwg.mxu0
    %2717 = vmatpush.bf16.msra.mxu0 %v2115
    %2718 = vmatpush.bf16.msra.mxu0 %v2108
    %2719 = vmatpush.bf16.msra.mxu0 %v2101
    %2720 = vmatpush.bf16.msra.mxu0 %v2094
    %2721 = vmatpush.bf16.msra.mxu0 %v2087
    %2722 = vmatpush.bf16.msra.mxu0 %v2080
    %2723 = vmatpush.bf16.msra.mxu0 %v2073
    %2724 = vmatpush.bf16.msra.mxu0 %v2066
    %2725 = vmatmul.bf16.gmra.mxu0 %v606
    %v2726 = vpop.f32.mrf.mxu0
    %v2727 = vadd.f32 %v2714, %v2726
    %v2728 = vpop.f32.mrf.mxu0
    %2729 = vdwg.mxu0
    %2730 = vmatpush.bf16.msra.mxu0 0
    %2731 = vmatpush.bf16.msra.mxu0 0
    %2732 = vmatpush.bf16.msra.mxu0 0
    %2733 = vmatpush.bf16.msra.mxu0 0
    %2734 = vmatpush.bf16.msra.mxu0 0
    %2735 = vmatpush.bf16.msra.mxu0 0
    %2736 = vmatpush.bf16.msra.mxu0 0
    %2737 = vmatpush.bf16.msra.mxu0 %v2420
    %2738 = vmatmul.bf16.gmra.mxu0 %v2408
    %v2739 = vpop.f32.mrf.mxu0
    %v2740 = vadd.f32 %v2727, %v2739
    %v2741 = vpop.f32.mrf.mxu0
    %2742 = vdwg.mxu0
    %2743 = vmatpush.bf16.msra.mxu0 %v1892
    %2744 = vmatpush.bf16.msra.mxu0 %v1885
    %2745 = vmatpush.bf16.msra.mxu0 %v1878
    %2746 = vmatpush.bf16.msra.mxu0 %v1871
    %2747 = vmatpush.bf16.msra.mxu0 %v1864
    %2748 = vmatpush.bf16.msra.mxu0 %v1857
    %2749 = vmatpush.bf16.msra.mxu0 %v1850
    %2750 = vmatpush.bf16.msra.mxu0 %v1843
    %2751 = vmatmul.bf16.gmra.mxu0 %v602
    %v2752 = vpop.f32.mrf.mxu0
    %v2753 = vadd.f32 %v938, %v2752
    %v2754 = vpop.f32.mrf.mxu0
    %2755 = vdwg.mxu0
    %2756 = vmatpush.bf16.msra.mxu0 %v1948
    %2757 = vmatpush.bf16.msra.mxu0 %v1941
    %2758 = vmatpush.bf16.msra.mxu0 %v1934
    %2759 = vmatpush.bf16.msra.mxu0 %v1927
    %2760 = vmatpush.bf16.msra.mxu0 %v1920
    %2761 = vmatpush.bf16.msra.mxu0 %v1913
    %2762 = vmatpush.bf16.msra.mxu0 %v1906
    %2763 = vmatpush.bf16.msra.mxu0 %v1899
    %2764 = vmatmul.bf16.gmra.mxu0 %v603
    %v2765 = vpop.f32.mrf.mxu0
    %v2766 = vadd.f32 %v2753, %v2765
    %v2767 = vpop.f32.mrf.mxu0
    %2768 = vdwg.mxu0
    %2769 = vmatpush.bf16.msra.mxu0 %v2004
    %2770 = vmatpush.bf16.msra.mxu0 %v1997
    %2771 = vmatpush.bf16.msra.mxu0 %v1990
    %2772 = vmatpush.bf16.msra.mxu0 %v1983
    %2773 = vmatpush.bf16.msra.mxu0 %v1976
    %2774 = vmatpush.bf16.msra.mxu0 %v1969
    %2775 = vmatpush.bf16.msra.mxu0 %v1962
    %2776 = vmatpush.bf16.msra.mxu0 %v1955
    %2777 = vmatmul.bf16.gmra.mxu0 %v604
    %v2778 = vpop.f32.mrf.mxu0
    %v2779 = vadd.f32 %v2766, %v2778
    %v2780 = vpop.f32.mrf.mxu0
    %2781 = vdwg.mxu0
    %2782 = vmatpush.bf16.msra.mxu0 %v2060
    %2783 = vmatpush.bf16.msra.mxu0 %v2053
    %2784 = vmatpush.bf16.msra.mxu0 %v2046
    %2785 = vmatpush.bf16.msra.mxu0 %v2039
    %2786 = vmatpush.bf16.msra.mxu0 %v2032
    %2787 = vmatpush.bf16.msra.mxu0 %v2025
    %2788 = vmatpush.bf16.msra.mxu0 %v2018
    %2789 = vmatpush.bf16.msra.mxu0 %v2011
    %2790 = vmatmul.bf16.gmra.mxu0 %v605
    %v2791 = vpop.f32.mrf.mxu0
    %v2792 = vadd.f32 %v2779, %v2791
    %v2793 = vpop.f32.mrf.mxu0
    %2794 = vdwg.mxu0
    %2795 = vmatpush.bf16.msra.mxu0 %v2116
    %2796 = vmatpush.bf16.msra.mxu0 %v2109
    %2797 = vmatpush.bf16.msra.mxu0 %v2102
    %2798 = vmatpush.bf16.msra.mxu0 %v2095
    %2799 = vmatpush.bf16.msra.mxu0 %v2088
    %2800 = vmatpush.bf16.msra.mxu0 %v2081
    %2801 = vmatpush.bf16.msra.mxu0 %v2074
    %2802 = vmatpush.bf16.msra.mxu0 %v2067
    %2803 = vmatmul.bf16.gmra.mxu0 %v606
    %v2804 = vpop.f32.mrf.mxu0
    %v2805 = vadd.f32 %v2792, %v2804
    %v2806 = vpop.f32.mrf.mxu0
    %2807 = vdwg.mxu0
    %2808 = vmatpush.bf16.msra.mxu0 0
    %2809 = vmatpush.bf16.msra.mxu0 0
    %2810 = vmatpush.bf16.msra.mxu0 0
    %2811 = vmatpush.bf16.msra.mxu0 0
    %2812 = vmatpush.bf16.msra.mxu0 0
    %2813 = vmatpush.bf16.msra.mxu0 0
    %2814 = vmatpush.bf16.msra.mxu0 0
    %2815 = vmatpush.bf16.msra.mxu0 %v2423
    %2816 = vmatmul.bf16.gmra.mxu0 %v2408
    %v2817 = vpop.f32.mrf.mxu0
    %v2818 = vadd.f32 %v2805, %v2817
    %v2819 = vpop.f32.mrf.mxu0
    %2820 = vdwg.mxu0
    %2821 = vmatpush.bf16.msra.mxu0 %v1893
    %2822 = vmatpush.bf16.msra.mxu0 %v1886
    %2823 = vmatpush.bf16.msra.mxu0 %v1879
    %2824 = vmatpush.bf16.msra.mxu0 %v1872
    %2825 = vmatpush.bf16.msra.mxu0 %v1865
    %2826 = vmatpush.bf16.msra.mxu0 %v1858
    %2827 = vmatpush.bf16.msra.mxu0 %v1851
    %2828 = vmatpush.bf16.msra.mxu0 %v1844
    %2829 = vmatmul.bf16.gmra.mxu0 %v602
    %v2830 = vpop.f32.mrf.mxu0
    %v2831 = vadd.f32 %v939, %v2830
    %v2832 = vpop.f32.mrf.mxu0
    %2833 = vdwg.mxu0
    %2834 = vmatpush.bf16.msra.mxu0 %v1949
    %2835 = vmatpush.bf16.msra.mxu0 %v1942
    %2836 = vmatpush.bf16.msra.mxu0 %v1935
    %2837 = vmatpush.bf16.msra.mxu0 %v1928
    %2838 = vmatpush.bf16.msra.mxu0 %v1921
    %2839 = vmatpush.bf16.msra.mxu0 %v1914
    %2840 = vmatpush.bf16.msra.mxu0 %v1907
    %2841 = vmatpush.bf16.msra.mxu0 %v1900
    %2842 = vmatmul.bf16.gmra.mxu0 %v603
    %v2843 = vpop.f32.mrf.mxu0
    %v2844 = vadd.f32 %v2831, %v2843
    %v2845 = vpop.f32.mrf.mxu0
    %2846 = vdwg.mxu0
    %2847 = vmatpush.bf16.msra.mxu0 %v2005
    %2848 = vmatpush.bf16.msra.mxu0 %v1998
    %2849 = vmatpush.bf16.msra.mxu0 %v1991
    %2850 = vmatpush.bf16.msra.mxu0 %v1984
    %2851 = vmatpush.bf16.msra.mxu0 %v1977
    %2852 = vmatpush.bf16.msra.mxu0 %v1970
    %2853 = vmatpush.bf16.msra.mxu0 %v1963
    %2854 = vmatpush.bf16.msra.mxu0 %v1956
    %2855 = vmatmul.bf16.gmra.mxu0 %v604
    %v2856 = vpop.f32.mrf.mxu0
    %v2857 = vadd.f32 %v2844, %v2856
    %v2858 = vpop.f32.mrf.mxu0
    %2859 = vdwg.mxu0
    %2860 = vmatpush.bf16.msra.mxu0 %v2061
    %2861 = vmatpush.bf16.msra.mxu0 %v2054
    %2862 = vmatpush.bf16.msra.mxu0 %v2047
    %2863 = vmatpush.bf16.msra.mxu0 %v2040
    %2864 = vmatpush.bf16.msra.mxu0 %v2033
    %2865 = vmatpush.bf16.msra.mxu0 %v2026
    %2866 = vmatpush.bf16.msra.mxu0 %v2019
    %2867 = vmatpush.bf16.msra.mxu0 %v2012
    %2868 = vmatmul.bf16.gmra.mxu0 %v605
    %v2869 = vpop.f32.mrf.mxu0
    %v2870 = vadd.f32 %v2857, %v2869
    %v2871 = vpop.f32.mrf.mxu0
    %2872 = vdwg.mxu0
    %2873 = vmatpush.bf16.msra.mxu0 %v2117
    %2874 = vmatpush.bf16.msra.mxu0 %v2110
    %2875 = vmatpush.bf16.msra.mxu0 %v2103
    %2876 = vmatpush.bf16.msra.mxu0 %v2096
    %2877 = vmatpush.bf16.msra.mxu0 %v2089
    %2878 = vmatpush.bf16.msra.mxu0 %v2082
    %2879 = vmatpush.bf16.msra.mxu0 %v2075
    %2880 = vmatpush.bf16.msra.mxu0 %v2068
    %2881 = vmatmul.bf16.gmra.mxu0 %v606
    %v2882 = vpop.f32.mrf.mxu0
    %v2883 = vadd.f32 %v2870, %v2882
    %v2884 = vpop.f32.mrf.mxu0
    %2885 = vdwg.mxu0
    %2886 = vmatpush.bf16.msra.mxu0 0
    %2887 = vmatpush.bf16.msra.mxu0 0
    %2888 = vmatpush.bf16.msra.mxu0 0
    %2889 = vmatpush.bf16.msra.mxu0 0
    %2890 = vmatpush.bf16.msra.mxu0 0
    %2891 = vmatpush.bf16.msra.mxu0 0
    %2892 = vmatpush.bf16.msra.mxu0 0
    %2893 = vmatpush.bf16.msra.mxu0 %v2426
    %2894 = vmatmul.bf16.gmra.mxu0 %v2408
    %v2895 = vpop.f32.mrf.mxu0
    %v2896 = vadd.f32 %v2883, %v2895
    %v2897 = vpop.f32.mrf.mxu0
    %2898 = vdwg.mxu0
    %2899 = vmatpush.bf16.msra.mxu0 %v1894
    %2900 = vmatpush.bf16.msra.mxu0 %v1887
    %2901 = vmatpush.bf16.msra.mxu0 %v1880
    %2902 = vmatpush.bf16.msra.mxu0 %v1873
    %2903 = vmatpush.bf16.msra.mxu0 %v1866
    %2904 = vmatpush.bf16.msra.mxu0 %v1859
    %2905 = vmatpush.bf16.msra.mxu0 %v1852
    %2906 = vmatpush.bf16.msra.mxu0 %v1845
    %2907 = vmatmul.bf16.gmra.mxu0 %v602
    %v2908 = vpop.f32.mrf.mxu0
    %v2909 = vadd.f32 %v940, %v2908
    %v2910 = vpop.f32.mrf.mxu0
    %2911 = vdwg.mxu0
    %2912 = vmatpush.bf16.msra.mxu0 %v1950
    %2913 = vmatpush.bf16.msra.mxu0 %v1943
    %2914 = vmatpush.bf16.msra.mxu0 %v1936
    %2915 = vmatpush.bf16.msra.mxu0 %v1929
    %2916 = vmatpush.bf16.msra.mxu0 %v1922
    %2917 = vmatpush.bf16.msra.mxu0 %v1915
    %2918 = vmatpush.bf16.msra.mxu0 %v1908
    %2919 = vmatpush.bf16.msra.mxu0 %v1901
    %2920 = vmatmul.bf16.gmra.mxu0 %v603
    %v2921 = vpop.f32.mrf.mxu0
    %v2922 = vadd.f32 %v2909, %v2921
    %v2923 = vpop.f32.mrf.mxu0
    %2924 = vdwg.mxu0
    %2925 = vmatpush.bf16.msra.mxu0 %v2006
    %2926 = vmatpush.bf16.msra.mxu0 %v1999
    %2927 = vmatpush.bf16.msra.mxu0 %v1992
    %2928 = vmatpush.bf16.msra.mxu0 %v1985
    %2929 = vmatpush.bf16.msra.mxu0 %v1978
    %2930 = vmatpush.bf16.msra.mxu0 %v1971
    %2931 = vmatpush.bf16.msra.mxu0 %v1964
    %2932 = vmatpush.bf16.msra.mxu0 %v1957
    %2933 = vmatmul.bf16.gmra.mxu0 %v604
    %v2934 = vpop.f32.mrf.mxu0
    %v2935 = vadd.f32 %v2922, %v2934
    %v2936 = vpop.f32.mrf.mxu0
    %2937 = vdwg.mxu0
    %2938 = vmatpush.bf16.msra.mxu0 %v2062
    %2939 = vmatpush.bf16.msra.mxu0 %v2055
    %2940 = vmatpush.bf16.msra.mxu0 %v2048
    %2941 = vmatpush.bf16.msra.mxu0 %v2041
    %2942 = vmatpush.bf16.msra.mxu0 %v2034
    %2943 = vmatpush.bf16.msra.mxu0 %v2027
    %2944 = vmatpush.bf16.msra.mxu0 %v2020
    %2945 = vmatpush.bf16.msra.mxu0 %v2013
    %2946 = vmatmul.bf16.gmra.mxu0 %v605
    %v2947 = vpop.f32.mrf.mxu0
    %v2948 = vadd.f32 %v2935, %v2947
    %v2949 = vpop.f32.mrf.mxu0
    %2950 = vdwg.mxu0
    %2951 = vmatpush.bf16.msra.mxu0 %v2118
    %2952 = vmatpush.bf16.msra.mxu0 %v2111
    %2953 = vmatpush.bf16.msra.mxu0 %v2104
    %2954 = vmatpush.bf16.msra.mxu0 %v2097
    %2955 = vmatpush.bf16.msra.mxu0 %v2090
    %2956 = vmatpush.bf16.msra.mxu0 %v2083
    %2957 = vmatpush.bf16.msra.mxu0 %v2076
    %2958 = vmatpush.bf16.msra.mxu0 %v2069
    %2959 = vmatmul.bf16.gmra.mxu0 %v606
    %v2960 = vpop.f32.mrf.mxu0
    %v2961 = vadd.f32 %v2948, %v2960
    %v2962 = vpop.f32.mrf.mxu0
    %2963 = vdwg.mxu0
    %2964 = vmatpush.bf16.msra.mxu0 0
    %2965 = vmatpush.bf16.msra.mxu0 0
    %2966 = vmatpush.bf16.msra.mxu0 0
    %2967 = vmatpush.bf16.msra.mxu0 0
    %2968 = vmatpush.bf16.msra.mxu0 0
    %2969 = vmatpush.bf16.msra.mxu0 0
    %2970 = vmatpush.bf16.msra.mxu0 0
    %2971 = vmatpush.bf16.msra.mxu0 %v2429
    %2972 = vmatmul.bf16.gmra.mxu0 %v2408
    %v2973 = vpop.f32.mrf.mxu0
    %v2974 = vadd.f32 %v2961, %v2973
    %v2975 = vpop.f32.mrf.mxu0
    %2976 = vdwg.mxu0
    %v2977 = vmax.f32 %v2506, 0.0
    %v2978 = vmax.f32 %v2584, 0.0
    %v2979 = vmax.f32 %v2662, 0.0
    %v2980 = vmax.f32 %v2740, 0.0
    %v2981 = vmax.f32 %v2818, 0.0
    %v2982 = vmax.f32 %v2896, 0.0
    %v2983 = vmax.f32 %v2974, 0.0
    %v2984 = vpack.c.bf16 %v2977, %v2977
    %v2985 = vpack.c.bf16 %v2978, %v2978
    %v2986 = vpack.c.bf16 %v2979, %v2979
    %v2987 = vpack.c.bf16 %v2980, %v2980
    %v2988 = vpack.c.bf16 %v2981, %v2981
    %v2989 = vpack.c.bf16 %v2982, %v2982
    %v2990 = vpack.c.bf16 %v2983, %v2983
    %v2991 = vld [vmem:[#allocation9] sm:$0xff]
    %v2992 = vld [vmem:[#allocation9 + $0x8] sm:$0xff]
    %v2993 = vld [vmem:[#allocation9 + $0x10] sm:$0xff]
    %v2994 = vld [vmem:[#allocation9 + $0x18] sm:$0xf]
    %v2995 = vld [vmem:[#allocation9 + $0x1c] sm:$0xff]
    %v2996 = vld [vmem:[#allocation9 + $0x24] sm:$0xff]
    %v2997 = vld [vmem:[#allocation9 + $0x2c] sm:$0xff]
    %v2998 = vld [vmem:[#allocation9 + $0x34] sm:$0xf]
    %v2999 = vld [vmem:[#allocation9 + $0x38] sm:$0xff]
    %v3000 = vld [vmem:[#allocation9 + $0x40] sm:$0xff]
    %v3001 = vld [vmem:[#allocation9 + $0x48] sm:$0xff]
    %v3002 = vld [vmem:[#allocation9 + $0x50] sm:$0xf]
    %v3003 = vld [vmem:[#allocation9 + $0x54] sm:$0xff]
    %v3004 = vld [vmem:[#allocation9 + $0x5c] sm:$0xff]
    %v3005 = vld [vmem:[#allocation9 + $0x64] sm:$0xff]
    %v3006 = vld [vmem:[#allocation9 + $0x6c] sm:$0xf]
    %v3007 = vld [vmem:[#allocation9 + $0x70] sm:$0xff]
    %v3008 = vld [vmem:[#allocation9 + $0x78] sm:$0xff]
    %v3009 = vld [vmem:[#allocation9 + $0x80] sm:$0xff]
    %v3010 = vld [vmem:[#allocation9 + $0x88] sm:$0xf]
    %v3011 = vld [vmem:[#allocation9 + $0x8c] sm:$0xff]
    %v3012 = vld [vmem:[#allocation9 + $0x94] sm:$0xff]
    %v3013 = vld [vmem:[#allocation9 + $0x9c] sm:$0xff]
    %v3014 = vld [vmem:[#allocation9 + $0xa4] sm:$0xf]
    %v3015 = vld [vmem:[#allocation9 + $0xa8] sm:$0xff]
    %v3016 = vld [vmem:[#allocation9 + $0xb0] sm:$0xff]
    %v3017 = vld [vmem:[#allocation9 + $0xb8] sm:$0xff]
    %v3018 = vld [vmem:[#allocation9 + $0xc0] sm:$0xf]
    %v3019 = vld [vmem:[#allocation9 + $0xc4] sm:$0xff]
    %v3020 = vld [vmem:[#allocation9 + $0xcc] sm:$0xff]
    %v3021 = vld [vmem:[#allocation9 + $0xd4] sm:$0xff]
    %v3022 = vld [vmem:[#allocation9 + $0xdc] sm:$0xf]
    %v3023 = vld [vmem:[#allocation9 + $0xe0] sm:$0xff]
    %v3024 = vld [vmem:[#allocation9 + $0xe8] sm:$0xff]
    %v3025 = vld [vmem:[#allocation9 + $0xf0] sm:$0xff]
    %v3026 = vld [vmem:[#allocation9 + $0xf8] sm:$0xf]
    %v3027 = vld [vmem:[#allocation9 + $0xfc] sm:$0xff]
    %v3028 = vld [vmem:[#allocation9 + $0x104] sm:$0xff]
    %v3029 = vld [vmem:[#allocation9 + $0x10c] sm:$0xff]
    %v3030 = vld [vmem:[#allocation9 + $0x114] sm:$0xf]
    %v3031 = vld [vmem:[#allocation9 + $0x118] sm:$0xff]
    %v3032 = vld [vmem:[#allocation9 + $0x120] sm:$0xff]
    %v3033 = vld [vmem:[#allocation9 + $0x128] sm:$0xff]
    %v3034 = vld [vmem:[#allocation9 + $0x130] sm:$0xf]
    %v3035 = vld [vmem:[#allocation9 + $0x134] sm:$0xff]
    %v3036 = vld [vmem:[#allocation9 + $0x13c] sm:$0xff]
    %v3037 = vld [vmem:[#allocation9 + $0x144] sm:$0xff]
    %v3038 = vld [vmem:[#allocation9 + $0x14c] sm:$0xf]
    %v3039 = vld [vmem:[#allocation9 + $0x150] sm:$0xff]
    %v3040 = vld [vmem:[#allocation9 + $0x158] sm:$0xff]
    %v3041 = vld [vmem:[#allocation9 + $0x160] sm:$0xff]
    %v3042 = vld [vmem:[#allocation9 + $0x168] sm:$0xf]
    %v3043 = vld [vmem:[#allocation9 + $0x16c] sm:$0xff]
    %v3044 = vld [vmem:[#allocation9 + $0x174] sm:$0xff]
    %v3045 = vld [vmem:[#allocation9 + $0x17c] sm:$0xff]
    %v3046 = vld [vmem:[#allocation9 + $0x184] sm:$0xf]
    %v3047 = vld [vmem:[#allocation9 + $0x188] sm:$0xff]
    %v3048 = vld [vmem:[#allocation9 + $0x190] sm:$0xff]
    %v3049 = vld [vmem:[#allocation9 + $0x198] sm:$0xff]
    %v3050 = vld [vmem:[#allocation9 + $0x1a0] sm:$0xf]
    %v3051 = vld [vmem:[#allocation9 + $0x1a4] sm:$0xff]
    %v3052 = vld [vmem:[#allocation9 + $0x1ac] sm:$0xff]
    %v3053 = vld [vmem:[#allocation9 + $0x1b4] sm:$0xff]
    %v3054 = vld [vmem:[#allocation9 + $0x1bc] sm:$0xf]
    %v3055 = vld [vmem:[#allocation9 + $0x1c0] sm:$0xff]
    %v3056 = vld [vmem:[#allocation9 + $0x1c8] sm:$0xff]
    %v3057 = vld [vmem:[#allocation9 + $0x1d0] sm:$0xff]
    %v3058 = vld [vmem:[#allocation9 + $0x1d8] sm:$0xf]
    %v3059 = vld [vmem:[#allocation9 + $0x1dc] sm:$0xff]
    %v3060 = vld [vmem:[#allocation9 + $0x1e4] sm:$0xff]
    %v3061 = vld [vmem:[#allocation9 + $0x1ec] sm:$0xff]
    %v3062 = vld [vmem:[#allocation9 + $0x1f4] sm:$0xf]
    %v3063 = vld [vmem:[#allocation9 + $0x1f8] sm:$0xff]
    %v3064 = vld [vmem:[#allocation9 + $0x200] sm:$0xff]
    %v3065 = vld [vmem:[#allocation9 + $0x208] sm:$0xff]
    %v3066 = vld [vmem:[#allocation9 + $0x210] sm:$0xf]
    %v3067 = vld [vmem:[#allocation9 + $0x214] sm:$0xff]
    %v3068 = vld [vmem:[#allocation9 + $0x21c] sm:$0xff]
    %v3069 = vld [vmem:[#allocation9 + $0x224] sm:$0xff]
    %v3070 = vld [vmem:[#allocation9 + $0x22c] sm:$0xf]
    %v3071 = vld [vmem:[#allocation9 + $0x230] sm:$0xff]
    %v3072 = vld [vmem:[#allocation9 + $0x238] sm:$0xff]
    %v3073 = vld [vmem:[#allocation9 + $0x240] sm:$0xff]
    %v3074 = vld [vmem:[#allocation9 + $0x248] sm:$0xf]
    %v3075 = vld [vmem:[#allocation9 + $0x24c] sm:$0xff]
    %v3076 = vld [vmem:[#allocation9 + $0x254] sm:$0xff]
    %v3077 = vld [vmem:[#allocation9 + $0x25c] sm:$0xff]
    %v3078 = vld [vmem:[#allocation9 + $0x264] sm:$0xf]
    %v3079 = vld [vmem:[#allocation9 + $0x268] sm:$0xff]
    %v3080 = vld [vmem:[#allocation9 + $0x270] sm:$0xff]
    %v3081 = vld [vmem:[#allocation9 + $0x278] sm:$0xff]
    %v3082 = vld [vmem:[#allocation9 + $0x280] sm:$0xf]
    %v3083 = vld [vmem:[#allocation9 + $0x284] sm:$0xff]
    %v3084 = vld [vmem:[#allocation9 + $0x28c] sm:$0xff]
    %v3085 = vld [vmem:[#allocation9 + $0x294] sm:$0xff]
    %v3086 = vld [vmem:[#allocation9 + $0x29c] sm:$0xf]
    %v3087 = vld [vmem:[#allocation9 + $0x2a0] sm:$0xff]
    %v3088 = vld [vmem:[#allocation9 + $0x2a8] sm:$0xff]
    %v3089 = vld [vmem:[#allocation9 + $0x2b0] sm:$0xff]
    %v3090 = vld [vmem:[#allocation9 + $0x2b8] sm:$0xf]
    %v3091 = vld [vmem:[#allocation9 + $0x2bc] sm:$0xff]
    %v3092 = vld [vmem:[#allocation9 + $0x2c4] sm:$0xff]
    %v3093 = vld [vmem:[#allocation9 + $0x2cc] sm:$0xff]
    %v3094 = vld [vmem:[#allocation9 + $0x2d4] sm:$0xf]
    %v3095 = vld [vmem:[#allocation9 + $0x2d8] sm:$0xff]
    %v3096 = vld [vmem:[#allocation9 + $0x2e0] sm:$0xff]
    %v3097 = vld [vmem:[#allocation9 + $0x2e8] sm:$0xff]
    %v3098 = vld [vmem:[#allocation9 + $0x2f0] sm:$0xf]
    %v3099 = vld [vmem:[#allocation9 + $0x2f4] sm:$0xff]
    %v3100 = vld [vmem:[#allocation9 + $0x2fc] sm:$0xff]
    %v3101 = vld [vmem:[#allocation9 + $0x304] sm:$0xff]
    %v3102 = vld [vmem:[#allocation9 + $0x30c] sm:$0xf]
    %v3103 = vld [vmem:[#allocation9 + $0x310] sm:$0xff]
    %v3104 = vld [vmem:[#allocation9 + $0x318] sm:$0xff]
    %v3105 = vld [vmem:[#allocation9 + $0x320] sm:$0xff]
    %v3106 = vld [vmem:[#allocation9 + $0x328] sm:$0xf]
    %v3107 = vld [vmem:[#allocation9 + $0x32c] sm:$0xff]
    %v3108 = vld [vmem:[#allocation9 + $0x334] sm:$0xff]
    %v3109 = vld [vmem:[#allocation9 + $0x33c] sm:$0xff]
    %v3110 = vld [vmem:[#allocation9 + $0x344] sm:$0xf]
    %v3111 = vld [vmem:[#allocation9 + $0x348] sm:$0xff]
    %v3112 = vld [vmem:[#allocation9 + $0x350] sm:$0xff]
    %v3113 = vld [vmem:[#allocation9 + $0x358] sm:$0xff]
    %v3114 = vld [vmem:[#allocation9 + $0x360] sm:$0xf]
    %v3115 = vld [vmem:[#allocation9 + $0x364] sm:$0xff]
    %v3116 = vld [vmem:[#allocation9 + $0x36c] sm:$0xff]
    %v3117 = vld [vmem:[#allocation9 + $0x374] sm:$0xff]
    %v3118 = vld [vmem:[#allocation9 + $0x37c] sm:$0xf]
    %v3119 = vld [vmem:[#allocation9 + $0x380] sm:$0xff]
    %v3120 = vld [vmem:[#allocation9 + $0x388] sm:$0xff]
    %v3121 = vld [vmem:[#allocation9 + $0x390] sm:$0xff]
    %v3122 = vld [vmem:[#allocation9 + $0x398] sm:$0xf]
    %v3123 = vld [vmem:[#allocation9 + $0x39c] sm:$0xff]
    %v3124 = vld [vmem:[#allocation9 + $0x3a4] sm:$0xff]
    %v3125 = vld [vmem:[#allocation9 + $0x3ac] sm:$0xff]
    %v3126 = vld [vmem:[#allocation9 + $0x3b4] sm:$0xf]
    %v3127 = vld [vmem:[#allocation9 + $0x3b8] sm:$0xff]
    %v3128 = vld [vmem:[#allocation9 + $0x3c0] sm:$0xff]
    %v3129 = vld [vmem:[#allocation9 + $0x3c8] sm:$0xff]
    %v3130 = vld [vmem:[#allocation9 + $0x3d0] sm:$0xf]
    %v3131 = vld [vmem:[#allocation9 + $0x3d4] sm:$0xff]
    %v3132 = vld [vmem:[#allocation9 + $0x3dc] sm:$0xff]
    %v3133 = vld [vmem:[#allocation9 + $0x3e4] sm:$0xff]
    %v3134 = vld [vmem:[#allocation9 + $0x3ec] sm:$0xf]
    %v3135 = vld [vmem:[#allocation9 + $0x3f0] sm:$0xff]
    %v3136 = vld [vmem:[#allocation9 + $0x3f8] sm:$0xff]
    %v3137 = vld [vmem:[#allocation9 + $0x400] sm:$0xff]
    %v3138 = vld [vmem:[#allocation9 + $0x408] sm:$0xf]
    %v3139 = vld [vmem:[#allocation9 + $0x40c] sm:$0xff]
    %v3140 = vld [vmem:[#allocation9 + $0x414] sm:$0xff]
    %v3141 = vld [vmem:[#allocation9 + $0x41c] sm:$0xff]
    %v3142 = vld [vmem:[#allocation9 + $0x424] sm:$0xf]
    %v3143 = vld [vmem:[#allocation9 + $0x428] sm:$0xff]
    %v3144 = vld [vmem:[#allocation9 + $0x430] sm:$0xff]
    %v3145 = vld [vmem:[#allocation9 + $0x438] sm:$0xff]
    %v3146 = vld [vmem:[#allocation9 + $0x440] sm:$0xf]
    %v3147 = vld [vmem:[#allocation9 + $0x444] sm:$0xff]
    %v3148 = vld [vmem:[#allocation9 + $0x44c] sm:$0xff]
    %v3149 = vld [vmem:[#allocation9 + $0x454] sm:$0xff]
    %v3150 = vld [vmem:[#allocation9 + $0x45c] sm:$0xf]
    %v3151 = vld [vmem:[#allocation9 + $0x460] sm:$0xff]
    %v3152 = vld [vmem:[#allocation9 + $0x468] sm:$0xff]
    %v3153 = vld [vmem:[#allocation9 + $0x470] sm:$0xff]
    %v3154 = vld [vmem:[#allocation9 + $0x478] sm:$0xf]
    %v3155 = vld [vmem:[#allocation9 + $0x47c] sm:$0xff]
    %v3156 = vld [vmem:[#allocation9 + $0x484] sm:$0xff]
    %v3157 = vld [vmem:[#allocation9 + $0x48c] sm:$0xff]
    %v3158 = vld [vmem:[#allocation9 + $0x494] sm:$0xf]
    %v3159 = vld [vmem:[#allocation9 + $0x498] sm:$0xff]
    %v3160 = vld [vmem:[#allocation9 + $0x4a0] sm:$0xff]
    %v3161 = vld [vmem:[#allocation9 + $0x4a8] sm:$0xff]
    %v3162 = vld [vmem:[#allocation9 + $0x4b0] sm:$0xf]
    %v3163 = vld [vmem:[#allocation9 + $0x4b4] sm:$0xff]
    %v3164 = vld [vmem:[#allocation9 + $0x4bc] sm:$0xff]
    %v3165 = vld [vmem:[#allocation9 + $0x4c4] sm:$0xff]
    %v3166 = vld [vmem:[#allocation9 + $0x4cc] sm:$0xf]
    %v3167 = vld [vmem:[#allocation9 + $0x4d0] sm:$0xff]
    %v3168 = vld [vmem:[#allocation9 + $0x4d8] sm:$0xff]
    %v3169 = vld [vmem:[#allocation9 + $0x4e0] sm:$0xff]
    %v3170 = vld [vmem:[#allocation9 + $0x4e8] sm:$0xf]
    %v3171 = vld [vmem:[#allocation9 + $0x4ec] sm:$0xff]
    %v3172 = vld [vmem:[#allocation9 + $0x4f4] sm:$0xff]
    %v3173 = vld [vmem:[#allocation9 + $0x4fc] sm:$0xff]
    %v3174 = vld [vmem:[#allocation9 + $0x504] sm:$0xf]
    %v3175 = vld [vmem:[#allocation9 + $0x508] sm:$0xff]
    %v3176 = vld [vmem:[#allocation9 + $0x510] sm:$0xff]
    %v3177 = vld [vmem:[#allocation9 + $0x518] sm:$0xff]
    %v3178 = vld [vmem:[#allocation9 + $0x520] sm:$0xf]
    %v3179 = vld [vmem:[#allocation9 + $0x524] sm:$0xff]
    %v3180 = vld [vmem:[#allocation9 + $0x52c] sm:$0xff]
    %v3181 = vld [vmem:[#allocation9 + $0x534] sm:$0xff]
    %v3182 = vld [vmem:[#allocation9 + $0x53c] sm:$0xf]
    %v3183 = vld [vmem:[#allocation9 + $0x540] sm:$0xff]
    %v3184 = vld [vmem:[#allocation9 + $0x548] sm:$0xff]
    %v3185 = vld [vmem:[#allocation9 + $0x550] sm:$0xff]
    %v3186 = vld [vmem:[#allocation9 + $0x558] sm:$0xf]
    %v3187 = vld [vmem:[#allocation9 + $0x55c] sm:$0xff]
    %v3188 = vld [vmem:[#allocation9 + $0x564] sm:$0xff]
    %v3189 = vld [vmem:[#allocation9 + $0x56c] sm:$0xff]
    %v3190 = vld [vmem:[#allocation9 + $0x574] sm:$0xf]
    %v3191 = vld [vmem:[#allocation9 + $0x578] sm:$0xff]
    %v3192 = vld [vmem:[#allocation9 + $0x580] sm:$0xff]
    %v3193 = vld [vmem:[#allocation9 + $0x588] sm:$0xff]
    %v3194 = vld [vmem:[#allocation9 + $0x590] sm:$0xf]
    %v3195 = vld [vmem:[#allocation9 + $0x594] sm:$0xff]
    %v3196 = vld [vmem:[#allocation9 + $0x59c] sm:$0xff]
    %v3197 = vld [vmem:[#allocation9 + $0x5a4] sm:$0xff]
    %v3198 = vld [vmem:[#allocation9 + $0x5ac] sm:$0xf]
    %v3199 = vld [vmem:[#allocation9 + $0x5b0] sm:$0xff]
    %v3200 = vld [vmem:[#allocation9 + $0x5b8] sm:$0xff]
    %v3201 = vld [vmem:[#allocation9 + $0x5c0] sm:$0xff]
    %v3202 = vld [vmem:[#allocation9 + $0x5c8] sm:$0xf]
    %v3203 = vld [vmem:[#allocation9 + $0x5cc] sm:$0xff]
    %v3204 = vld [vmem:[#allocation9 + $0x5d4] sm:$0xff]
    %v3205 = vld [vmem:[#allocation9 + $0x5dc] sm:$0xff]
    %v3206 = vld [vmem:[#allocation9 + $0x5e4] sm:$0xf]
    %v3207 = vld [vmem:[#allocation9 + $0x5e8] sm:$0xff]
    %v3208 = vld [vmem:[#allocation9 + $0x5f0] sm:$0xff]
    %v3209 = vld [vmem:[#allocation9 + $0x5f8] sm:$0xff]
    %v3210 = vld [vmem:[#allocation9 + $0x600] sm:$0xf]
    %v3211 = vld [vmem:[#allocation9 + $0x604] sm:$0xff]
    %v3212 = vld [vmem:[#allocation9 + $0x60c] sm:$0xff]
    %v3213 = vld [vmem:[#allocation9 + $0x614] sm:$0xff]
    %v3214 = vld [vmem:[#allocation9 + $0x61c] sm:$0xf]
    %v3215 = vld [vmem:[#allocation9 + $0x620] sm:$0xff]
    %v3216 = vld [vmem:[#allocation9 + $0x628] sm:$0xff]
    %v3217 = vld [vmem:[#allocation9 + $0x630] sm:$0xff]
    %v3218 = vld [vmem:[#allocation9 + $0x638] sm:$0xf]
    %v3219 = vld [vmem:[#allocation9 + $0x63c] sm:$0xff]
    %v3220 = vld [vmem:[#allocation9 + $0x644] sm:$0xff]
    %v3221 = vld [vmem:[#allocation9 + $0x64c] sm:$0xff]
    %v3222 = vld [vmem:[#allocation9 + $0x654] sm:$0xf]
    %v3223 = vld [vmem:[#allocation9 + $0x658] sm:$0xff]
    %v3224 = vld [vmem:[#allocation9 + $0x660] sm:$0xff]
    %v3225 = vld [vmem:[#allocation9 + $0x668] sm:$0xff]
    %v3226 = vld [vmem:[#allocation9 + $0x670] sm:$0xf]
    %v3227 = vld [vmem:[#allocation9 + $0x674] sm:$0xff]
    %v3228 = vld [vmem:[#allocation9 + $0x67c] sm:$0xff]
    %v3229 = vld [vmem:[#allocation9 + $0x684] sm:$0xff]
    %v3230 = vld [vmem:[#allocation9 + $0x68c] sm:$0xf]
    %v3231 = vld [vmem:[#allocation9 + $0x690] sm:$0xff]
    %v3232 = vld [vmem:[#allocation9 + $0x698] sm:$0xff]
    %v3233 = vld [vmem:[#allocation9 + $0x6a0] sm:$0xff]
    %v3234 = vld [vmem:[#allocation9 + $0x6a8] sm:$0xf]
    %v3235 = vld [vmem:[#allocation9 + $0x6ac] sm:$0xff]
    %v3236 = vld [vmem:[#allocation9 + $0x6b4] sm:$0xff]
    %v3237 = vld [vmem:[#allocation9 + $0x6bc] sm:$0xff]
    %v3238 = vld [vmem:[#allocation9 + $0x6c4] sm:$0xf]
    %v3239 = vld [vmem:[#allocation9 + $0x6c8] sm:$0xff]
    %v3240 = vld [vmem:[#allocation9 + $0x6d0] sm:$0xff]
    %v3241 = vld [vmem:[#allocation9 + $0x6d8] sm:$0xff]
    %v3242 = vld [vmem:[#allocation9 + $0x6e0] sm:$0xf]
    %v3243 = vld [vmem:[#allocation9 + $0x6e4] sm:$0xff]
    %v3244 = vld [vmem:[#allocation9 + $0x6ec] sm:$0xff]
    %v3245 = vld [vmem:[#allocation9 + $0x6f4] sm:$0xff]
    %v3246 = vld [vmem:[#allocation9 + $0x6fc] sm:$0xf]
    %v3247 = vld [vmem:[#allocation9 + $0x700] sm:$0xff]
    %v3248 = vld [vmem:[#allocation9 + $0x708] sm:$0xff]
    %v3249 = vld [vmem:[#allocation9 + $0x710] sm:$0xff]
    %v3250 = vld [vmem:[#allocation9 + $0x718] sm:$0xf]
    %v3251 = vld [vmem:[#allocation9 + $0x71c] sm:$0xff]
    %v3252 = vld [vmem:[#allocation9 + $0x724] sm:$0xff]
    %v3253 = vld [vmem:[#allocation9 + $0x72c] sm:$0xff]
    %v3254 = vld [vmem:[#allocation9 + $0x734] sm:$0xf]
    %v3255 = vld [vmem:[#allocation9 + $0x738] sm:$0xff]
    %v3256 = vld [vmem:[#allocation9 + $0x740] sm:$0xff]
    %v3257 = vld [vmem:[#allocation9 + $0x748] sm:$0xff]
    %v3258 = vld [vmem:[#allocation9 + $0x750] sm:$0xf]
    %v3259 = vld [vmem:[#allocation9 + $0x754] sm:$0xff]
    %v3260 = vld [vmem:[#allocation9 + $0x75c] sm:$0xff]
    %v3261 = vld [vmem:[#allocation9 + $0x764] sm:$0xff]
    %v3262 = vld [vmem:[#allocation9 + $0x76c] sm:$0xf]
    %v3263 = vld [vmem:[#allocation9 + $0x770] sm:$0xff]
    %v3264 = vld [vmem:[#allocation9 + $0x778] sm:$0xff]
    %v3265 = vld [vmem:[#allocation9 + $0x780] sm:$0xff]
    %v3266 = vld [vmem:[#allocation9 + $0x788] sm:$0xf]
    %v3267 = vld [vmem:[#allocation9 + $0x78c] sm:$0xff]
    %v3268 = vld [vmem:[#allocation9 + $0x794] sm:$0xff]
    %v3269 = vld [vmem:[#allocation9 + $0x79c] sm:$0xff]
    %v3270 = vld [vmem:[#allocation9 + $0x7a4] sm:$0xf]
    %v3271 = vld [vmem:[#allocation9 + $0x7a8] sm:$0xff]
    %v3272 = vld [vmem:[#allocation9 + $0x7b0] sm:$0xff]
    %v3273 = vld [vmem:[#allocation9 + $0x7b8] sm:$0xff]
    %v3274 = vld [vmem:[#allocation9 + $0x7c0] sm:$0xf]
    %v3275 = vld [vmem:[#allocation9 + $0x7c4] sm:$0xff]
    %v3276 = vld [vmem:[#allocation9 + $0x7cc] sm:$0xff]
    %v3277 = vld [vmem:[#allocation9 + $0x7d4] sm:$0xff]
    %v3278 = vld [vmem:[#allocation9 + $0x7dc] sm:$0xf]
    %v3279 = vld [vmem:[#allocation9 + $0x7e0] sm:$0xff]
    %v3280 = vld [vmem:[#allocation9 + $0x7e8] sm:$0xff]
    %v3281 = vld [vmem:[#allocation9 + $0x7f0] sm:$0xff]
    %v3282 = vld [vmem:[#allocation9 + $0x7f8] sm:$0xf]
    %v3283 = vld [vmem:[#allocation9 + $0x7fc] sm:$0xff]
    %v3284 = vld [vmem:[#allocation9 + $0x804] sm:$0xff]
    %v3285 = vld [vmem:[#allocation9 + $0x80c] sm:$0xff]
    %v3286 = vld [vmem:[#allocation9 + $0x814] sm:$0xf]
    %v3287 = vld [vmem:[#allocation9 + $0x818] sm:$0xff]
    %v3288 = vld [vmem:[#allocation9 + $0x820] sm:$0xff]
    %v3289 = vld [vmem:[#allocation9 + $0x828] sm:$0xff]
    %v3290 = vld [vmem:[#allocation9 + $0x830] sm:$0xf]
    %v3291 = vld [vmem:[#allocation9 + $0x834] sm:$0xff]
    %v3292 = vld [vmem:[#allocation9 + $0x83c] sm:$0xff]
    %v3293 = vld [vmem:[#allocation9 + $0x844] sm:$0xff]
    %v3294 = vld [vmem:[#allocation9 + $0x84c] sm:$0xf]
    %v3295 = vld [vmem:[#allocation9 + $0x850] sm:$0xff]
    %v3296 = vld [vmem:[#allocation9 + $0x858] sm:$0xff]
    %v3297 = vld [vmem:[#allocation9 + $0x860] sm:$0xff]
    %v3298 = vld [vmem:[#allocation9 + $0x868] sm:$0xf]
    %v3299 = vld [vmem:[#allocation9 + $0x86c] sm:$0xff]
    %v3300 = vld [vmem:[#allocation9 + $0x874] sm:$0xff]
    %v3301 = vld [vmem:[#allocation9 + $0x87c] sm:$0xff]
    %v3302 = vld [vmem:[#allocation9 + $0x884] sm:$0xf]
    %v3303 = vld [vmem:[#allocation9 + $0x888] sm:$0xff]
    %v3304 = vld [vmem:[#allocation9 + $0x890] sm:$0xff]
    %v3305 = vld [vmem:[#allocation9 + $0x898] sm:$0xff]
    %v3306 = vld [vmem:[#allocation9 + $0x8a0] sm:$0xf]
    %v3307 = vld [vmem:[#allocation9 + $0x8a4] sm:$0xff]
    %v3308 = vld [vmem:[#allocation9 + $0x8ac] sm:$0xff]
    %v3309 = vld [vmem:[#allocation9 + $0x8b4] sm:$0xff]
    %v3310 = vld [vmem:[#allocation9 + $0x8bc] sm:$0xf]
    %v3311 = vld [vmem:[#allocation9 + $0x8c0] sm:$0xff]
    %v3312 = vld [vmem:[#allocation9 + $0x8c8] sm:$0xff]
    %v3313 = vld [vmem:[#allocation9 + $0x8d0] sm:$0xff]
    %v3314 = vld [vmem:[#allocation9 + $0x8d8] sm:$0xf]
    %v3315 = vld [vmem:[#allocation9 + $0x8dc] sm:$0xff]
    %v3316 = vld [vmem:[#allocation9 + $0x8e4] sm:$0xff]
    %v3317 = vld [vmem:[#allocation9 + $0x8ec] sm:$0xff]
    %v3318 = vld [vmem:[#allocation9 + $0x8f4] sm:$0xf]
    %v3319 = vld [vmem:[#allocation9 + $0x8f8] sm:$0xff]
    %v3320 = vld [vmem:[#allocation9 + $0x900] sm:$0xff]
    %v3321 = vld [vmem:[#allocation9 + $0x908] sm:$0xff]
    %v3322 = vld [vmem:[#allocation9 + $0x910] sm:$0xf]
    %v3323 = vld [vmem:[#allocation9 + $0x914] sm:$0xff]
    %v3324 = vld [vmem:[#allocation9 + $0x91c] sm:$0xff]
    %v3325 = vld [vmem:[#allocation9 + $0x924] sm:$0xff]
    %v3326 = vld [vmem:[#allocation9 + $0x92c] sm:$0xf]
    %v3327 = vld [vmem:[#allocation9 + $0x930] sm:$0xff]
    %v3328 = vld [vmem:[#allocation9 + $0x938] sm:$0xff]
    %v3329 = vld [vmem:[#allocation9 + $0x940] sm:$0xff]
    %v3330 = vld [vmem:[#allocation9 + $0x948] sm:$0xf]
    %v3331 = vld [vmem:[#allocation9 + $0x94c] sm:$0xff]
    %v3332 = vld [vmem:[#allocation9 + $0x954] sm:$0xff]
    %v3333 = vld [vmem:[#allocation9 + $0x95c] sm:$0xff]
    %v3334 = vld [vmem:[#allocation9 + $0x964] sm:$0xf]
    %v3335 = vld [vmem:[#allocation9 + $0x968] sm:$0xff]
    %v3336 = vld [vmem:[#allocation9 + $0x970] sm:$0xff]
    %v3337 = vld [vmem:[#allocation9 + $0x978] sm:$0xff]
    %v3338 = vld [vmem:[#allocation9 + $0x980] sm:$0xf]
    %v3339 = vld [vmem:[#allocation9 + $0x984] sm:$0xff]
    %v3340 = vld [vmem:[#allocation9 + $0x98c] sm:$0xff]
    %v3341 = vld [vmem:[#allocation9 + $0x994] sm:$0xff]
    %v3342 = vld [vmem:[#allocation9 + $0x99c] sm:$0xf]
    %v3343 = vld [vmem:[#allocation9 + $0x9a0] sm:$0xff]
    %v3344 = vld [vmem:[#allocation9 + $0x9a8] sm:$0xff]
    %v3345 = vld [vmem:[#allocation9 + $0x9b0] sm:$0xff]
    %v3346 = vld [vmem:[#allocation9 + $0x9b8] sm:$0xf]
    %v3347 = vld [vmem:[#allocation9 + $0x9bc] sm:$0xff]
    %v3348 = vld [vmem:[#allocation9 + $0x9c4] sm:$0xff]
    %v3349 = vld [vmem:[#allocation9 + $0x9cc] sm:$0xff]
    %v3350 = vld [vmem:[#allocation9 + $0x9d4] sm:$0xf]
    %v3351 = vld [vmem:[#allocation9 + $0x9d8] sm:$0xff]
    %v3352 = vld [vmem:[#allocation9 + $0x9e0] sm:$0xff]
    %v3353 = vld [vmem:[#allocation9 + $0x9e8] sm:$0xff]
    %v3354 = vld [vmem:[#allocation9 + $0x9f0] sm:$0xf]
    %v3355 = vld [vmem:[#allocation9 + $0x9f4] sm:$0xff]
    %v3356 = vld [vmem:[#allocation9 + $0x9fc] sm:$0xff]
    %v3357 = vld [vmem:[#allocation9 + $0xa04] sm:$0xff]
    %v3358 = vld [vmem:[#allocation9 + $0xa0c] sm:$0xf]
    %v3359 = vld [vmem:[#allocation9 + $0xa10] sm:$0xff]
    %v3360 = vld [vmem:[#allocation9 + $0xa18] sm:$0xff]
    %v3361 = vld [vmem:[#allocation9 + $0xa20] sm:$0xff]
    %v3362 = vld [vmem:[#allocation9 + $0xa28] sm:$0xf]
    %v3363 = vld [vmem:[#allocation9 + $0xa2c] sm:$0xff]
    %v3364 = vld [vmem:[#allocation9 + $0xa34] sm:$0xff]
    %v3365 = vld [vmem:[#allocation9 + $0xa3c] sm:$0xff]
    %v3366 = vld [vmem:[#allocation9 + $0xa44] sm:$0xf]
    %v3367 = vld [vmem:[#allocation9 + $0xa48] sm:$0xff]
    %v3368 = vld [vmem:[#allocation9 + $0xa50] sm:$0xff]
    %v3369 = vld [vmem:[#allocation9 + $0xa58] sm:$0xff]
    %v3370 = vld [vmem:[#allocation9 + $0xa60] sm:$0xf]
    %v3371 = vld [vmem:[#allocation9 + $0xa64] sm:$0xff]
    %v3372 = vld [vmem:[#allocation9 + $0xa6c] sm:$0xff]
    %v3373 = vld [vmem:[#allocation9 + $0xa74] sm:$0xff]
    %v3374 = vld [vmem:[#allocation9 + $0xa7c] sm:$0xf]
    %v3375 = vld [vmem:[#allocation9 + $0xa80] sm:$0xff]
    %v3376 = vld [vmem:[#allocation9 + $0xa88] sm:$0xff]
    %v3377 = vld [vmem:[#allocation9 + $0xa90] sm:$0xff]
    %v3378 = vld [vmem:[#allocation9 + $0xa98] sm:$0xf]
    %v3379 = vld [vmem:[#allocation9 + $0xa9c] sm:$0xff]
    %v3380 = vld [vmem:[#allocation9 + $0xaa4] sm:$0xff]
    %v3381 = vld [vmem:[#allocation9 + $0xaac] sm:$0xff]
    %v3382 = vld [vmem:[#allocation9 + $0xab4] sm:$0xf]
    %v3383 = vld [vmem:[#allocation10] sm:$0x7f]
    %v3385 = vperm.slane %v3383, 0
    %v3386 = vperm.slane %v3383, 1
    %v3387 = vperm.slane %v3383, 2
    %v3388 = vperm.slane %v3383, 3
    %v3389 = vperm.slane %v3383, 4
    %v3390 = vperm.slane %v3383, 5
    %v3391 = vperm.slane %v3383, 6
    %v3791 = vunpack.c.l.b16 %v2991
    %v3792 = vunpack.c.h.b16 %v2991
    %v3793 = vunpack.c.l.b16 %v2992
    %v3794 = vunpack.c.h.b16 %v2992
    %v3795 = vunpack.c.l.b16 %v2993
    %v3796 = vunpack.c.h.b16 %v2993
    %v3797 = vunpack.c.l.b16 %v2994
    %v3798 = vunpack.c.l.b16 %v2995
    %v3799 = vunpack.c.h.b16 %v2995
    %v3800 = vunpack.c.l.b16 %v2996
    %v3801 = vunpack.c.h.b16 %v2996
    %v3802 = vunpack.c.l.b16 %v2997
    %v3803 = vunpack.c.h.b16 %v2997
    %v3804 = vunpack.c.l.b16 %v2998
    %v3805 = vunpack.c.l.b16 %v2999
    %v3806 = vunpack.c.h.b16 %v2999
    %v3807 = vunpack.c.l.b16 %v3000
    %v3808 = vunpack.c.h.b16 %v3000
    %v3809 = vunpack.c.l.b16 %v3001
    %v3810 = vunpack.c.h.b16 %v3001
    %v3811 = vunpack.c.l.b16 %v3002
    %v3812 = vunpack.c.l.b16 %v3003
    %v3813 = vunpack.c.h.b16 %v3003
    %v3814 = vunpack.c.l.b16 %v3004
    %v3815 = vunpack.c.h.b16 %v3004
    %v3816 = vunpack.c.l.b16 %v3005
    %v3817 = vunpack.c.h.b16 %v3005
    %v3818 = vunpack.c.l.b16 %v3006
    %v3819 = vunpack.c.l.b16 %v3007
    %v3820 = vunpack.c.h.b16 %v3007
    %v3821 = vunpack.c.l.b16 %v3008
    %v3822 = vunpack.c.h.b16 %v3008
    %v3823 = vunpack.c.l.b16 %v3009
    %v3824 = vunpack.c.h.b16 %v3009
    %v3825 = vunpack.c.l.b16 %v3010
    %v3826 = vunpack.c.l.b16 %v3011
    %v3827 = vunpack.c.h.b16 %v3011
    %v3828 = vunpack.c.l.b16 %v3012
    %v3829 = vunpack.c.h.b16 %v3012
    %v3830 = vunpack.c.l.b16 %v3013
    %v3831 = vunpack.c.h.b16 %v3013
    %v3832 = vunpack.c.l.b16 %v3014
    %v3833 = vunpack.c.l.b16 %v3015
    %v3834 = vunpack.c.h.b16 %v3015
    %v3835 = vunpack.c.l.b16 %v3016
    %v3836 = vunpack.c.h.b16 %v3016
    %v3837 = vunpack.c.l.b16 %v3017
    %v3838 = vunpack.c.h.b16 %v3017
    %v3839 = vunpack.c.l.b16 %v3018
    %v3840 = vunpack.c.l.b16 %v3019
    %v3841 = vunpack.c.h.b16 %v3019
    %v3842 = vunpack.c.l.b16 %v3020
    %v3843 = vunpack.c.h.b16 %v3020
    %v3844 = vunpack.c.l.b16 %v3021
    %v3845 = vunpack.c.h.b16 %v3021
    %v3846 = vunpack.c.l.b16 %v3022
    %v3847 = vunpack.c.l.b16 %v3023
    %v3848 = vunpack.c.h.b16 %v3023
    %v3849 = vunpack.c.l.b16 %v3024
    %v3850 = vunpack.c.h.b16 %v3024
    %v3851 = vunpack.c.l.b16 %v3025
    %v3852 = vunpack.c.h.b16 %v3025
    %v3853 = vunpack.c.l.b16 %v3026
    %v3854 = vunpack.c.l.b16 %v3027
    %v3855 = vunpack.c.h.b16 %v3027
    %v3856 = vunpack.c.l.b16 %v3028
    %v3857 = vunpack.c.h.b16 %v3028
    %v3858 = vunpack.c.l.b16 %v3029
    %v3859 = vunpack.c.h.b16 %v3029
    %v3860 = vunpack.c.l.b16 %v3030
    %v3861 = vunpack.c.l.b16 %v3031
    %v3862 = vunpack.c.h.b16 %v3031
    %v3863 = vunpack.c.l.b16 %v3032
    %v3864 = vunpack.c.h.b16 %v3032
    %v3865 = vunpack.c.l.b16 %v3033
    %v3866 = vunpack.c.h.b16 %v3033
    %v3867 = vunpack.c.l.b16 %v3034
    %v3868 = vunpack.c.l.b16 %v3035
    %v3869 = vunpack.c.h.b16 %v3035
    %v3870 = vunpack.c.l.b16 %v3036
    %v3871 = vunpack.c.h.b16 %v3036
    %v3872 = vunpack.c.l.b16 %v3037
    %v3873 = vunpack.c.h.b16 %v3037
    %v3874 = vunpack.c.l.b16 %v3038
    %v3875 = vunpack.c.l.b16 %v3039
    %v3876 = vunpack.c.h.b16 %v3039
    %v3877 = vunpack.c.l.b16 %v3040
    %v3878 = vunpack.c.h.b16 %v3040
    %v3879 = vunpack.c.l.b16 %v3041
    %v3880 = vunpack.c.h.b16 %v3041
    %v3881 = vunpack.c.l.b16 %v3042
    %v3882 = vunpack.c.l.b16 %v3043
    %v3883 = vunpack.c.h.b16 %v3043
    %v3884 = vunpack.c.l.b16 %v3044
    %v3885 = vunpack.c.h.b16 %v3044
    %v3886 = vunpack.c.l.b16 %v3045
    %v3887 = vunpack.c.h.b16 %v3045
    %v3888 = vunpack.c.l.b16 %v3046
    %v3889 = vunpack.c.l.b16 %v3047
    %v3890 = vunpack.c.h.b16 %v3047
    %v3891 = vunpack.c.l.b16 %v3048
    %v3892 = vunpack.c.h.b16 %v3048
    %v3893 = vunpack.c.l.b16 %v3049
    %v3894 = vunpack.c.h.b16 %v3049
    %v3895 = vunpack.c.l.b16 %v3050
    %v3896 = vunpack.c.l.b16 %v3051
    %v3897 = vunpack.c.h.b16 %v3051
    %v3898 = vunpack.c.l.b16 %v3052
    %v3899 = vunpack.c.h.b16 %v3052
    %v3900 = vunpack.c.l.b16 %v3053
    %v3901 = vunpack.c.h.b16 %v3053
    %v3902 = vunpack.c.l.b16 %v3054
    %v3903 = vunpack.c.l.b16 %v3055
    %v3904 = vunpack.c.h.b16 %v3055
    %v3905 = vunpack.c.l.b16 %v3056
    %v3906 = vunpack.c.h.b16 %v3056
    %v3907 = vunpack.c.l.b16 %v3057
    %v3908 = vunpack.c.h.b16 %v3057
    %v3909 = vunpack.c.l.b16 %v3058
    %v3910 = vunpack.c.l.b16 %v3059
    %v3911 = vunpack.c.h.b16 %v3059
    %v3912 = vunpack.c.l.b16 %v3060
    %v3913 = vunpack.c.h.b16 %v3060
    %v3914 = vunpack.c.l.b16 %v3061
    %v3915 = vunpack.c.h.b16 %v3061
    %v3916 = vunpack.c.l.b16 %v3062
    %v3917 = vunpack.c.l.b16 %v3063
    %v3918 = vunpack.c.h.b16 %v3063
    %v3919 = vunpack.c.l.b16 %v3064
    %v3920 = vunpack.c.h.b16 %v3064
    %v3921 = vunpack.c.l.b16 %v3065
    %v3922 = vunpack.c.h.b16 %v3065
    %v3923 = vunpack.c.l.b16 %v3066
    %v3924 = vunpack.c.l.b16 %v3067
    %v3925 = vunpack.c.h.b16 %v3067
    %v3926 = vunpack.c.l.b16 %v3068
    %v3927 = vunpack.c.h.b16 %v3068
    %v3928 = vunpack.c.l.b16 %v3069
    %v3929 = vunpack.c.h.b16 %v3069
    %v3930 = vunpack.c.l.b16 %v3070
    %v3931 = vunpack.c.l.b16 %v3071
    %v3932 = vunpack.c.h.b16 %v3071
    %v3933 = vunpack.c.l.b16 %v3072
    %v3934 = vunpack.c.h.b16 %v3072
    %v3935 = vunpack.c.l.b16 %v3073
    %v3936 = vunpack.c.h.b16 %v3073
    %v3937 = vunpack.c.l.b16 %v3074
    %v3938 = vunpack.c.l.b16 %v3075
    %v3939 = vunpack.c.h.b16 %v3075
    %v3940 = vunpack.c.l.b16 %v3076
    %v3941 = vunpack.c.h.b16 %v3076
    %v3942 = vunpack.c.l.b16 %v3077
    %v3943 = vunpack.c.h.b16 %v3077
    %v3944 = vunpack.c.l.b16 %v3078
    %v3945 = vunpack.c.l.b16 %v3079
    %v3946 = vunpack.c.h.b16 %v3079
    %v3947 = vunpack.c.l.b16 %v3080
    %v3948 = vunpack.c.h.b16 %v3080
    %v3949 = vunpack.c.l.b16 %v3081
    %v3950 = vunpack.c.h.b16 %v3081
    %v3951 = vunpack.c.l.b16 %v3082
    %v3952 = vunpack.c.l.b16 %v3083
    %v3953 = vunpack.c.h.b16 %v3083
    %v3954 = vunpack.c.l.b16 %v3084
    %v3955 = vunpack.c.h.b16 %v3084
    %v3956 = vunpack.c.l.b16 %v3085
    %v3957 = vunpack.c.h.b16 %v3085
    %v3958 = vunpack.c.l.b16 %v3086
    %v3959 = vunpack.c.l.b16 %v3087
    %v3960 = vunpack.c.h.b16 %v3087
    %v3961 = vunpack.c.l.b16 %v3088
    %v3962 = vunpack.c.h.b16 %v3088
    %v3963 = vunpack.c.l.b16 %v3089
    %v3964 = vunpack.c.h.b16 %v3089
    %v3965 = vunpack.c.l.b16 %v3090
    %v3966 = vunpack.c.l.b16 %v3091
    %v3967 = vunpack.c.h.b16 %v3091
    %v3968 = vunpack.c.l.b16 %v3092
    %v3969 = vunpack.c.h.b16 %v3092
    %v3970 = vunpack.c.l.b16 %v3093
    %v3971 = vunpack.c.h.b16 %v3093
    %v3972 = vunpack.c.l.b16 %v3094
    %v3973 = vunpack.c.l.b16 %v3095
    %v3974 = vunpack.c.h.b16 %v3095
    %v3975 = vunpack.c.l.b16 %v3096
    %v3976 = vunpack.c.h.b16 %v3096
    %v3977 = vunpack.c.l.b16 %v3097
    %v3978 = vunpack.c.h.b16 %v3097
    %v3979 = vunpack.c.l.b16 %v3098
    %v3980 = vunpack.c.l.b16 %v3099
    %v3981 = vunpack.c.h.b16 %v3099
    %v3982 = vunpack.c.l.b16 %v3100
    %v3983 = vunpack.c.h.b16 %v3100
    %v3984 = vunpack.c.l.b16 %v3101
    %v3985 = vunpack.c.h.b16 %v3101
    %v3986 = vunpack.c.l.b16 %v3102
    %v3987 = vunpack.c.l.b16 %v3103
    %v3988 = vunpack.c.h.b16 %v3103
    %v3989 = vunpack.c.l.b16 %v3104
    %v3990 = vunpack.c.h.b16 %v3104
    %v3991 = vunpack.c.l.b16 %v3105
    %v3992 = vunpack.c.h.b16 %v3105
    %v3993 = vunpack.c.l.b16 %v3106
    %v3994 = vunpack.c.l.b16 %v3107
    %v3995 = vunpack.c.h.b16 %v3107
    %v3996 = vunpack.c.l.b16 %v3108
    %v3997 = vunpack.c.h.b16 %v3108
    %v3998 = vunpack.c.l.b16 %v3109
    %v3999 = vunpack.c.h.b16 %v3109
    %v4000 = vunpack.c.l.b16 %v3110
    %v4001 = vunpack.c.l.b16 %v3111
    %v4002 = vunpack.c.h.b16 %v3111
    %v4003 = vunpack.c.l.b16 %v3112
    %v4004 = vunpack.c.h.b16 %v3112
    %v4005 = vunpack.c.l.b16 %v3113
    %v4006 = vunpack.c.h.b16 %v3113
    %v4007 = vunpack.c.l.b16 %v3114
    %v4008 = vunpack.c.l.b16 %v3115
    %v4009 = vunpack.c.h.b16 %v3115
    %v4010 = vunpack.c.l.b16 %v3116
    %v4011 = vunpack.c.h.b16 %v3116
    %v4012 = vunpack.c.l.b16 %v3117
    %v4013 = vunpack.c.h.b16 %v3117
    %v4014 = vunpack.c.l.b16 %v3118
    %v4015 = vunpack.c.l.b16 %v3119
    %v4016 = vunpack.c.h.b16 %v3119
    %v4017 = vunpack.c.l.b16 %v3120
    %v4018 = vunpack.c.h.b16 %v3120
    %v4019 = vunpack.c.l.b16 %v3121
    %v4020 = vunpack.c.h.b16 %v3121
    %v4021 = vunpack.c.l.b16 %v3122
    %v4022 = vunpack.c.l.b16 %v3123
    %v4023 = vunpack.c.h.b16 %v3123
    %v4024 = vunpack.c.l.b16 %v3124
    %v4025 = vunpack.c.h.b16 %v3124
    %v4026 = vunpack.c.l.b16 %v3125
    %v4027 = vunpack.c.h.b16 %v3125
    %v4028 = vunpack.c.l.b16 %v3126
    %v4029 = vunpack.c.l.b16 %v3127
    %v4030 = vunpack.c.h.b16 %v3127
    %v4031 = vunpack.c.l.b16 %v3128
    %v4032 = vunpack.c.h.b16 %v3128
    %v4033 = vunpack.c.l.b16 %v3129
    %v4034 = vunpack.c.h.b16 %v3129
    %v4035 = vunpack.c.l.b16 %v3130
    %v4036 = vunpack.c.l.b16 %v3131
    %v4037 = vunpack.c.h.b16 %v3131
    %v4038 = vunpack.c.l.b16 %v3132
    %v4039 = vunpack.c.h.b16 %v3132
    %v4040 = vunpack.c.l.b16 %v3133
    %v4041 = vunpack.c.h.b16 %v3133
    %v4042 = vunpack.c.l.b16 %v3134
    %v4043 = vunpack.c.l.b16 %v3135
    %v4044 = vunpack.c.h.b16 %v3135
    %v4045 = vunpack.c.l.b16 %v3136
    %v4046 = vunpack.c.h.b16 %v3136
    %v4047 = vunpack.c.l.b16 %v3137
    %v4048 = vunpack.c.h.b16 %v3137
    %v4049 = vunpack.c.l.b16 %v3138
    %v4050 = vunpack.c.l.b16 %v3139
    %v4051 = vunpack.c.h.b16 %v3139
    %v4052 = vunpack.c.l.b16 %v3140
    %v4053 = vunpack.c.h.b16 %v3140
    %v4054 = vunpack.c.l.b16 %v3141
    %v4055 = vunpack.c.h.b16 %v3141
    %v4056 = vunpack.c.l.b16 %v3142
    %v4057 = vunpack.c.l.b16 %v3143
    %v4058 = vunpack.c.h.b16 %v3143
    %v4059 = vunpack.c.l.b16 %v3144
    %v4060 = vunpack.c.h.b16 %v3144
    %v4061 = vunpack.c.l.b16 %v3145
    %v4062 = vunpack.c.h.b16 %v3145
    %v4063 = vunpack.c.l.b16 %v3146
    %v4064 = vunpack.c.l.b16 %v3147
    %v4065 = vunpack.c.h.b16 %v3147
    %v4066 = vunpack.c.l.b16 %v3148
    %v4067 = vunpack.c.h.b16 %v3148
    %v4068 = vunpack.c.l.b16 %v3149
    %v4069 = vunpack.c.h.b16 %v3149
    %v4070 = vunpack.c.l.b16 %v3150
    %v4071 = vunpack.c.l.b16 %v3151
    %v4072 = vunpack.c.h.b16 %v3151
    %v4073 = vunpack.c.l.b16 %v3152
    %v4074 = vunpack.c.h.b16 %v3152
    %v4075 = vunpack.c.l.b16 %v3153
    %v4076 = vunpack.c.h.b16 %v3153
    %v4077 = vunpack.c.l.b16 %v3154
    %v4078 = vunpack.c.l.b16 %v3155
    %v4079 = vunpack.c.h.b16 %v3155
    %v4080 = vunpack.c.l.b16 %v3156
    %v4081 = vunpack.c.h.b16 %v3156
    %v4082 = vunpack.c.l.b16 %v3157
    %v4083 = vunpack.c.h.b16 %v3157
    %v4084 = vunpack.c.l.b16 %v3158
    %v4085 = vunpack.c.l.b16 %v3159
    %v4086 = vunpack.c.h.b16 %v3159
    %v4087 = vunpack.c.l.b16 %v3160
    %v4088 = vunpack.c.h.b16 %v3160
    %v4089 = vunpack.c.l.b16 %v3161
    %v4090 = vunpack.c.h.b16 %v3161
    %v4091 = vunpack.c.l.b16 %v3162
    %v4092 = vunpack.c.l.b16 %v3163
    %v4093 = vunpack.c.h.b16 %v3163
    %v4094 = vunpack.c.l.b16 %v3164
    %v4095 = vunpack.c.h.b16 %v3164
    %v4096 = vunpack.c.l.b16 %v3165
    %v4097 = vunpack.c.h.b16 %v3165
    %v4098 = vunpack.c.l.b16 %v3166
    %v4099 = vunpack.c.l.b16 %v3167
    %v4100 = vunpack.c.h.b16 %v3167
    %v4101 = vunpack.c.l.b16 %v3168
    %v4102 = vunpack.c.h.b16 %v3168
    %v4103 = vunpack.c.l.b16 %v3169
    %v4104 = vunpack.c.h.b16 %v3169
    %v4105 = vunpack.c.l.b16 %v3170
    %v4106 = vunpack.c.l.b16 %v3171
    %v4107 = vunpack.c.h.b16 %v3171
    %v4108 = vunpack.c.l.b16 %v3172
    %v4109 = vunpack.c.h.b16 %v3172
    %v4110 = vunpack.c.l.b16 %v3173
    %v4111 = vunpack.c.h.b16 %v3173
    %v4112 = vunpack.c.l.b16 %v3174
    %v4113 = vunpack.c.l.b16 %v3175
    %v4114 = vunpack.c.h.b16 %v3175
    %v4115 = vunpack.c.l.b16 %v3176
    %v4116 = vunpack.c.h.b16 %v3176
    %v4117 = vunpack.c.l.b16 %v3177
    %v4118 = vunpack.c.h.b16 %v3177
    %v4119 = vunpack.c.l.b16 %v3178
    %v4120 = vunpack.c.l.b16 %v3179
    %v4121 = vunpack.c.h.b16 %v3179
    %v4122 = vunpack.c.l.b16 %v3180
    %v4123 = vunpack.c.h.b16 %v3180
    %v4124 = vunpack.c.l.b16 %v3181
    %v4125 = vunpack.c.h.b16 %v3181
    %v4126 = vunpack.c.l.b16 %v3182
    %v4127 = vunpack.c.l.b16 %v3183
    %v4128 = vunpack.c.h.b16 %v3183
    %v4129 = vunpack.c.l.b16 %v3184
    %v4130 = vunpack.c.h.b16 %v3184
    %v4131 = vunpack.c.l.b16 %v3185
    %v4132 = vunpack.c.h.b16 %v3185
    %v4133 = vunpack.c.l.b16 %v3186
    %v4134 = vunpack.c.l.b16 %v3187
    %v4135 = vunpack.c.h.b16 %v3187
    %v4136 = vunpack.c.l.b16 %v3188
    %v4137 = vunpack.c.h.b16 %v3188
    %v4138 = vunpack.c.l.b16 %v3189
    %v4139 = vunpack.c.h.b16 %v3189
    %v4140 = vunpack.c.l.b16 %v3190
    %v4141 = vunpack.c.l.b16 %v3191
    %v4142 = vunpack.c.h.b16 %v3191
    %v4143 = vunpack.c.l.b16 %v3192
    %v4144 = vunpack.c.h.b16 %v3192
    %v4145 = vunpack.c.l.b16 %v3193
    %v4146 = vunpack.c.h.b16 %v3193
    %v4147 = vunpack.c.l.b16 %v3194
    %v4148 = vunpack.c.l.b16 %v3195
    %v4149 = vunpack.c.h.b16 %v3195
    %v4150 = vunpack.c.l.b16 %v3196
    %v4151 = vunpack.c.h.b16 %v3196
    %v4152 = vunpack.c.l.b16 %v3197
    %v4153 = vunpack.c.h.b16 %v3197
    %v4154 = vunpack.c.l.b16 %v3198
    %v4155 = vunpack.c.l.b16 %v3199
    %v4156 = vunpack.c.h.b16 %v3199
    %v4157 = vunpack.c.l.b16 %v3200
    %v4158 = vunpack.c.h.b16 %v3200
    %v4159 = vunpack.c.l.b16 %v3201
    %v4160 = vunpack.c.h.b16 %v3201
    %v4161 = vunpack.c.l.b16 %v3202
    %v4162 = vunpack.c.l.b16 %v3203
    %v4163 = vunpack.c.h.b16 %v3203
    %v4164 = vunpack.c.l.b16 %v3204
    %v4165 = vunpack.c.h.b16 %v3204
    %v4166 = vunpack.c.l.b16 %v3205
    %v4167 = vunpack.c.h.b16 %v3205
    %v4168 = vunpack.c.l.b16 %v3206
    %v4169 = vunpack.c.l.b16 %v3207
    %v4170 = vunpack.c.h.b16 %v3207
    %v4171 = vunpack.c.l.b16 %v3208
    %v4172 = vunpack.c.h.b16 %v3208
    %v4173 = vunpack.c.l.b16 %v3209
    %v4174 = vunpack.c.h.b16 %v3209
    %v4175 = vunpack.c.l.b16 %v3210
    %v4176 = vunpack.c.l.b16 %v3211
    %v4177 = vunpack.c.h.b16 %v3211
    %v4178 = vunpack.c.l.b16 %v3212
    %v4179 = vunpack.c.h.b16 %v3212
    %v4180 = vunpack.c.l.b16 %v3213
    %v4181 = vunpack.c.h.b16 %v3213
    %v4182 = vunpack.c.l.b16 %v3214
    %v4183 = vunpack.c.l.b16 %v3215
    %v4184 = vunpack.c.h.b16 %v3215
    %v4185 = vunpack.c.l.b16 %v3216
    %v4186 = vunpack.c.h.b16 %v3216
    %v4187 = vunpack.c.l.b16 %v3217
    %v4188 = vunpack.c.h.b16 %v3217
    %v4189 = vunpack.c.l.b16 %v3218
    %v4190 = vunpack.c.l.b16 %v3219
    %v4191 = vunpack.c.h.b16 %v3219
    %v4192 = vunpack.c.l.b16 %v3220
    %v4193 = vunpack.c.h.b16 %v3220
    %v4194 = vunpack.c.l.b16 %v3221
    %v4195 = vunpack.c.h.b16 %v3221
    %v4196 = vunpack.c.l.b16 %v3222
    %v4197 = vunpack.c.l.b16 %v3223
    %v4198 = vunpack.c.h.b16 %v3223
    %v4199 = vunpack.c.l.b16 %v3224
    %v4200 = vunpack.c.h.b16 %v3224
    %v4201 = vunpack.c.l.b16 %v3225
    %v4202 = vunpack.c.h.b16 %v3225
    %v4203 = vunpack.c.l.b16 %v3226
    %v4204 = vunpack.c.l.b16 %v3227
    %v4205 = vunpack.c.h.b16 %v3227
    %v4206 = vunpack.c.l.b16 %v3228
    %v4207 = vunpack.c.h.b16 %v3228
    %v4208 = vunpack.c.l.b16 %v3229
    %v4209 = vunpack.c.h.b16 %v3229
    %v4210 = vunpack.c.l.b16 %v3230
    %v4211 = vunpack.c.l.b16 %v3231
    %v4212 = vunpack.c.h.b16 %v3231
    %v4213 = vunpack.c.l.b16 %v3232
    %v4214 = vunpack.c.h.b16 %v3232
    %v4215 = vunpack.c.l.b16 %v3233
    %v4216 = vunpack.c.h.b16 %v3233
    %v4217 = vunpack.c.l.b16 %v3234
    %v4218 = vunpack.c.l.b16 %v3235
    %v4219 = vunpack.c.h.b16 %v3235
    %v4220 = vunpack.c.l.b16 %v3236
    %v4221 = vunpack.c.h.b16 %v3236
    %v4222 = vunpack.c.l.b16 %v3237
    %v4223 = vunpack.c.h.b16 %v3237
    %v4224 = vunpack.c.l.b16 %v3238
    %v4225 = vunpack.c.l.b16 %v3239
    %v4226 = vunpack.c.h.b16 %v3239
    %v4227 = vunpack.c.l.b16 %v3240
    %v4228 = vunpack.c.h.b16 %v3240
    %v4229 = vunpack.c.l.b16 %v3241
    %v4230 = vunpack.c.h.b16 %v3241
    %v4231 = vunpack.c.l.b16 %v3242
    %v4232 = vunpack.c.l.b16 %v3243
    %v4233 = vunpack.c.h.b16 %v3243
    %v4234 = vunpack.c.l.b16 %v3244
    %v4235 = vunpack.c.h.b16 %v3244
    %v4236 = vunpack.c.l.b16 %v3245
    %v4237 = vunpack.c.h.b16 %v3245
    %v4238 = vunpack.c.l.b16 %v3246
    %v4239 = vunpack.c.l.b16 %v3247
    %v4240 = vunpack.c.h.b16 %v3247
    %v4241 = vunpack.c.l.b16 %v3248
    %v4242 = vunpack.c.h.b16 %v3248
    %v4243 = vunpack.c.l.b16 %v3249
    %v4244 = vunpack.c.h.b16 %v3249
    %v4245 = vunpack.c.l.b16 %v3250
    %v4246 = vunpack.c.l.b16 %v3251
    %v4247 = vunpack.c.h.b16 %v3251
    %v4248 = vunpack.c.l.b16 %v3252
    %v4249 = vunpack.c.h.b16 %v3252
    %v4250 = vunpack.c.l.b16 %v3253
    %v4251 = vunpack.c.h.b16 %v3253
    %v4252 = vunpack.c.l.b16 %v3254
    %v4253 = vunpack.c.l.b16 %v3255
    %v4254 = vunpack.c.h.b16 %v3255
    %v4255 = vunpack.c.l.b16 %v3256
    %v4256 = vunpack.c.h.b16 %v3256
    %v4257 = vunpack.c.l.b16 %v3257
    %v4258 = vunpack.c.h.b16 %v3257
    %v4259 = vunpack.c.l.b16 %v3258
    %v4260 = vunpack.c.l.b16 %v3259
    %v4261 = vunpack.c.h.b16 %v3259
    %v4262 = vunpack.c.l.b16 %v3260
    %v4263 = vunpack.c.h.b16 %v3260
    %v4264 = vunpack.c.l.b16 %v3261
    %v4265 = vunpack.c.h.b16 %v3261
    %v4266 = vunpack.c.l.b16 %v3262
    %v4267 = vunpack.c.l.b16 %v3263
    %v4268 = vunpack.c.h.b16 %v3263
    %v4269 = vunpack.c.l.b16 %v3264
    %v4270 = vunpack.c.h.b16 %v3264
    %v4271 = vunpack.c.l.b16 %v3265
    %v4272 = vunpack.c.h.b16 %v3265
    %v4273 = vunpack.c.l.b16 %v3266
    %v4274 = vunpack.c.l.b16 %v3267
    %v4275 = vunpack.c.h.b16 %v3267
    %v4276 = vunpack.c.l.b16 %v3268
    %v4277 = vunpack.c.h.b16 %v3268
    %v4278 = vunpack.c.l.b16 %v3269
    %v4279 = vunpack.c.h.b16 %v3269
    %v4280 = vunpack.c.l.b16 %v3270
    %v4281 = vunpack.c.l.b16 %v3271
    %v4282 = vunpack.c.h.b16 %v3271
    %v4283 = vunpack.c.l.b16 %v3272
    %v4284 = vunpack.c.h.b16 %v3272
    %v4285 = vunpack.c.l.b16 %v3273
    %v4286 = vunpack.c.h.b16 %v3273
    %v4287 = vunpack.c.l.b16 %v3274
    %v4288 = vunpack.c.l.b16 %v3275
    %v4289 = vunpack.c.h.b16 %v3275
    %v4290 = vunpack.c.l.b16 %v3276
    %v4291 = vunpack.c.h.b16 %v3276
    %v4292 = vunpack.c.l.b16 %v3277
    %v4293 = vunpack.c.h.b16 %v3277
    %v4294 = vunpack.c.l.b16 %v3278
    %v4295 = vunpack.c.l.b16 %v3279
    %v4296 = vunpack.c.h.b16 %v3279
    %v4297 = vunpack.c.l.b16 %v3280
    %v4298 = vunpack.c.h.b16 %v3280
    %v4299 = vunpack.c.l.b16 %v3281
    %v4300 = vunpack.c.h.b16 %v3281
    %v4301 = vunpack.c.l.b16 %v3282
    %v4302 = vunpack.c.l.b16 %v3283
    %v4303 = vunpack.c.h.b16 %v3283
    %v4304 = vunpack.c.l.b16 %v3284
    %v4305 = vunpack.c.h.b16 %v3284
    %v4306 = vunpack.c.l.b16 %v3285
    %v4307 = vunpack.c.h.b16 %v3285
    %v4308 = vunpack.c.l.b16 %v3286
    %v4309 = vunpack.c.l.b16 %v3287
    %v4310 = vunpack.c.h.b16 %v3287
    %v4311 = vunpack.c.l.b16 %v3288
    %v4312 = vunpack.c.h.b16 %v3288
    %v4313 = vunpack.c.l.b16 %v3289
    %v4314 = vunpack.c.h.b16 %v3289
    %v4315 = vunpack.c.l.b16 %v3290
    %v4316 = vunpack.c.l.b16 %v3291
    %v4317 = vunpack.c.h.b16 %v3291
    %v4318 = vunpack.c.l.b16 %v3292
    %v4319 = vunpack.c.h.b16 %v3292
    %v4320 = vunpack.c.l.b16 %v3293
    %v4321 = vunpack.c.h.b16 %v3293
    %v4322 = vunpack.c.l.b16 %v3294
    %v4323 = vunpack.c.l.b16 %v3295
    %v4324 = vunpack.c.h.b16 %v3295
    %v4325 = vunpack.c.l.b16 %v3296
    %v4326 = vunpack.c.h.b16 %v3296
    %v4327 = vunpack.c.l.b16 %v3297
    %v4328 = vunpack.c.h.b16 %v3297
    %v4329 = vunpack.c.l.b16 %v3298
    %v4330 = vunpack.c.l.b16 %v3299
    %v4331 = vunpack.c.h.b16 %v3299
    %v4332 = vunpack.c.l.b16 %v3300
    %v4333 = vunpack.c.h.b16 %v3300
    %v4334 = vunpack.c.l.b16 %v3301
    %v4335 = vunpack.c.h.b16 %v3301
    %v4336 = vunpack.c.l.b16 %v3302
    %v4337 = vunpack.c.l.b16 %v3303
    %v4338 = vunpack.c.h.b16 %v3303
    %v4339 = vunpack.c.l.b16 %v3304
    %v4340 = vunpack.c.h.b16 %v3304
    %v4341 = vunpack.c.l.b16 %v3305
    %v4342 = vunpack.c.h.b16 %v3305
    %v4343 = vunpack.c.l.b16 %v3306
    %v4344 = vunpack.c.l.b16 %v3307
    %v4345 = vunpack.c.h.b16 %v3307
    %v4346 = vunpack.c.l.b16 %v3308
    %v4347 = vunpack.c.h.b16 %v3308
    %v4348 = vunpack.c.l.b16 %v3309
    %v4349 = vunpack.c.h.b16 %v3309
    %v4350 = vunpack.c.l.b16 %v3310
    %v4351 = vunpack.c.l.b16 %v3311
    %v4352 = vunpack.c.h.b16 %v3311
    %v4353 = vunpack.c.l.b16 %v3312
    %v4354 = vunpack.c.h.b16 %v3312
    %v4355 = vunpack.c.l.b16 %v3313
    %v4356 = vunpack.c.h.b16 %v3313
    %v4357 = vunpack.c.l.b16 %v3314
    %v4358 = vunpack.c.l.b16 %v3315
    %v4359 = vunpack.c.h.b16 %v3315
    %v4360 = vunpack.c.l.b16 %v3316
    %v4361 = vunpack.c.h.b16 %v3316
    %v4362 = vunpack.c.l.b16 %v3317
    %v4363 = vunpack.c.h.b16 %v3317
    %v4364 = vunpack.c.l.b16 %v3318
    %v4365 = vunpack.c.l.b16 %v3319
    %v4366 = vunpack.c.h.b16 %v3319
    %v4367 = vunpack.c.l.b16 %v3320
    %v4368 = vunpack.c.h.b16 %v3320
    %v4369 = vunpack.c.l.b16 %v3321
    %v4370 = vunpack.c.h.b16 %v3321
    %v4371 = vunpack.c.l.b16 %v3322
    %v4372 = vunpack.c.l.b16 %v3323
    %v4373 = vunpack.c.h.b16 %v3323
    %v4374 = vunpack.c.l.b16 %v3324
    %v4375 = vunpack.c.h.b16 %v3324
    %v4376 = vunpack.c.l.b16 %v3325
    %v4377 = vunpack.c.h.b16 %v3325
    %v4378 = vunpack.c.l.b16 %v3326
    %v4379 = vunpack.c.l.b16 %v3327
    %v4380 = vunpack.c.h.b16 %v3327
    %v4381 = vunpack.c.l.b16 %v3328
    %v4382 = vunpack.c.h.b16 %v3328
    %v4383 = vunpack.c.l.b16 %v3329
    %v4384 = vunpack.c.h.b16 %v3329
    %v4385 = vunpack.c.l.b16 %v3330
    %v4386 = vunpack.c.l.b16 %v3331
    %v4387 = vunpack.c.h.b16 %v3331
    %v4388 = vunpack.c.l.b16 %v3332
    %v4389 = vunpack.c.h.b16 %v3332
    %v4390 = vunpack.c.l.b16 %v3333
    %v4391 = vunpack.c.h.b16 %v3333
    %v4392 = vunpack.c.l.b16 %v3334
    %v4393 = vunpack.c.l.b16 %v3335
    %v4394 = vunpack.c.h.b16 %v3335
    %v4395 = vunpack.c.l.b16 %v3336
    %v4396 = vunpack.c.h.b16 %v3336
    %v4397 = vunpack.c.l.b16 %v3337
    %v4398 = vunpack.c.h.b16 %v3337
    %v4399 = vunpack.c.l.b16 %v3338
    %v4400 = vunpack.c.l.b16 %v3339
    %v4401 = vunpack.c.h.b16 %v3339
    %v4402 = vunpack.c.l.b16 %v3340
    %v4403 = vunpack.c.h.b16 %v3340
    %v4404 = vunpack.c.l.b16 %v3341
    %v4405 = vunpack.c.h.b16 %v3341
    %v4406 = vunpack.c.l.b16 %v3342
    %v4407 = vunpack.c.l.b16 %v3343
    %v4408 = vunpack.c.h.b16 %v3343
    %v4409 = vunpack.c.l.b16 %v3344
    %v4410 = vunpack.c.h.b16 %v3344
    %v4411 = vunpack.c.l.b16 %v3345
    %v4412 = vunpack.c.h.b16 %v3345
    %v4413 = vunpack.c.l.b16 %v3346
    %v4414 = vunpack.c.l.b16 %v3347
    %v4415 = vunpack.c.h.b16 %v3347
    %v4416 = vunpack.c.l.b16 %v3348
    %v4417 = vunpack.c.h.b16 %v3348
    %v4418 = vunpack.c.l.b16 %v3349
    %v4419 = vunpack.c.h.b16 %v3349
    %v4420 = vunpack.c.l.b16 %v3350
    %v4421 = vunpack.c.l.b16 %v3351
    %v4422 = vunpack.c.h.b16 %v3351
    %v4423 = vunpack.c.l.b16 %v3352
    %v4424 = vunpack.c.h.b16 %v3352
    %v4425 = vunpack.c.l.b16 %v3353
    %v4426 = vunpack.c.h.b16 %v3353
    %v4427 = vunpack.c.l.b16 %v3354
    %v4428 = vunpack.c.l.b16 %v3355
    %v4429 = vunpack.c.h.b16 %v3355
    %v4430 = vunpack.c.l.b16 %v3356
    %v4431 = vunpack.c.h.b16 %v3356
    %v4432 = vunpack.c.l.b16 %v3357
    %v4433 = vunpack.c.h.b16 %v3357
    %v4434 = vunpack.c.l.b16 %v3358
    %v4435 = vunpack.c.l.b16 %v3359
    %v4436 = vunpack.c.h.b16 %v3359
    %v4437 = vunpack.c.l.b16 %v3360
    %v4438 = vunpack.c.h.b16 %v3360
    %v4439 = vunpack.c.l.b16 %v3361
    %v4440 = vunpack.c.h.b16 %v3361
    %v4441 = vunpack.c.l.b16 %v3362
    %v4442 = vunpack.c.l.b16 %v3363
    %v4443 = vunpack.c.h.b16 %v3363
    %v4444 = vunpack.c.l.b16 %v3364
    %v4445 = vunpack.c.h.b16 %v3364
    %v4446 = vunpack.c.l.b16 %v3365
    %v4447 = vunpack.c.h.b16 %v3365
    %v4448 = vunpack.c.l.b16 %v3366
    %v4449 = vunpack.c.l.b16 %v3367
    %v4450 = vunpack.c.h.b16 %v3367
    %v4451 = vunpack.c.l.b16 %v3368
    %v4452 = vunpack.c.h.b16 %v3368
    %v4453 = vunpack.c.l.b16 %v3369
    %v4454 = vunpack.c.h.b16 %v3369
    %v4455 = vunpack.c.l.b16 %v3370
    %v4456 = vunpack.c.l.b16 %v3371
    %v4457 = vunpack.c.h.b16 %v3371
    %v4458 = vunpack.c.l.b16 %v3372
    %v4459 = vunpack.c.h.b16 %v3372
    %v4460 = vunpack.c.l.b16 %v3373
    %v4461 = vunpack.c.h.b16 %v3373
    %v4462 = vunpack.c.l.b16 %v3374
    %v4463 = vunpack.c.l.b16 %v3375
    %v4464 = vunpack.c.h.b16 %v3375
    %v4465 = vunpack.c.l.b16 %v3376
    %v4466 = vunpack.c.h.b16 %v3376
    %v4467 = vunpack.c.l.b16 %v3377
    %v4468 = vunpack.c.h.b16 %v3377
    %v4469 = vunpack.c.l.b16 %v3378
    %v4470 = vunpack.c.l.b16 %v3379
    %v4471 = vunpack.c.h.b16 %v3379
    %v4472 = vunpack.c.l.b16 %v3380
    %v4473 = vunpack.c.h.b16 %v3380
    %v4474 = vunpack.c.l.b16 %v3381
    %v4475 = vunpack.c.h.b16 %v3381
    %v4476 = vunpack.c.l.b16 %v3382
    %v4477 = vpack.c.b16 %v3798, %v3791
    %v4478 = vpack.c.b16 %v3799, %v3792
    %v4479 = vpack.c.b16 %v3800, %v3793
    %v4480 = vpack.c.b16 %v3801, %v3794
    %v4481 = vpack.c.b16 %v3802, %v3795
    %v4482 = vpack.c.b16 %v3803, %v3796
    %v4483 = vpack.c.b16 %v3804, %v3797
    %v4484 = vpack.c.b16 %v3812, %v3805
    %v4485 = vpack.c.b16 %v3813, %v3806
    %v4486 = vpack.c.b16 %v3814, %v3807
    %v4487 = vpack.c.b16 %v3815, %v3808
    %v4488 = vpack.c.b16 %v3816, %v3809
    %v4489 = vpack.c.b16 %v3817, %v3810
    %v4490 = vpack.c.b16 %v3818, %v3811
    %v4491 = vpack.c.b16 %v3826, %v3819
    %v4492 = vpack.c.b16 %v3827, %v3820
    %v4493 = vpack.c.b16 %v3828, %v3821
    %v4494 = vpack.c.b16 %v3829, %v3822
    %v4495 = vpack.c.b16 %v3830, %v3823
    %v4496 = vpack.c.b16 %v3831, %v3824
    %v4497 = vpack.c.b16 %v3832, %v3825
    %v4498 = vpack.c.b16 %v3840, %v3833
    %v4499 = vpack.c.b16 %v3841, %v3834
    %v4500 = vpack.c.b16 %v3842, %v3835
    %v4501 = vpack.c.b16 %v3843, %v3836
    %v4502 = vpack.c.b16 %v3844, %v3837
    %v4503 = vpack.c.b16 %v3845, %v3838
    %v4504 = vpack.c.b16 %v3846, %v3839
    %v4505 = vpack.c.b16 %v3854, %v3847
    %v4506 = vpack.c.b16 %v3855, %v3848
    %v4507 = vpack.c.b16 %v3856, %v3849
    %v4508 = vpack.c.b16 %v3857, %v3850
    %v4509 = vpack.c.b16 %v3858, %v3851
    %v4510 = vpack.c.b16 %v3859, %v3852
    %v4511 = vpack.c.b16 %v3860, %v3853
    %v4512 = vpack.c.b16 %v3868, %v3861
    %v4513 = vpack.c.b16 %v3869, %v3862
    %v4514 = vpack.c.b16 %v3870, %v3863
    %v4515 = vpack.c.b16 %v3871, %v3864
    %v4516 = vpack.c.b16 %v3872, %v3865
    %v4517 = vpack.c.b16 %v3873, %v3866
    %v4518 = vpack.c.b16 %v3874, %v3867
    %v4519 = vpack.c.b16 %v3882, %v3875
    %v4520 = vpack.c.b16 %v3883, %v3876
    %v4521 = vpack.c.b16 %v3884, %v3877
    %v4522 = vpack.c.b16 %v3885, %v3878
    %v4523 = vpack.c.b16 %v3886, %v3879
    %v4524 = vpack.c.b16 %v3887, %v3880
    %v4525 = vpack.c.b16 %v3888, %v3881
    %v4526 = vpack.c.b16 %v3896, %v3889
    %v4527 = vpack.c.b16 %v3897, %v3890
    %v4528 = vpack.c.b16 %v3898, %v3891
    %v4529 = vpack.c.b16 %v3899, %v3892
    %v4530 = vpack.c.b16 %v3900, %v3893
    %v4531 = vpack.c.b16 %v3901, %v3894
    %v4532 = vpack.c.b16 %v3902, %v3895
    %v4533 = vpack.c.b16 %v3910, %v3903
    %v4534 = vpack.c.b16 %v3911, %v3904
    %v4535 = vpack.c.b16 %v3912, %v3905
    %v4536 = vpack.c.b16 %v3913, %v3906
    %v4537 = vpack.c.b16 %v3914, %v3907
    %v4538 = vpack.c.b16 %v3915, %v3908
    %v4539 = vpack.c.b16 %v3916, %v3909
    %v4540 = vpack.c.b16 %v3924, %v3917
    %v4541 = vpack.c.b16 %v3925, %v3918
    %v4542 = vpack.c.b16 %v3926, %v3919
    %v4543 = vpack.c.b16 %v3927, %v3920
    %v4544 = vpack.c.b16 %v3928, %v3921
    %v4545 = vpack.c.b16 %v3929, %v3922
    %v4546 = vpack.c.b16 %v3930, %v3923
    %v4547 = vpack.c.b16 %v3938, %v3931
    %v4548 = vpack.c.b16 %v3939, %v3932
    %v4549 = vpack.c.b16 %v3940, %v3933
    %v4550 = vpack.c.b16 %v3941, %v3934
    %v4551 = vpack.c.b16 %v3942, %v3935
    %v4552 = vpack.c.b16 %v3943, %v3936
    %v4553 = vpack.c.b16 %v3944, %v3937
    %v4554 = vpack.c.b16 %v3952, %v3945
    %v4555 = vpack.c.b16 %v3953, %v3946
    %v4556 = vpack.c.b16 %v3954, %v3947
    %v4557 = vpack.c.b16 %v3955, %v3948
    %v4558 = vpack.c.b16 %v3956, %v3949
    %v4559 = vpack.c.b16 %v3957, %v3950
    %v4560 = vpack.c.b16 %v3958, %v3951
    %v4561 = vpack.c.b16 %v3966, %v3959
    %v4562 = vpack.c.b16 %v3967, %v3960
    %v4563 = vpack.c.b16 %v3968, %v3961
    %v4564 = vpack.c.b16 %v3969, %v3962
    %v4565 = vpack.c.b16 %v3970, %v3963
    %v4566 = vpack.c.b16 %v3971, %v3964
    %v4567 = vpack.c.b16 %v3972, %v3965
    %v4568 = vpack.c.b16 %v3980, %v3973
    %v4569 = vpack.c.b16 %v3981, %v3974
    %v4570 = vpack.c.b16 %v3982, %v3975
    %v4571 = vpack.c.b16 %v3983, %v3976
    %v4572 = vpack.c.b16 %v3984, %v3977
    %v4573 = vpack.c.b16 %v3985, %v3978
    %v4574 = vpack.c.b16 %v3986, %v3979
    %v4575 = vpack.c.b16 %v3994, %v3987
    %v4576 = vpack.c.b16 %v3995, %v3988
    %v4577 = vpack.c.b16 %v3996, %v3989
    %v4578 = vpack.c.b16 %v3997, %v3990
    %v4579 = vpack.c.b16 %v3998, %v3991
    %v4580 = vpack.c.b16 %v3999, %v3992
    %v4581 = vpack.c.b16 %v4000, %v3993
    %v4582 = vpack.c.b16 %v4008, %v4001
    %v4583 = vpack.c.b16 %v4009, %v4002
    %v4584 = vpack.c.b16 %v4010, %v4003
    %v4585 = vpack.c.b16 %v4011, %v4004
    %v4586 = vpack.c.b16 %v4012, %v4005
    %v4587 = vpack.c.b16 %v4013, %v4006
    %v4588 = vpack.c.b16 %v4014, %v4007
    %v4589 = vpack.c.b16 %v4022, %v4015
    %v4590 = vpack.c.b16 %v4023, %v4016
    %v4591 = vpack.c.b16 %v4024, %v4017
    %v4592 = vpack.c.b16 %v4025, %v4018
    %v4593 = vpack.c.b16 %v4026, %v4019
    %v4594 = vpack.c.b16 %v4027, %v4020
    %v4595 = vpack.c.b16 %v4028, %v4021
    %v4596 = vpack.c.b16 %v4036, %v4029
    %v4597 = vpack.c.b16 %v4037, %v4030
    %v4598 = vpack.c.b16 %v4038, %v4031
    %v4599 = vpack.c.b16 %v4039, %v4032
    %v4600 = vpack.c.b16 %v4040, %v4033
    %v4601 = vpack.c.b16 %v4041, %v4034
    %v4602 = vpack.c.b16 %v4042, %v4035
    %v4603 = vpack.c.b16 %v4050, %v4043
    %v4604 = vpack.c.b16 %v4051, %v4044
    %v4605 = vpack.c.b16 %v4052, %v4045
    %v4606 = vpack.c.b16 %v4053, %v4046
    %v4607 = vpack.c.b16 %v4054, %v4047
    %v4608 = vpack.c.b16 %v4055, %v4048
    %v4609 = vpack.c.b16 %v4056, %v4049
    %v4610 = vpack.c.b16 %v4064, %v4057
    %v4611 = vpack.c.b16 %v4065, %v4058
    %v4612 = vpack.c.b16 %v4066, %v4059
    %v4613 = vpack.c.b16 %v4067, %v4060
    %v4614 = vpack.c.b16 %v4068, %v4061
    %v4615 = vpack.c.b16 %v4069, %v4062
    %v4616 = vpack.c.b16 %v4070, %v4063
    %v4617 = vpack.c.b16 %v4078, %v4071
    %v4618 = vpack.c.b16 %v4079, %v4072
    %v4619 = vpack.c.b16 %v4080, %v4073
    %v4620 = vpack.c.b16 %v4081, %v4074
    %v4621 = vpack.c.b16 %v4082, %v4075
    %v4622 = vpack.c.b16 %v4083, %v4076
    %v4623 = vpack.c.b16 %v4084, %v4077
    %v4624 = vpack.c.b16 %v4092, %v4085
    %v4625 = vpack.c.b16 %v4093, %v4086
    %v4626 = vpack.c.b16 %v4094, %v4087
    %v4627 = vpack.c.b16 %v4095, %v4088
    %v4628 = vpack.c.b16 %v4096, %v4089
    %v4629 = vpack.c.b16 %v4097, %v4090
    %v4630 = vpack.c.b16 %v4098, %v4091
    %v4631 = vpack.c.b16 %v4106, %v4099
    %v4632 = vpack.c.b16 %v4107, %v4100
    %v4633 = vpack.c.b16 %v4108, %v4101
    %v4634 = vpack.c.b16 %v4109, %v4102
    %v4635 = vpack.c.b16 %v4110, %v4103
    %v4636 = vpack.c.b16 %v4111, %v4104
    %v4637 = vpack.c.b16 %v4112, %v4105
    %v4638 = vpack.c.b16 %v4120, %v4113
    %v4639 = vpack.c.b16 %v4121, %v4114
    %v4640 = vpack.c.b16 %v4122, %v4115
    %v4641 = vpack.c.b16 %v4123, %v4116
    %v4642 = vpack.c.b16 %v4124, %v4117
    %v4643 = vpack.c.b16 %v4125, %v4118
    %v4644 = vpack.c.b16 %v4126, %v4119
    %v4645 = vpack.c.b16 %v4134, %v4127
    %v4646 = vpack.c.b16 %v4135, %v4128
    %v4647 = vpack.c.b16 %v4136, %v4129
    %v4648 = vpack.c.b16 %v4137, %v4130
    %v4649 = vpack.c.b16 %v4138, %v4131
    %v4650 = vpack.c.b16 %v4139, %v4132
    %v4651 = vpack.c.b16 %v4140, %v4133
    %v4652 = vpack.c.b16 %v4148, %v4141
    %v4653 = vpack.c.b16 %v4149, %v4142
    %v4654 = vpack.c.b16 %v4150, %v4143
    %v4655 = vpack.c.b16 %v4151, %v4144
    %v4656 = vpack.c.b16 %v4152, %v4145
    %v4657 = vpack.c.b16 %v4153, %v4146
    %v4658 = vpack.c.b16 %v4154, %v4147
    %v4659 = vpack.c.b16 %v4162, %v4155
    %v4660 = vpack.c.b16 %v4163, %v4156
    %v4661 = vpack.c.b16 %v4164, %v4157
    %v4662 = vpack.c.b16 %v4165, %v4158
    %v4663 = vpack.c.b16 %v4166, %v4159
    %v4664 = vpack.c.b16 %v4167, %v4160
    %v4665 = vpack.c.b16 %v4168, %v4161
    %v4666 = vpack.c.b16 %v4176, %v4169
    %v4667 = vpack.c.b16 %v4177, %v4170
    %v4668 = vpack.c.b16 %v4178, %v4171
    %v4669 = vpack.c.b16 %v4179, %v4172
    %v4670 = vpack.c.b16 %v4180, %v4173
    %v4671 = vpack.c.b16 %v4181, %v4174
    %v4672 = vpack.c.b16 %v4182, %v4175
    %v4673 = vpack.c.b16 %v4190, %v4183
    %v4674 = vpack.c.b16 %v4191, %v4184
    %v4675 = vpack.c.b16 %v4192, %v4185
    %v4676 = vpack.c.b16 %v4193, %v4186
    %v4677 = vpack.c.b16 %v4194, %v4187
    %v4678 = vpack.c.b16 %v4195, %v4188
    %v4679 = vpack.c.b16 %v4196, %v4189
    %v4680 = vpack.c.b16 %v4204, %v4197
    %v4681 = vpack.c.b16 %v4205, %v4198
    %v4682 = vpack.c.b16 %v4206, %v4199
    %v4683 = vpack.c.b16 %v4207, %v4200
    %v4684 = vpack.c.b16 %v4208, %v4201
    %v4685 = vpack.c.b16 %v4209, %v4202
    %v4686 = vpack.c.b16 %v4210, %v4203
    %v4687 = vpack.c.b16 %v4218, %v4211
    %v4688 = vpack.c.b16 %v4219, %v4212
    %v4689 = vpack.c.b16 %v4220, %v4213
    %v4690 = vpack.c.b16 %v4221, %v4214
    %v4691 = vpack.c.b16 %v4222, %v4215
    %v4692 = vpack.c.b16 %v4223, %v4216
    %v4693 = vpack.c.b16 %v4224, %v4217
    %v4694 = vpack.c.b16 %v4232, %v4225
    %v4695 = vpack.c.b16 %v4233, %v4226
    %v4696 = vpack.c.b16 %v4234, %v4227
    %v4697 = vpack.c.b16 %v4235, %v4228
    %v4698 = vpack.c.b16 %v4236, %v4229
    %v4699 = vpack.c.b16 %v4237, %v4230
    %v4700 = vpack.c.b16 %v4238, %v4231
    %v4701 = vpack.c.b16 %v4246, %v4239
    %v4702 = vpack.c.b16 %v4247, %v4240
    %v4703 = vpack.c.b16 %v4248, %v4241
    %v4704 = vpack.c.b16 %v4249, %v4242
    %v4705 = vpack.c.b16 %v4250, %v4243
    %v4706 = vpack.c.b16 %v4251, %v4244
    %v4707 = vpack.c.b16 %v4252, %v4245
    %v4708 = vpack.c.b16 %v4260, %v4253
    %v4709 = vpack.c.b16 %v4261, %v4254
    %v4710 = vpack.c.b16 %v4262, %v4255
    %v4711 = vpack.c.b16 %v4263, %v4256
    %v4712 = vpack.c.b16 %v4264, %v4257
    %v4713 = vpack.c.b16 %v4265, %v4258
    %v4714 = vpack.c.b16 %v4266, %v4259
    %v4715 = vpack.c.b16 %v4274, %v4267
    %v4716 = vpack.c.b16 %v4275, %v4268
    %v4717 = vpack.c.b16 %v4276, %v4269
    %v4718 = vpack.c.b16 %v4277, %v4270
    %v4719 = vpack.c.b16 %v4278, %v4271
    %v4720 = vpack.c.b16 %v4279, %v4272
    %v4721 = vpack.c.b16 %v4280, %v4273
    %v4722 = vpack.c.b16 %v4288, %v4281
    %v4723 = vpack.c.b16 %v4289, %v4282
    %v4724 = vpack.c.b16 %v4290, %v4283
    %v4725 = vpack.c.b16 %v4291, %v4284
    %v4726 = vpack.c.b16 %v4292, %v4285
    %v4727 = vpack.c.b16 %v4293, %v4286
    %v4728 = vpack.c.b16 %v4294, %v4287
    %v4729 = vpack.c.b16 %v4302, %v4295
    %v4730 = vpack.c.b16 %v4303, %v4296
    %v4731 = vpack.c.b16 %v4304, %v4297
    %v4732 = vpack.c.b16 %v4305, %v4298
    %v4733 = vpack.c.b16 %v4306, %v4299
    %v4734 = vpack.c.b16 %v4307, %v4300
    %v4735 = vpack.c.b16 %v4308, %v4301
    %v4736 = vpack.c.b16 %v4316, %v4309
    %v4737 = vpack.c.b16 %v4317, %v4310
    %v4738 = vpack.c.b16 %v4318, %v4311
    %v4739 = vpack.c.b16 %v4319, %v4312
    %v4740 = vpack.c.b16 %v4320, %v4313
    %v4741 = vpack.c.b16 %v4321, %v4314
    %v4742 = vpack.c.b16 %v4322, %v4315
    %v4743 = vpack.c.b16 %v4330, %v4323
    %v4744 = vpack.c.b16 %v4331, %v4324
    %v4745 = vpack.c.b16 %v4332, %v4325
    %v4746 = vpack.c.b16 %v4333, %v4326
    %v4747 = vpack.c.b16 %v4334, %v4327
    %v4748 = vpack.c.b16 %v4335, %v4328
    %v4749 = vpack.c.b16 %v4336, %v4329
    %v4750 = vpack.c.b16 %v4344, %v4337
    %v4751 = vpack.c.b16 %v4345, %v4338
    %v4752 = vpack.c.b16 %v4346, %v4339
    %v4753 = vpack.c.b16 %v4347, %v4340
    %v4754 = vpack.c.b16 %v4348, %v4341
    %v4755 = vpack.c.b16 %v4349, %v4342
    %v4756 = vpack.c.b16 %v4350, %v4343
    %v4757 = vpack.c.b16 %v4358, %v4351
    %v4758 = vpack.c.b16 %v4359, %v4352
    %v4759 = vpack.c.b16 %v4360, %v4353
    %v4760 = vpack.c.b16 %v4361, %v4354
    %v4761 = vpack.c.b16 %v4362, %v4355
    %v4762 = vpack.c.b16 %v4363, %v4356
    %v4763 = vpack.c.b16 %v4364, %v4357
    %v4764 = vpack.c.b16 %v4372, %v4365
    %v4765 = vpack.c.b16 %v4373, %v4366
    %v4766 = vpack.c.b16 %v4374, %v4367
    %v4767 = vpack.c.b16 %v4375, %v4368
    %v4768 = vpack.c.b16 %v4376, %v4369
    %v4769 = vpack.c.b16 %v4377, %v4370
    %v4770 = vpack.c.b16 %v4378, %v4371
    %v4771 = vpack.c.b16 %v4386, %v4379
    %v4772 = vpack.c.b16 %v4387, %v4380
    %v4773 = vpack.c.b16 %v4388, %v4381
    %v4774 = vpack.c.b16 %v4389, %v4382
    %v4775 = vpack.c.b16 %v4390, %v4383
    %v4776 = vpack.c.b16 %v4391, %v4384
    %v4777 = vpack.c.b16 %v4392, %v4385
    %v4778 = vpack.c.b16 %v4400, %v4393
    %v4779 = vpack.c.b16 %v4401, %v4394
    %v4780 = vpack.c.b16 %v4402, %v4395
    %v4781 = vpack.c.b16 %v4403, %v4396
    %v4782 = vpack.c.b16 %v4404, %v4397
    %v4783 = vpack.c.b16 %v4405, %v4398
    %v4784 = vpack.c.b16 %v4406, %v4399
    %v4785 = vpack.c.b16 %v4414, %v4407
    %v4786 = vpack.c.b16 %v4415, %v4408
    %v4787 = vpack.c.b16 %v4416, %v4409
    %v4788 = vpack.c.b16 %v4417, %v4410
    %v4789 = vpack.c.b16 %v4418, %v4411
    %v4790 = vpack.c.b16 %v4419, %v4412
    %v4791 = vpack.c.b16 %v4420, %v4413
    %v4792 = vpack.c.b16 %v4428, %v4421
    %v4793 = vpack.c.b16 %v4429, %v4422
    %v4794 = vpack.c.b16 %v4430, %v4423
    %v4795 = vpack.c.b16 %v4431, %v4424
    %v4796 = vpack.c.b16 %v4432, %v4425
    %v4797 = vpack.c.b16 %v4433, %v4426
    %v4798 = vpack.c.b16 %v4434, %v4427
    %v4799 = vpack.c.b16 %v4442, %v4435
    %v4800 = vpack.c.b16 %v4443, %v4436
    %v4801 = vpack.c.b16 %v4444, %v4437
    %v4802 = vpack.c.b16 %v4445, %v4438
    %v4803 = vpack.c.b16 %v4446, %v4439
    %v4804 = vpack.c.b16 %v4447, %v4440
    %v4805 = vpack.c.b16 %v4448, %v4441
    %v4806 = vpack.c.b16 %v4456, %v4449
    %v4807 = vpack.c.b16 %v4457, %v4450
    %v4808 = vpack.c.b16 %v4458, %v4451
    %v4809 = vpack.c.b16 %v4459, %v4452
    %v4810 = vpack.c.b16 %v4460, %v4453
    %v4811 = vpack.c.b16 %v4461, %v4454
    %v4812 = vpack.c.b16 %v4462, %v4455
    %v4813 = vpack.c.b16 %v4470, %v4463
    %v4814 = vpack.c.b16 %v4471, %v4464
    %v4815 = vpack.c.b16 %v4472, %v4465
    %v4816 = vpack.c.b16 %v4473, %v4466
    %v4817 = vpack.c.b16 %v4474, %v4467
    %v4818 = vpack.c.b16 %v4475, %v4468
    %v4819 = vpack.c.b16 %v4476, %v4469
    %vm5163 = vcmask 130048
    %v5165 = vsel %vm5163, %v2990, 0
    %5167 = vmatpush.bf16.msra.mxu0 %v4526
    %5168 = vmatpush.bf16.msra.mxu0 %v4519
    %5169 = vmatpush.bf16.msra.mxu0 %v4512
    %5170 = vmatpush.bf16.msra.mxu0 %v4505
    %5171 = vmatpush.bf16.msra.mxu0 %v4498
    %5172 = vmatpush.bf16.msra.mxu0 %v4491
    %5173 = vmatpush.bf16.msra.mxu0 %v4484
    %5174 = vmatpush.bf16.msra.mxu0 %v4477
    %5175 = vmatmul.bf16.gmra.mxu0 %v2984
    %v5176 = vpop.f32.mrf.mxu0
    %v5177 = vadd.f32 %v3385, %v5176
    %v5178 = vpop.f32.mrf.mxu0
    %5179 = vdwg.mxu0
    %5180 = vmatpush.bf16.msra.mxu0 %v4582
    %5181 = vmatpush.bf16.msra.mxu0 %v4575
    %5182 = vmatpush.bf16.msra.mxu0 %v4568
    %5183 = vmatpush.bf16.msra.mxu0 %v4561
    %5184 = vmatpush.bf16.msra.mxu0 %v4554
    %5185 = vmatpush.bf16.msra.mxu0 %v4547
    %5186 = vmatpush.bf16.msra.mxu0 %v4540
    %5187 = vmatpush.bf16.msra.mxu0 %v4533
    %5188 = vmatmul.bf16.gmra.mxu0 %v2985
    %v5189 = vpop.f32.mrf.mxu0
    %v5190 = vadd.f32 %v5177, %v5189
    %v5191 = vpop.f32.mrf.mxu0
    %5192 = vdwg.mxu0
    %5193 = vmatpush.bf16.msra.mxu0 %v4638
    %5194 = vmatpush.bf16.msra.mxu0 %v4631
    %5195 = vmatpush.bf16.msra.mxu0 %v4624
    %5196 = vmatpush.bf16.msra.mxu0 %v4617
    %5197 = vmatpush.bf16.msra.mxu0 %v4610
    %5198 = vmatpush.bf16.msra.mxu0 %v4603
    %5199 = vmatpush.bf16.msra.mxu0 %v4596
    %5200 = vmatpush.bf16.msra.mxu0 %v4589
    %5201 = vmatmul.bf16.gmra.mxu0 %v2986
    %v5202 = vpop.f32.mrf.mxu0
    %v5203 = vadd.f32 %v5190, %v5202
    %v5204 = vpop.f32.mrf.mxu0
    %5205 = vdwg.mxu0
    %5206 = vmatpush.bf16.msra.mxu0 %v4694
    %5207 = vmatpush.bf16.msra.mxu0 %v4687
    %5208 = vmatpush.bf16.msra.mxu0 %v4680
    %5209 = vmatpush.bf16.msra.mxu0 %v4673
    %5210 = vmatpush.bf16.msra.mxu0 %v4666
    %5211 = vmatpush.bf16.msra.mxu0 %v4659
    %5212 = vmatpush.bf16.msra.mxu0 %v4652
    %5213 = vmatpush.bf16.msra.mxu0 %v4645
    %5214 = vmatmul.bf16.gmra.mxu0 %v2987
    %v5215 = vpop.f32.mrf.mxu0
    %v5216 = vadd.f32 %v5203, %v5215
    %v5217 = vpop.f32.mrf.mxu0
    %5218 = vdwg.mxu0
    %5219 = vmatpush.bf16.msra.mxu0 %v4750
    %5220 = vmatpush.bf16.msra.mxu0 %v4743
    %5221 = vmatpush.bf16.msra.mxu0 %v4736
    %5222 = vmatpush.bf16.msra.mxu0 %v4729
    %5223 = vmatpush.bf16.msra.mxu0 %v4722
    %5224 = vmatpush.bf16.msra.mxu0 %v4715
    %5225 = vmatpush.bf16.msra.mxu0 %v4708
    %5226 = vmatpush.bf16.msra.mxu0 %v4701
    %5227 = vmatmul.bf16.gmra.mxu0 %v2988
    %v5228 = vpop.f32.mrf.mxu0
    %v5229 = vadd.f32 %v5216, %v5228
    %v5230 = vpop.f32.mrf.mxu0
    %5231 = vdwg.mxu0
    %5232 = vmatpush.bf16.msra.mxu0 %v4806
    %5233 = vmatpush.bf16.msra.mxu0 %v4799
    %5234 = vmatpush.bf16.msra.mxu0 %v4792
    %5235 = vmatpush.bf16.msra.mxu0 %v4785
    %5236 = vmatpush.bf16.msra.mxu0 %v4778
    %5237 = vmatpush.bf16.msra.mxu0 %v4771
    %5238 = vmatpush.bf16.msra.mxu0 %v4764
    %5239 = vmatpush.bf16.msra.mxu0 %v4757
    %5240 = vmatmul.bf16.gmra.mxu0 %v2989
    %v5241 = vpop.f32.mrf.mxu0
    %v5242 = vadd.f32 %v5229, %v5241
    %v5243 = vpop.f32.mrf.mxu0
    %5244 = vdwg.mxu0
    %5245 = vmatpush.bf16.msra.mxu0 0
    %5246 = vmatpush.bf16.msra.mxu0 0
    %5247 = vmatpush.bf16.msra.mxu0 0
    %5248 = vmatpush.bf16.msra.mxu0 0
    %5249 = vmatpush.bf16.msra.mxu0 0
    %5250 = vmatpush.bf16.msra.mxu0 0
    %5251 = vmatpush.bf16.msra.mxu0 0
    %5252 = vmatpush.bf16.msra.mxu0 %v4813
    %5253 = vmatmul.bf16.gmra.mxu0 %v5165
    %v5254 = vpop.f32.mrf.mxu0
    %v5255 = vadd.f32 %v5242, %v5254
    %v5256 = vpop.f32.mrf.mxu0
    %5257 = vdwg.mxu0
    %5258 = vmatpush.bf16.msra.mxu0 %v4527
    %5259 = vmatpush.bf16.msra.mxu0 %v4520
    %5260 = vmatpush.bf16.msra.mxu0 %v4513
    %5261 = vmatpush.bf16.msra.mxu0 %v4506
    %5262 = vmatpush.bf16.msra.mxu0 %v4499
    %5263 = vmatpush.bf16.msra.mxu0 %v4492
    %5264 = vmatpush.bf16.msra.mxu0 %v4485
    %5265 = vmatpush.bf16.msra.mxu0 %v4478
    %5266 = vmatmul.bf16.gmra.mxu0 %v2984
    %v5267 = vpop.f32.mrf.mxu0
    %v5268 = vadd.f32 %v3386, %v5267
    %v5269 = vpop.f32.mrf.mxu0
    %5270 = vdwg.mxu0
    %5271 = vmatpush.bf16.msra.mxu0 %v4583
    %5272 = vmatpush.bf16.msra.mxu0 %v4576
    %5273 = vmatpush.bf16.msra.mxu0 %v4569
    %5274 = vmatpush.bf16.msra.mxu0 %v4562
    %5275 = vmatpush.bf16.msra.mxu0 %v4555
    %5276 = vmatpush.bf16.msra.mxu0 %v4548
    %5277 = vmatpush.bf16.msra.mxu0 %v4541
    %5278 = vmatpush.bf16.msra.mxu0 %v4534
    %5279 = vmatmul.bf16.gmra.mxu0 %v2985
    %v5280 = vpop.f32.mrf.mxu0
    %v5281 = vadd.f32 %v5268, %v5280
    %v5282 = vpop.f32.mrf.mxu0
    %5283 = vdwg.mxu0
    %5284 = vmatpush.bf16.msra.mxu0 %v4639
    %5285 = vmatpush.bf16.msra.mxu0 %v4632
    %5286 = vmatpush.bf16.msra.mxu0 %v4625
    %5287 = vmatpush.bf16.msra.mxu0 %v4618
    %5288 = vmatpush.bf16.msra.mxu0 %v4611
    %5289 = vmatpush.bf16.msra.mxu0 %v4604
    %5290 = vmatpush.bf16.msra.mxu0 %v4597
    %5291 = vmatpush.bf16.msra.mxu0 %v4590
    %5292 = vmatmul.bf16.gmra.mxu0 %v2986
    %v5293 = vpop.f32.mrf.mxu0
    %v5294 = vadd.f32 %v5281, %v5293
    %v5295 = vpop.f32.mrf.mxu0
    %5296 = vdwg.mxu0
    %5297 = vmatpush.bf16.msra.mxu0 %v4695
    %5298 = vmatpush.bf16.msra.mxu0 %v4688
    %5299 = vmatpush.bf16.msra.mxu0 %v4681
    %5300 = vmatpush.bf16.msra.mxu0 %v4674
    %5301 = vmatpush.bf16.msra.mxu0 %v4667
    %5302 = vmatpush.bf16.msra.mxu0 %v4660
    %5303 = vmatpush.bf16.msra.mxu0 %v4653
    %5304 = vmatpush.bf16.msra.mxu0 %v4646
    %5305 = vmatmul.bf16.gmra.mxu0 %v2987
    %v5306 = vpop.f32.mrf.mxu0
    %v5307 = vadd.f32 %v5294, %v5306
    %v5308 = vpop.f32.mrf.mxu0
    %5309 = vdwg.mxu0
    %5310 = vmatpush.bf16.msra.mxu0 %v4751
    %5311 = vmatpush.bf16.msra.mxu0 %v4744
    %5312 = vmatpush.bf16.msra.mxu0 %v4737
    %5313 = vmatpush.bf16.msra.mxu0 %v4730
    %5314 = vmatpush.bf16.msra.mxu0 %v4723
    %5315 = vmatpush.bf16.msra.mxu0 %v4716
    %5316 = vmatpush.bf16.msra.mxu0 %v4709
    %5317 = vmatpush.bf16.msra.mxu0 %v4702
    %5318 = vmatmul.bf16.gmra.mxu0 %v2988
    %v5319 = vpop.f32.mrf.mxu0
    %v5320 = vadd.f32 %v5307, %v5319
    %v5321 = vpop.f32.mrf.mxu0
    %5322 = vdwg.mxu0
    %5323 = vmatpush.bf16.msra.mxu0 %v4807
    %5324 = vmatpush.bf16.msra.mxu0 %v4800
    %5325 = vmatpush.bf16.msra.mxu0 %v4793
    %5326 = vmatpush.bf16.msra.mxu0 %v4786
    %5327 = vmatpush.bf16.msra.mxu0 %v4779
    %5328 = vmatpush.bf16.msra.mxu0 %v4772
    %5329 = vmatpush.bf16.msra.mxu0 %v4765
    %5330 = vmatpush.bf16.msra.mxu0 %v4758
    %5331 = vmatmul.bf16.gmra.mxu0 %v2989
    %v5332 = vpop.f32.mrf.mxu0
    %v5333 = vadd.f32 %v5320, %v5332
    %v5334 = vpop.f32.mrf.mxu0
    %5335 = vdwg.mxu0
    %5336 = vmatpush.bf16.msra.mxu0 0
    %5337 = vmatpush.bf16.msra.mxu0 0
    %5338 = vmatpush.bf16.msra.mxu0 0
    %5339 = vmatpush.bf16.msra.mxu0 0
    %5340 = vmatpush.bf16.msra.mxu0 0
    %5341 = vmatpush.bf16.msra.mxu0 0
    %5342 = vmatpush.bf16.msra.mxu0 0
    %5343 = vmatpush.bf16.msra.mxu0 %v4814
    %5344 = vmatmul.bf16.gmra.mxu0 %v5165
    %v5345 = vpop.f32.mrf.mxu0
    %v5346 = vadd.f32 %v5333, %v5345
    %v5347 = vpop.f32.mrf.mxu0
    %5348 = vdwg.mxu0
    %5349 = vmatpush.bf16.msra.mxu0 %v4528
    %5350 = vmatpush.bf16.msra.mxu0 %v4521
    %5351 = vmatpush.bf16.msra.mxu0 %v4514
    %5352 = vmatpush.bf16.msra.mxu0 %v4507
    %5353 = vmatpush.bf16.msra.mxu0 %v4500
    %5354 = vmatpush.bf16.msra.mxu0 %v4493
    %5355 = vmatpush.bf16.msra.mxu0 %v4486
    %5356 = vmatpush.bf16.msra.mxu0 %v4479
    %5357 = vmatmul.bf16.gmra.mxu0 %v2984
    %v5358 = vpop.f32.mrf.mxu0
    %v5359 = vadd.f32 %v3387, %v5358
    %v5360 = vpop.f32.mrf.mxu0
    %5361 = vdwg.mxu0
    %5362 = vmatpush.bf16.msra.mxu0 %v4584
    %5363 = vmatpush.bf16.msra.mxu0 %v4577
    %5364 = vmatpush.bf16.msra.mxu0 %v4570
    %5365 = vmatpush.bf16.msra.mxu0 %v4563
    %5366 = vmatpush.bf16.msra.mxu0 %v4556
    %5367 = vmatpush.bf16.msra.mxu0 %v4549
    %5368 = vmatpush.bf16.msra.mxu0 %v4542
    %5369 = vmatpush.bf16.msra.mxu0 %v4535
    %5370 = vmatmul.bf16.gmra.mxu0 %v2985
    %v5371 = vpop.f32.mrf.mxu0
    %v5372 = vadd.f32 %v5359, %v5371
    %v5373 = vpop.f32.mrf.mxu0
    %5374 = vdwg.mxu0
    %5375 = vmatpush.bf16.msra.mxu0 %v4640
    %5376 = vmatpush.bf16.msra.mxu0 %v4633
    %5377 = vmatpush.bf16.msra.mxu0 %v4626
    %5378 = vmatpush.bf16.msra.mxu0 %v4619
    %5379 = vmatpush.bf16.msra.mxu0 %v4612
    %5380 = vmatpush.bf16.msra.mxu0 %v4605
    %5381 = vmatpush.bf16.msra.mxu0 %v4598
    %5382 = vmatpush.bf16.msra.mxu0 %v4591
    %5383 = vmatmul.bf16.gmra.mxu0 %v2986
    %v5384 = vpop.f32.mrf.mxu0
    %v5385 = vadd.f32 %v5372, %v5384
    %v5386 = vpop.f32.mrf.mxu0
    %5387 = vdwg.mxu0
    %5388 = vmatpush.bf16.msra.mxu0 %v4696
    %5389 = vmatpush.bf16.msra.mxu0 %v4689
    %5390 = vmatpush.bf16.msra.mxu0 %v4682
    %5391 = vmatpush.bf16.msra.mxu0 %v4675
    %5392 = vmatpush.bf16.msra.mxu0 %v4668
    %5393 = vmatpush.bf16.msra.mxu0 %v4661
    %5394 = vmatpush.bf16.msra.mxu0 %v4654
    %5395 = vmatpush.bf16.msra.mxu0 %v4647
    %5396 = vmatmul.bf16.gmra.mxu0 %v2987
    %v5397 = vpop.f32.mrf.mxu0
    %v5398 = vadd.f32 %v5385, %v5397
    %v5399 = vpop.f32.mrf.mxu0
    %5400 = vdwg.mxu0
    %5401 = vmatpush.bf16.msra.mxu0 %v4752
    %5402 = vmatpush.bf16.msra.mxu0 %v4745
    %5403 = vmatpush.bf16.msra.mxu0 %v4738
    %5404 = vmatpush.bf16.msra.mxu0 %v4731
    %5405 = vmatpush.bf16.msra.mxu0 %v4724
    %5406 = vmatpush.bf16.msra.mxu0 %v4717
    %5407 = vmatpush.bf16.msra.mxu0 %v4710
    %5408 = vmatpush.bf16.msra.mxu0 %v4703
    %5409 = vmatmul.bf16.gmra.mxu0 %v2988
    %v5410 = vpop.f32.mrf.mxu0
    %v5411 = vadd.f32 %v5398, %v5410
    %v5412 = vpop.f32.mrf.mxu0
    %5413 = vdwg.mxu0
    %5414 = vmatpush.bf16.msra.mxu0 %v4808
    %5415 = vmatpush.bf16.msra.mxu0 %v4801
    %5416 = vmatpush.bf16.msra.mxu0 %v4794
    %5417 = vmatpush.bf16.msra.mxu0 %v4787
    %5418 = vmatpush.bf16.msra.mxu0 %v4780
    %5419 = vmatpush.bf16.msra.mxu0 %v4773
    %5420 = vmatpush.bf16.msra.mxu0 %v4766
    %5421 = vmatpush.bf16.msra.mxu0 %v4759
    %5422 = vmatmul.bf16.gmra.mxu0 %v2989
    %v5423 = vpop.f32.mrf.mxu0
    %v5424 = vadd.f32 %v5411, %v5423
    %v5425 = vpop.f32.mrf.mxu0
    %5426 = vdwg.mxu0
    %5427 = vmatpush.bf16.msra.mxu0 0
    %5428 = vmatpush.bf16.msra.mxu0 0
    %5429 = vmatpush.bf16.msra.mxu0 0
    %5430 = vmatpush.bf16.msra.mxu0 0
    %5431 = vmatpush.bf16.msra.mxu0 0
    %5432 = vmatpush.bf16.msra.mxu0 0
    %5433 = vmatpush.bf16.msra.mxu0 0
    %5434 = vmatpush.bf16.msra.mxu0 %v4815
    %5435 = vmatmul.bf16.gmra.mxu0 %v5165
    %v5436 = vpop.f32.mrf.mxu0
    %v5437 = vadd.f32 %v5424, %v5436
    %v5438 = vpop.f32.mrf.mxu0
    %5439 = vdwg.mxu0
    %5440 = vmatpush.bf16.msra.mxu0 %v4529
    %5441 = vmatpush.bf16.msra.mxu0 %v4522
    %5442 = vmatpush.bf16.msra.mxu0 %v4515
    %5443 = vmatpush.bf16.msra.mxu0 %v4508
    %5444 = vmatpush.bf16.msra.mxu0 %v4501
    %5445 = vmatpush.bf16.msra.mxu0 %v4494
    %5446 = vmatpush.bf16.msra.mxu0 %v4487
    %5447 = vmatpush.bf16.msra.mxu0 %v4480
    %5448 = vmatmul.bf16.gmra.mxu0 %v2984
    %v5449 = vpop.f32.mrf.mxu0
    %v5450 = vadd.f32 %v3388, %v5449
    %v5451 = vpop.f32.mrf.mxu0
    %5452 = vdwg.mxu0
    %5453 = vmatpush.bf16.msra.mxu0 %v4585
    %5454 = vmatpush.bf16.msra.mxu0 %v4578
    %5455 = vmatpush.bf16.msra.mxu0 %v4571
    %5456 = vmatpush.bf16.msra.mxu0 %v4564
    %5457 = vmatpush.bf16.msra.mxu0 %v4557
    %5458 = vmatpush.bf16.msra.mxu0 %v4550
    %5459 = vmatpush.bf16.msra.mxu0 %v4543
    %5460 = vmatpush.bf16.msra.mxu0 %v4536
    %5461 = vmatmul.bf16.gmra.mxu0 %v2985
    %v5462 = vpop.f32.mrf.mxu0
    %v5463 = vadd.f32 %v5450, %v5462
    %v5464 = vpop.f32.mrf.mxu0
    %5465 = vdwg.mxu0
    %5466 = vmatpush.bf16.msra.mxu0 %v4641
    %5467 = vmatpush.bf16.msra.mxu0 %v4634
    %5468 = vmatpush.bf16.msra.mxu0 %v4627
    %5469 = vmatpush.bf16.msra.mxu0 %v4620
    %5470 = vmatpush.bf16.msra.mxu0 %v4613
    %5471 = vmatpush.bf16.msra.mxu0 %v4606
    %5472 = vmatpush.bf16.msra.mxu0 %v4599
    %5473 = vmatpush.bf16.msra.mxu0 %v4592
    %5474 = vmatmul.bf16.gmra.mxu0 %v2986
    %v5475 = vpop.f32.mrf.mxu0
    %v5476 = vadd.f32 %v5463, %v5475
    %v5477 = vpop.f32.mrf.mxu0
    %5478 = vdwg.mxu0
    %5479 = vmatpush.bf16.msra.mxu0 %v4697
    %5480 = vmatpush.bf16.msra.mxu0 %v4690
    %5481 = vmatpush.bf16.msra.mxu0 %v4683
    %5482 = vmatpush.bf16.msra.mxu0 %v4676
    %5483 = vmatpush.bf16.msra.mxu0 %v4669
    %5484 = vmatpush.bf16.msra.mxu0 %v4662
    %5485 = vmatpush.bf16.msra.mxu0 %v4655
    %5486 = vmatpush.bf16.msra.mxu0 %v4648
    %5487 = vmatmul.bf16.gmra.mxu0 %v2987
    %v5488 = vpop.f32.mrf.mxu0
    %v5489 = vadd.f32 %v5476, %v5488
    %v5490 = vpop.f32.mrf.mxu0
    %5491 = vdwg.mxu0
    %5492 = vmatpush.bf16.msra.mxu0 %v4753
    %5493 = vmatpush.bf16.msra.mxu0 %v4746
    %5494 = vmatpush.bf16.msra.mxu0 %v4739
    %5495 = vmatpush.bf16.msra.mxu0 %v4732
    %5496 = vmatpush.bf16.msra.mxu0 %v4725
    %5497 = vmatpush.bf16.msra.mxu0 %v4718
    %5498 = vmatpush.bf16.msra.mxu0 %v4711
    %5499 = vmatpush.bf16.msra.mxu0 %v4704
    %5500 = vmatmul.bf16.gmra.mxu0 %v2988
    %v5501 = vpop.f32.mrf.mxu0
    %v5502 = vadd.f32 %v5489, %v5501
    %v5503 = vpop.f32.mrf.mxu0
    %5504 = vdwg.mxu0
    %5505 = vmatpush.bf16.msra.mxu0 %v4809
    %5506 = vmatpush.bf16.msra.mxu0 %v4802
    %5507 = vmatpush.bf16.msra.mxu0 %v4795
    %5508 = vmatpush.bf16.msra.mxu0 %v4788
    %5509 = vmatpush.bf16.msra.mxu0 %v4781
    %5510 = vmatpush.bf16.msra.mxu0 %v4774
    %5511 = vmatpush.bf16.msra.mxu0 %v4767
    %5512 = vmatpush.bf16.msra.mxu0 %v4760
    %5513 = vmatmul.bf16.gmra.mxu0 %v2989
    %v5514 = vpop.f32.mrf.mxu0
    %v5515 = vadd.f32 %v5502, %v5514
    %v5516 = vpop.f32.mrf.mxu0
    %5517 = vdwg.mxu0
    %5518 = vmatpush.bf16.msra.mxu0 0
    %5519 = vmatpush.bf16.msra.mxu0 0
    %5520 = vmatpush.bf16.msra.mxu0 0
    %5521 = vmatpush.bf16.msra.mxu0 0
    %5522 = vmatpush.bf16.msra.mxu0 0
    %5523 = vmatpush.bf16.msra.mxu0 0
    %5524 = vmatpush.bf16.msra.mxu0 0
    %5525 = vmatpush.bf16.msra.mxu0 %v4816
    %5526 = vmatmul.bf16.gmra.mxu0 %v5165
    %v5527 = vpop.f32.mrf.mxu0
    %v5528 = vadd.f32 %v5515, %v5527
    %v5529 = vpop.f32.mrf.mxu0
    %5530 = vdwg.mxu0
    %5531 = vmatpush.bf16.msra.mxu0 %v4530
    %5532 = vmatpush.bf16.msra.mxu0 %v4523
    %5533 = vmatpush.bf16.msra.mxu0 %v4516
    %5534 = vmatpush.bf16.msra.mxu0 %v4509
    %5535 = vmatpush.bf16.msra.mxu0 %v4502
    %5536 = vmatpush.bf16.msra.mxu0 %v4495
    %5537 = vmatpush.bf16.msra.mxu0 %v4488
    %5538 = vmatpush.bf16.msra.mxu0 %v4481
    %5539 = vmatmul.bf16.gmra.mxu0 %v2984
    %v5540 = vpop.f32.mrf.mxu0
    %v5541 = vadd.f32 %v3389, %v5540
    %v5542 = vpop.f32.mrf.mxu0
    %5543 = vdwg.mxu0
    %5544 = vmatpush.bf16.msra.mxu0 %v4586
    %5545 = vmatpush.bf16.msra.mxu0 %v4579
    %5546 = vmatpush.bf16.msra.mxu0 %v4572
    %5547 = vmatpush.bf16.msra.mxu0 %v4565
    %5548 = vmatpush.bf16.msra.mxu0 %v4558
    %5549 = vmatpush.bf16.msra.mxu0 %v4551
    %5550 = vmatpush.bf16.msra.mxu0 %v4544
    %5551 = vmatpush.bf16.msra.mxu0 %v4537
    %5552 = vmatmul.bf16.gmra.mxu0 %v2985
    %v5553 = vpop.f32.mrf.mxu0
    %v5554 = vadd.f32 %v5541, %v5553
    %v5555 = vpop.f32.mrf.mxu0
    %5556 = vdwg.mxu0
    %5557 = vmatpush.bf16.msra.mxu0 %v4642
    %5558 = vmatpush.bf16.msra.mxu0 %v4635
    %5559 = vmatpush.bf16.msra.mxu0 %v4628
    %5560 = vmatpush.bf16.msra.mxu0 %v4621
    %5561 = vmatpush.bf16.msra.mxu0 %v4614
    %5562 = vmatpush.bf16.msra.mxu0 %v4607
    %5563 = vmatpush.bf16.msra.mxu0 %v4600
    %5564 = vmatpush.bf16.msra.mxu0 %v4593
    %5565 = vmatmul.bf16.gmra.mxu0 %v2986
    %v5566 = vpop.f32.mrf.mxu0
    %v5567 = vadd.f32 %v5554, %v5566
    %v5568 = vpop.f32.mrf.mxu0
    %5569 = vdwg.mxu0
    %5570 = vmatpush.bf16.msra.mxu0 %v4698
    %5571 = vmatpush.bf16.msra.mxu0 %v4691
    %5572 = vmatpush.bf16.msra.mxu0 %v4684
    %5573 = vmatpush.bf16.msra.mxu0 %v4677
    %5574 = vmatpush.bf16.msra.mxu0 %v4670
    %5575 = vmatpush.bf16.msra.mxu0 %v4663
    %5576 = vmatpush.bf16.msra.mxu0 %v4656
    %5577 = vmatpush.bf16.msra.mxu0 %v4649
    %5578 = vmatmul.bf16.gmra.mxu0 %v2987
    %v5579 = vpop.f32.mrf.mxu0
    %v5580 = vadd.f32 %v5567, %v5579
    %v5581 = vpop.f32.mrf.mxu0
    %5582 = vdwg.mxu0
    %5583 = vmatpush.bf16.msra.mxu0 %v4754
    %5584 = vmatpush.bf16.msra.mxu0 %v4747
    %5585 = vmatpush.bf16.msra.mxu0 %v4740
    %5586 = vmatpush.bf16.msra.mxu0 %v4733
    %5587 = vmatpush.bf16.msra.mxu0 %v4726
    %5588 = vmatpush.bf16.msra.mxu0 %v4719
    %5589 = vmatpush.bf16.msra.mxu0 %v4712
    %5590 = vmatpush.bf16.msra.mxu0 %v4705
    %5591 = vmatmul.bf16.gmra.mxu0 %v2988
    %v5592 = vpop.f32.mrf.mxu0
    %v5593 = vadd.f32 %v5580, %v5592
    %v5594 = vpop.f32.mrf.mxu0
    %5595 = vdwg.mxu0
    %5596 = vmatpush.bf16.msra.mxu0 %v4810
    %5597 = vmatpush.bf16.msra.mxu0 %v4803
    %5598 = vmatpush.bf16.msra.mxu0 %v4796
    %5599 = vmatpush.bf16.msra.mxu0 %v4789
    %5600 = vmatpush.bf16.msra.mxu0 %v4782
    %5601 = vmatpush.bf16.msra.mxu0 %v4775
    %5602 = vmatpush.bf16.msra.mxu0 %v4768
    %5603 = vmatpush.bf16.msra.mxu0 %v4761
    %5604 = vmatmul.bf16.gmra.mxu0 %v2989
    %v5605 = vpop.f32.mrf.mxu0
    %v5606 = vadd.f32 %v5593, %v5605
    %v5607 = vpop.f32.mrf.mxu0
    %5608 = vdwg.mxu0
    %5609 = vmatpush.bf16.msra.mxu0 0
    %5610 = vmatpush.bf16.msra.mxu0 0
    %5611 = vmatpush.bf16.msra.mxu0 0
    %5612 = vmatpush.bf16.msra.mxu0 0
    %5613 = vmatpush.bf16.msra.mxu0 0
    %5614 = vmatpush.bf16.msra.mxu0 0
    %5615 = vmatpush.bf16.msra.mxu0 0
    %5616 = vmatpush.bf16.msra.mxu0 %v4817
    %5617 = vmatmul.bf16.gmra.mxu0 %v5165
    %v5618 = vpop.f32.mrf.mxu0
    %v5619 = vadd.f32 %v5606, %v5618
    %v5620 = vpop.f32.mrf.mxu0
    %5621 = vdwg.mxu0
    %5622 = vmatpush.bf16.msra.mxu0 %v4531
    %5623 = vmatpush.bf16.msra.mxu0 %v4524
    %5624 = vmatpush.bf16.msra.mxu0 %v4517
    %5625 = vmatpush.bf16.msra.mxu0 %v4510
    %5626 = vmatpush.bf16.msra.mxu0 %v4503
    %5627 = vmatpush.bf16.msra.mxu0 %v4496
    %5628 = vmatpush.bf16.msra.mxu0 %v4489
    %5629 = vmatpush.bf16.msra.mxu0 %v4482
    %5630 = vmatmul.bf16.gmra.mxu0 %v2984
    %v5631 = vpop.f32.mrf.mxu0
    %v5632 = vadd.f32 %v3390, %v5631
    %v5633 = vpop.f32.mrf.mxu0
    %5634 = vdwg.mxu0
    %5635 = vmatpush.bf16.msra.mxu0 %v4587
    %5636 = vmatpush.bf16.msra.mxu0 %v4580
    %5637 = vmatpush.bf16.msra.mxu0 %v4573
    %5638 = vmatpush.bf16.msra.mxu0 %v4566
    %5639 = vmatpush.bf16.msra.mxu0 %v4559
    %5640 = vmatpush.bf16.msra.mxu0 %v4552
    %5641 = vmatpush.bf16.msra.mxu0 %v4545
    %5642 = vmatpush.bf16.msra.mxu0 %v4538
    %5643 = vmatmul.bf16.gmra.mxu0 %v2985
    %v5644 = vpop.f32.mrf.mxu0
    %v5645 = vadd.f32 %v5632, %v5644
    %v5646 = vpop.f32.mrf.mxu0
    %5647 = vdwg.mxu0
    %5648 = vmatpush.bf16.msra.mxu0 %v4643
    %5649 = vmatpush.bf16.msra.mxu0 %v4636
    %5650 = vmatpush.bf16.msra.mxu0 %v4629
    %5651 = vmatpush.bf16.msra.mxu0 %v4622
    %5652 = vmatpush.bf16.msra.mxu0 %v4615
    %5653 = vmatpush.bf16.msra.mxu0 %v4608
    %5654 = vmatpush.bf16.msra.mxu0 %v4601
    %5655 = vmatpush.bf16.msra.mxu0 %v4594
    %5656 = vmatmul.bf16.gmra.mxu0 %v2986
    %v5657 = vpop.f32.mrf.mxu0
    %v5658 = vadd.f32 %v5645, %v5657
    %v5659 = vpop.f32.mrf.mxu0
    %5660 = vdwg.mxu0
    %5661 = vmatpush.bf16.msra.mxu0 %v4699
    %5662 = vmatpush.bf16.msra.mxu0 %v4692
    %5663 = vmatpush.bf16.msra.mxu0 %v4685
    %5664 = vmatpush.bf16.msra.mxu0 %v4678
    %5665 = vmatpush.bf16.msra.mxu0 %v4671
    %5666 = vmatpush.bf16.msra.mxu0 %v4664
    %5667 = vmatpush.bf16.msra.mxu0 %v4657
    %5668 = vmatpush.bf16.msra.mxu0 %v4650
    %5669 = vmatmul.bf16.gmra.mxu0 %v2987
    %v5670 = vpop.f32.mrf.mxu0
    %v5671 = vadd.f32 %v5658, %v5670
    %v5672 = vpop.f32.mrf.mxu0
    %5673 = vdwg.mxu0
    %5674 = vmatpush.bf16.msra.mxu0 %v4755
    %5675 = vmatpush.bf16.msra.mxu0 %v4748
    %5676 = vmatpush.bf16.msra.mxu0 %v4741
    %5677 = vmatpush.bf16.msra.mxu0 %v4734
    %5678 = vmatpush.bf16.msra.mxu0 %v4727
    %5679 = vmatpush.bf16.msra.mxu0 %v4720
    %5680 = vmatpush.bf16.msra.mxu0 %v4713
    %5681 = vmatpush.bf16.msra.mxu0 %v4706
    %5682 = vmatmul.bf16.gmra.mxu0 %v2988
    %v5683 = vpop.f32.mrf.mxu0
    %v5684 = vadd.f32 %v5671, %v5683
    %v5685 = vpop.f32.mrf.mxu0
    %5686 = vdwg.mxu0
    %5687 = vmatpush.bf16.msra.mxu0 %v4811
    %5688 = vmatpush.bf16.msra.mxu0 %v4804
    %5689 = vmatpush.bf16.msra.mxu0 %v4797
    %5690 = vmatpush.bf16.msra.mxu0 %v4790
    %5691 = vmatpush.bf16.msra.mxu0 %v4783
    %5692 = vmatpush.bf16.msra.mxu0 %v4776
    %5693 = vmatpush.bf16.msra.mxu0 %v4769
    %5694 = vmatpush.bf16.msra.mxu0 %v4762
    %5695 = vmatmul.bf16.gmra.mxu0 %v2989
    %v5696 = vpop.f32.mrf.mxu0
    %v5697 = vadd.f32 %v5684, %v5696
    %v5698 = vpop.f32.mrf.mxu0
    %5699 = vdwg.mxu0
    %5700 = vmatpush.bf16.msra.mxu0 0
    %5701 = vmatpush.bf16.msra.mxu0 0
    %5702 = vmatpush.bf16.msra.mxu0 0
    %5703 = vmatpush.bf16.msra.mxu0 0
    %5704 = vmatpush.bf16.msra.mxu0 0
    %5705 = vmatpush.bf16.msra.mxu0 0
    %5706 = vmatpush.bf16.msra.mxu0 0
    %5707 = vmatpush.bf16.msra.mxu0 %v4818
    %5708 = vmatmul.bf16.gmra.mxu0 %v5165
    %v5709 = vpop.f32.mrf.mxu0
    %v5710 = vadd.f32 %v5697, %v5709
    %v5711 = vpop.f32.mrf.mxu0
    %5712 = vdwg.mxu0
    %5713 = vmatpush.bf16.msra.mxu0 %v4532
    %5714 = vmatpush.bf16.msra.mxu0 %v4525
    %5715 = vmatpush.bf16.msra.mxu0 %v4518
    %5716 = vmatpush.bf16.msra.mxu0 %v4511
    %5717 = vmatpush.bf16.msra.mxu0 %v4504
    %5718 = vmatpush.bf16.msra.mxu0 %v4497
    %5719 = vmatpush.bf16.msra.mxu0 %v4490
    %5720 = vmatpush.bf16.msra.mxu0 %v4483
    %5721 = vmatmul.bf16.gmra.mxu0 %v2984
    %v5722 = vpop.f32.mrf.mxu0
    %v5723 = vadd.f32 %v3391, %v5722
    %v5724 = vpop.f32.mrf.mxu0
    %5725 = vdwg.mxu0
    %5726 = vmatpush.bf16.msra.mxu0 %v4588
    %5727 = vmatpush.bf16.msra.mxu0 %v4581
    %5728 = vmatpush.bf16.msra.mxu0 %v4574
    %5729 = vmatpush.bf16.msra.mxu0 %v4567
    %5730 = vmatpush.bf16.msra.mxu0 %v4560
    %5731 = vmatpush.bf16.msra.mxu0 %v4553
    %5732 = vmatpush.bf16.msra.mxu0 %v4546
    %5733 = vmatpush.bf16.msra.mxu0 %v4539
    %5734 = vmatmul.bf16.gmra.mxu0 %v2985
    %v5735 = vpop.f32.mrf.mxu0
    %v5736 = vadd.f32 %v5723, %v5735
    %v5737 = vpop.f32.mrf.mxu0
    %5738 = vdwg.mxu0
    %5739 = vmatpush.bf16.msra.mxu0 %v4644
    %5740 = vmatpush.bf16.msra.mxu0 %v4637
    %5741 = vmatpush.bf16.msra.mxu0 %v4630
    %5742 = vmatpush.bf16.msra.mxu0 %v4623
    %5743 = vmatpush.bf16.msra.mxu0 %v4616
    %5744 = vmatpush.bf16.msra.mxu0 %v4609
    %5745 = vmatpush.bf16.msra.mxu0 %v4602
    %5746 = vmatpush.bf16.msra.mxu0 %v4595
    %5747 = vmatmul.bf16.gmra.mxu0 %v2986
    %v5748 = vpop.f32.mrf.mxu0
    %v5749 = vadd.f32 %v5736, %v5748
    %v5750 = vpop.f32.mrf.mxu0
    %5751 = vdwg.mxu0
    %5752 = vmatpush.bf16.msra.mxu0 %v4700
    %5753 = vmatpush.bf16.msra.mxu0 %v4693
    %5754 = vmatpush.bf16.msra.mxu0 %v4686
    %5755 = vmatpush.bf16.msra.mxu0 %v4679
    %5756 = vmatpush.bf16.msra.mxu0 %v4672
    %5757 = vmatpush.bf16.msra.mxu0 %v4665
    %5758 = vmatpush.bf16.msra.mxu0 %v4658
    %5759 = vmatpush.bf16.msra.mxu0 %v4651
    %5760 = vmatmul.bf16.gmra.mxu0 %v2987
    %v5761 = vpop.f32.mrf.mxu0
    %v5762 = vadd.f32 %v5749, %v5761
    %v5763 = vpop.f32.mrf.mxu0
    %5764 = vdwg.mxu0
    %5765 = vmatpush.bf16.msra.mxu0 %v4756
    %5766 = vmatpush.bf16.msra.mxu0 %v4749
    %5767 = vmatpush.bf16.msra.mxu0 %v4742
    %5768 = vmatpush.bf16.msra.mxu0 %v4735
    %5769 = vmatpush.bf16.msra.mxu0 %v4728
    %5770 = vmatpush.bf16.msra.mxu0 %v4721
    %5771 = vmatpush.bf16.msra.mxu0 %v4714
    %5772 = vmatpush.bf16.msra.mxu0 %v4707
    %5773 = vmatmul.bf16.gmra.mxu0 %v2988
    %v5774 = vpop.f32.mrf.mxu0
    %v5775 = vadd.f32 %v5762, %v5774
    %v5776 = vpop.f32.mrf.mxu0
    %5777 = vdwg.mxu0
    %5778 = vmatpush.bf16.msra.mxu0 %v4812
    %5779 = vmatpush.bf16.msra.mxu0 %v4805
    %5780 = vmatpush.bf16.msra.mxu0 %v4798
    %5781 = vmatpush.bf16.msra.mxu0 %v4791
    %5782 = vmatpush.bf16.msra.mxu0 %v4784
    %5783 = vmatpush.bf16.msra.mxu0 %v4777
    %5784 = vmatpush.bf16.msra.mxu0 %v4770
    %5785 = vmatpush.bf16.msra.mxu0 %v4763
    %5786 = vmatmul.bf16.gmra.mxu0 %v2989
    %v5787 = vpop.f32.mrf.mxu0
    %v5788 = vadd.f32 %v5775, %v5787
    %v5789 = vpop.f32.mrf.mxu0
    %5790 = vdwg.mxu0
    %5791 = vmatpush.bf16.msra.mxu0 0
    %5792 = vmatpush.bf16.msra.mxu0 0
    %5793 = vmatpush.bf16.msra.mxu0 0
    %5794 = vmatpush.bf16.msra.mxu0 0
    %5795 = vmatpush.bf16.msra.mxu0 0
    %5796 = vmatpush.bf16.msra.mxu0 0
    %5797 = vmatpush.bf16.msra.mxu0 0
    %5798 = vmatpush.bf16.msra.mxu0 %v4819
    %5799 = vmatmul.bf16.gmra.mxu0 %v5165
    %v5800 = vpop.f32.mrf.mxu0
    %v5801 = vadd.f32 %v5788, %v5800
    %v5802 = vpop.f32.mrf.mxu0
    %5803 = vdwg.mxu0
    %v5804 = vmax.f32 %v5255, 0.0
    %v5805 = vmax.f32 %v5346, 0.0
    %v5806 = vmax.f32 %v5437, 0.0
    %v5807 = vmax.f32 %v5528, 0.0
    %v5808 = vmax.f32 %v5619, 0.0
    %v5809 = vmax.f32 %v5710, 0.0
    %v5810 = vmax.f32 %v5801, 0.0
    %v5811 = vpack.c.bf16 %v5804, %v5804
    %v5812 = vpack.c.bf16 %v5805, %v5805
    %v5813 = vpack.c.bf16 %v5806, %v5806
    %v5814 = vpack.c.bf16 %v5807, %v5807
    %v5815 = vpack.c.bf16 %v5808, %v5808
    %v5816 = vpack.c.bf16 %v5809, %v5809
    %v5817 = vpack.c.bf16 %v5810, %v5810
    %v5818 = vld [vmem:[%s9] sm:$0xf]
    %v5819 = vld [vmem:[%s9 + $0x4] sm:$0xf]
    %v5820 = vld [vmem:[%s9 + $0x8] sm:$0xf]
    %v5821 = vld [vmem:[%s9 + $0xc] sm:$0xf]
    %v5822 = vld [vmem:[%s9 + $0x10] sm:$0xf]
    %v5823 = vld [vmem:[%s9 + $0x14] sm:$0xf]
    %v5824 = vld [vmem:[%s9 + $0x18] sm:$0xf]
    %v5825 = vld [vmem:[%s9 + $0x1c] sm:$0xf]
    %v5826 = vld [vmem:[%s9 + $0x20] sm:$0xf]
    %v5827 = vld [vmem:[%s9 + $0x24] sm:$0xf]
    %v5828 = vld [vmem:[%s9 + $0x28] sm:$0xf]
    %v5829 = vld [vmem:[%s9 + $0x2c] sm:$0xf]
    %v5830 = vld [vmem:[%s9 + $0x30] sm:$0xf]
    %v5831 = vld [vmem:[%s9 + $0x34] sm:$0xf]
    %v5832 = vld [vmem:[%s9 + $0x38] sm:$0xf]
    %v5833 = vld [vmem:[%s9 + $0x3c] sm:$0xf]
    %v5834 = vld [vmem:[%s9 + $0x40] sm:$0xf]
    %v5835 = vld [vmem:[%s9 + $0x44] sm:$0xf]
    %v5836 = vld [vmem:[%s9 + $0x48] sm:$0xf]
    %v5837 = vld [vmem:[%s9 + $0x4c] sm:$0xf]
    %v5838 = vld [vmem:[%s9 + $0x50] sm:$0xf]
    %v5839 = vld [vmem:[%s9 + $0x54] sm:$0xf]
    %v5840 = vld [vmem:[%s9 + $0x58] sm:$0xf]
    %v5841 = vld [vmem:[%s9 + $0x5c] sm:$0xf]
    %v5842 = vld [vmem:[%s9 + $0x60] sm:$0xf]
    %v5843 = vld [vmem:[%s9 + $0x64] sm:$0xf]
    %v5844 = vld [vmem:[%s9 + $0x68] sm:$0xf]
    %v5845 = vld [vmem:[%s9 + $0x6c] sm:$0xf]
    %v5846 = vld [vmem:[%s9 + $0x70] sm:$0xf]
    %v5847 = vld [vmem:[%s9 + $0x74] sm:$0xf]
    %v5848 = vld [vmem:[%s9 + $0x78] sm:$0xf]
    %v5849 = vld [vmem:[%s9 + $0x7c] sm:$0xf]
    %v5850 = vld [vmem:[%s9 + $0x80] sm:$0xf]
    %v5851 = vld [vmem:[%s9 + $0x84] sm:$0xf]
    %v5852 = vld [vmem:[%s9 + $0x88] sm:$0xf]
    %v5853 = vld [vmem:[%s9 + $0x8c] sm:$0xf]
    %v5854 = vld [vmem:[%s9 + $0x90] sm:$0xf]
    %v5855 = vld [vmem:[%s9 + $0x94] sm:$0xf]
    %v5856 = vld [vmem:[%s9 + $0x98] sm:$0xf]
    %v5857 = vld [vmem:[%s9 + $0x9c] sm:$0xf]
    %v5858 = vld [vmem:[%s9 + $0xa0] sm:$0xf]
    %v5859 = vld [vmem:[%s9 + $0xa4] sm:$0xf]
    %v5860 = vld [vmem:[%s9 + $0xa8] sm:$0xf]
    %v5861 = vld [vmem:[%s9 + $0xac] sm:$0xf]
    %v5862 = vld [vmem:[%s9 + $0xb0] sm:$0xf]
    %v5863 = vld [vmem:[%s9 + $0xb4] sm:$0xf]
    %v5864 = vld [vmem:[%s9 + $0xb8] sm:$0xf]
    %v5865 = vld [vmem:[%s9 + $0xbc] sm:$0xf]
    %v5866 = vld [vmem:[%s9 + $0xc0] sm:$0xf]
    %v5867 = vld [vmem:[%s9 + $0xc4] sm:$0xf]
    %v5868 = vld [vmem:[%s9 + $0xc8] sm:$0xf]
    %v5869 = vld [vmem:[%s9 + $0xcc] sm:$0xf]
    %v5870 = vld [vmem:[%s9 + $0xd0] sm:$0xf]
    %v5871 = vld [vmem:[%s9 + $0xd4] sm:$0xf]
    %v5872 = vld [vmem:[%s9 + $0xd8] sm:$0xf]
    %v5873 = vld [vmem:[%s9 + $0xdc] sm:$0xf]
    %v5874 = vld [vmem:[%s9 + $0xe0] sm:$0xf]
    %v5875 = vld [vmem:[%s9 + $0xe4] sm:$0xf]
    %v5876 = vld [vmem:[%s9 + $0xe8] sm:$0xf]
    %v5877 = vld [vmem:[%s9 + $0xec] sm:$0xf]
    %v5878 = vld [vmem:[%s9 + $0xf0] sm:$0xf]
    %v5879 = vld [vmem:[%s9 + $0xf4] sm:$0xf]
    %v5880 = vld [vmem:[%s9 + $0xf8] sm:$0xf]
    %v5881 = vld [vmem:[%s9 + $0xfc] sm:$0xf]
    %v5882 = vld [vmem:[%s9 + $0x100] sm:$0xf]
    %v5883 = vld [vmem:[%s9 + $0x104] sm:$0xf]
    %v5884 = vld [vmem:[%s9 + $0x108] sm:$0xf]
    %v5885 = vld [vmem:[%s9 + $0x10c] sm:$0xf]
    %v5886 = vld [vmem:[%s9 + $0x110] sm:$0xf]
    %v5887 = vld [vmem:[%s9 + $0x114] sm:$0xf]
    %v5888 = vld [vmem:[%s9 + $0x118] sm:$0xf]
    %v5889 = vld [vmem:[%s9 + $0x11c] sm:$0xf]
    %v5890 = vld [vmem:[%s9 + $0x120] sm:$0xf]
    %v5891 = vld [vmem:[%s9 + $0x124] sm:$0xf]
    %v5892 = vld [vmem:[%s9 + $0x128] sm:$0xf]
    %v5893 = vld [vmem:[%s9 + $0x12c] sm:$0xf]
    %v5894 = vld [vmem:[%s9 + $0x130] sm:$0xf]
    %v5895 = vld [vmem:[%s9 + $0x134] sm:$0xf]
    %v5896 = vld [vmem:[%s9 + $0x138] sm:$0xf]
    %v5897 = vld [vmem:[%s9 + $0x13c] sm:$0xf]
    %v5898 = vld [vmem:[%s9 + $0x140] sm:$0xf]
    %v5899 = vld [vmem:[%s9 + $0x144] sm:$0xf]
    %v5900 = vld [vmem:[%s9 + $0x148] sm:$0xf]
    %v5901 = vld [vmem:[%s9 + $0x14c] sm:$0xf]
    %v5902 = vld [vmem:[%s9 + $0x150] sm:$0xf]
    %v5903 = vld [vmem:[%s9 + $0x154] sm:$0xf]
    %v5904 = vld [vmem:[%s9 + $0x158] sm:$0xf]
    %v5905 = vld [vmem:[%s9 + $0x15c] sm:$0xf]
    %v5906 = vld [vmem:[%s9 + $0x160] sm:$0xf]
    %v5907 = vld [vmem:[%s9 + $0x164] sm:$0xf]
    %v5908 = vld [vmem:[%s9 + $0x168] sm:$0xf]
    %v5909 = vld [vmem:[%s9 + $0x16c] sm:$0xf]
    %v5910 = vld [vmem:[%s9 + $0x170] sm:$0xf]
    %v5911 = vld [vmem:[%s9 + $0x174] sm:$0xf]
    %v5912 = vld [vmem:[%s9 + $0x178] sm:$0xf]
    %v5913 = vld [vmem:[%s9 + $0x17c] sm:$0xf]
    %v5914 = vld [vmem:[%s9 + $0x180] sm:$0xf]
    %v5915 = vld [vmem:[%s9 + $0x184] sm:$0xf]
    %v5916 = vld [vmem:[%s9 + $0x188] sm:$0xf]
    %v5917 = vld [vmem:[%s9 + $0x18c] sm:$0xf]
    %v5918 = vld [vmem:[#allocation12] sm:$0x1]
    %v5920 = vperm.slane %v5918, 0
    %v6022 = vunpack.c.l.b16 %v5818
    %v6023 = vunpack.c.l.b16 %v5819
    %v6024 = vunpack.c.l.b16 %v5820
    %v6025 = vunpack.c.l.b16 %v5821
    %v6026 = vunpack.c.l.b16 %v5822
    %v6027 = vunpack.c.l.b16 %v5823
    %v6028 = vunpack.c.l.b16 %v5824
    %v6029 = vunpack.c.l.b16 %v5825
    %v6030 = vunpack.c.l.b16 %v5826
    %v6031 = vunpack.c.l.b16 %v5827
    %v6032 = vunpack.c.l.b16 %v5828
    %v6033 = vunpack.c.l.b16 %v5829
    %v6034 = vunpack.c.l.b16 %v5830
    %v6035 = vunpack.c.l.b16 %v5831
    %v6036 = vunpack.c.l.b16 %v5832
    %v6037 = vunpack.c.l.b16 %v5833
    %v6038 = vunpack.c.l.b16 %v5834
    %v6039 = vunpack.c.l.b16 %v5835
    %v6040 = vunpack.c.l.b16 %v5836
    %v6041 = vunpack.c.l.b16 %v5837
    %v6042 = vunpack.c.l.b16 %v5838
    %v6043 = vunpack.c.l.b16 %v5839
    %v6044 = vunpack.c.l.b16 %v5840
    %v6045 = vunpack.c.l.b16 %v5841
    %v6046 = vunpack.c.l.b16 %v5842
    %v6047 = vunpack.c.l.b16 %v5843
    %v6048 = vunpack.c.l.b16 %v5844
    %v6049 = vunpack.c.l.b16 %v5845
    %v6050 = vunpack.c.l.b16 %v5846
    %v6051 = vunpack.c.l.b16 %v5847
    %v6052 = vunpack.c.l.b16 %v5848
    %v6053 = vunpack.c.l.b16 %v5849
    %v6054 = vunpack.c.l.b16 %v5850
    %v6055 = vunpack.c.l.b16 %v5851
    %v6056 = vunpack.c.l.b16 %v5852
    %v6057 = vunpack.c.l.b16 %v5853
    %v6058 = vunpack.c.l.b16 %v5854
    %v6059 = vunpack.c.l.b16 %v5855
    %v6060 = vunpack.c.l.b16 %v5856
    %v6061 = vunpack.c.l.b16 %v5857
    %v6062 = vunpack.c.l.b16 %v5858
    %v6063 = vunpack.c.l.b16 %v5859
    %v6064 = vunpack.c.l.b16 %v5860
    %v6065 = vunpack.c.l.b16 %v5861
    %v6066 = vunpack.c.l.b16 %v5862
    %v6067 = vunpack.c.l.b16 %v5863
    %v6068 = vunpack.c.l.b16 %v5864
    %v6069 = vunpack.c.l.b16 %v5865
    %v6070 = vunpack.c.l.b16 %v5866
    %v6071 = vunpack.c.l.b16 %v5867
    %v6072 = vunpack.c.l.b16 %v5868
    %v6073 = vunpack.c.l.b16 %v5869
    %v6074 = vunpack.c.l.b16 %v5870
    %v6075 = vunpack.c.l.b16 %v5871
    %v6076 = vunpack.c.l.b16 %v5872
    %v6077 = vunpack.c.l.b16 %v5873
    %v6078 = vunpack.c.l.b16 %v5874
    %v6079 = vunpack.c.l.b16 %v5875
    %v6080 = vunpack.c.l.b16 %v5876
    %v6081 = vunpack.c.l.b16 %v5877
    %v6082 = vunpack.c.l.b16 %v5878
    %v6083 = vunpack.c.l.b16 %v5879
    %v6084 = vunpack.c.l.b16 %v5880
    %v6085 = vunpack.c.l.b16 %v5881
    %v6086 = vunpack.c.l.b16 %v5882
    %v6087 = vunpack.c.l.b16 %v5883
    %v6088 = vunpack.c.l.b16 %v5884
    %v6089 = vunpack.c.l.b16 %v5885
    %v6090 = vunpack.c.l.b16 %v5886
    %v6091 = vunpack.c.l.b16 %v5887
    %v6092 = vunpack.c.l.b16 %v5888
    %v6093 = vunpack.c.l.b16 %v5889
    %v6094 = vunpack.c.l.b16 %v5890
    %v6095 = vunpack.c.l.b16 %v5891
    %v6096 = vunpack.c.l.b16 %v5892
    %v6097 = vunpack.c.l.b16 %v5893
    %v6098 = vunpack.c.l.b16 %v5894
    %v6099 = vunpack.c.l.b16 %v5895
    %v6100 = vunpack.c.l.b16 %v5896
    %v6101 = vunpack.c.l.b16 %v5897
    %v6102 = vunpack.c.l.b16 %v5898
    %v6103 = vunpack.c.l.b16 %v5899
    %v6104 = vunpack.c.l.b16 %v5900
    %v6105 = vunpack.c.l.b16 %v5901
    %v6106 = vunpack.c.l.b16 %v5902
    %v6107 = vunpack.c.l.b16 %v5903
    %v6108 = vunpack.c.l.b16 %v5904
    %v6109 = vunpack.c.l.b16 %v5905
    %v6110 = vunpack.c.l.b16 %v5906
    %v6111 = vunpack.c.l.b16 %v5907
    %v6112 = vunpack.c.l.b16 %v5908
    %v6113 = vunpack.c.l.b16 %v5909
    %v6114 = vunpack.c.l.b16 %v5910
    %v6115 = vunpack.c.l.b16 %v5911
    %v6116 = vunpack.c.l.b16 %v5912
    %v6117 = vunpack.c.l.b16 %v5913
    %v6118 = vunpack.c.l.b16 %v5914
    %v6119 = vunpack.c.l.b16 %v5915
    %v6120 = vunpack.c.l.b16 %v5916
    %v6121 = vunpack.c.l.b16 %v5917
    %v6122 = vpack.c.b16 %v6023, %v6022
    %v6123 = vpack.c.b16 %v6025, %v6024
    %v6124 = vpack.c.b16 %v6027, %v6026
    %v6125 = vpack.c.b16 %v6029, %v6028
    %v6126 = vpack.c.b16 %v6031, %v6030
    %v6127 = vpack.c.b16 %v6033, %v6032
    %v6128 = vpack.c.b16 %v6035, %v6034
    %v6129 = vpack.c.b16 %v6037, %v6036
    %v6130 = vpack.c.b16 %v6039, %v6038
    %v6131 = vpack.c.b16 %v6041, %v6040
    %v6132 = vpack.c.b16 %v6043, %v6042
    %v6133 = vpack.c.b16 %v6045, %v6044
    %v6134 = vpack.c.b16 %v6047, %v6046
    %v6135 = vpack.c.b16 %v6049, %v6048
    %v6136 = vpack.c.b16 %v6051, %v6050
    %v6137 = vpack.c.b16 %v6053, %v6052
    %v6138 = vpack.c.b16 %v6055, %v6054
    %v6139 = vpack.c.b16 %v6057, %v6056
    %v6140 = vpack.c.b16 %v6059, %v6058
    %v6141 = vpack.c.b16 %v6061, %v6060
    %v6142 = vpack.c.b16 %v6063, %v6062
    %v6143 = vpack.c.b16 %v6065, %v6064
    %v6144 = vpack.c.b16 %v6067, %v6066
    %v6145 = vpack.c.b16 %v6069, %v6068
    %v6146 = vpack.c.b16 %v6071, %v6070
    %v6147 = vpack.c.b16 %v6073, %v6072
    %v6148 = vpack.c.b16 %v6075, %v6074
    %v6149 = vpack.c.b16 %v6077, %v6076
    %v6150 = vpack.c.b16 %v6079, %v6078
    %v6151 = vpack.c.b16 %v6081, %v6080
    %v6152 = vpack.c.b16 %v6083, %v6082
    %v6153 = vpack.c.b16 %v6085, %v6084
    %v6154 = vpack.c.b16 %v6087, %v6086
    %v6155 = vpack.c.b16 %v6089, %v6088
    %v6156 = vpack.c.b16 %v6091, %v6090
    %v6157 = vpack.c.b16 %v6093, %v6092
    %v6158 = vpack.c.b16 %v6095, %v6094
    %v6159 = vpack.c.b16 %v6097, %v6096
    %v6160 = vpack.c.b16 %v6099, %v6098
    %v6161 = vpack.c.b16 %v6101, %v6100
    %v6162 = vpack.c.b16 %v6103, %v6102
    %v6163 = vpack.c.b16 %v6105, %v6104
    %v6164 = vpack.c.b16 %v6107, %v6106
    %v6165 = vpack.c.b16 %v6109, %v6108
    %v6166 = vpack.c.b16 %v6111, %v6110
    %v6167 = vpack.c.b16 %v6113, %v6112
    %v6168 = vpack.c.b16 %v6115, %v6114
    %v6169 = vpack.c.b16 %v6117, %v6116
    %v6170 = vpack.c.b16 %v6119, %v6118
    %v6171 = vpack.c.b16 %v6121, %v6120
    %vm6222 = vcmask 261120
    %v6224 = vsel %vm6222, %v5817, 0
    %6226 = vmatpush.bf16.msra.mxu0 %v6129
    %6227 = vmatpush.bf16.msra.mxu0 %v6128
    %6228 = vmatpush.bf16.msra.mxu0 %v6127
    %6229 = vmatpush.bf16.msra.mxu0 %v6126
    %6230 = vmatpush.bf16.msra.mxu0 %v6125
    %6231 = vmatpush.bf16.msra.mxu0 %v6124
    %6232 = vmatpush.bf16.msra.mxu0 %v6123
    %6233 = vmatpush.bf16.msra.mxu0 %v6122
    %6234 = vmatmul.bf16.gmra.mxu0 %v5811
    %v6235 = vpop.f32.mrf.mxu0
    %v6236 = vadd.f32 %v5920, %v6235
    %v6237 = vpop.f32.mrf.mxu0
    %6238 = vdwg.mxu0
    %6239 = vmatpush.bf16.msra.mxu0 %v6137
    %6240 = vmatpush.bf16.msra.mxu0 %v6136
    %6241 = vmatpush.bf16.msra.mxu0 %v6135
    %6242 = vmatpush.bf16.msra.mxu0 %v6134
    %6243 = vmatpush.bf16.msra.mxu0 %v6133
    %6244 = vmatpush.bf16.msra.mxu0 %v6132
    %6245 = vmatpush.bf16.msra.mxu0 %v6131
    %6246 = vmatpush.bf16.msra.mxu0 %v6130
    %6247 = vmatmul.bf16.gmra.mxu0 %v5812
    %v6248 = vpop.f32.mrf.mxu0
    %v6249 = vadd.f32 %v6236, %v6248
    %v6250 = vpop.f32.mrf.mxu0
    %6251 = vdwg.mxu0
    %6252 = vmatpush.bf16.msra.mxu0 %v6145
    %6253 = vmatpush.bf16.msra.mxu0 %v6144
    %6254 = vmatpush.bf16.msra.mxu0 %v6143
    %6255 = vmatpush.bf16.msra.mxu0 %v6142
    %6256 = vmatpush.bf16.msra.mxu0 %v6141
    %6257 = vmatpush.bf16.msra.mxu0 %v6140
    %6258 = vmatpush.bf16.msra.mxu0 %v6139
    %6259 = vmatpush.bf16.msra.mxu0 %v6138
    %6260 = vmatmul.bf16.gmra.mxu0 %v5813
    %v6261 = vpop.f32.mrf.mxu0
    %v6262 = vadd.f32 %v6249, %v6261
    %v6263 = vpop.f32.mrf.mxu0
    %6264 = vdwg.mxu0
    %6265 = vmatpush.bf16.msra.mxu0 %v6153
    %6266 = vmatpush.bf16.msra.mxu0 %v6152
    %6267 = vmatpush.bf16.msra.mxu0 %v6151
    %6268 = vmatpush.bf16.msra.mxu0 %v6150
    %6269 = vmatpush.bf16.msra.mxu0 %v6149
    %6270 = vmatpush.bf16.msra.mxu0 %v6148
    %6271 = vmatpush.bf16.msra.mxu0 %v6147
    %6272 = vmatpush.bf16.msra.mxu0 %v6146
    %6273 = vmatmul.bf16.gmra.mxu0 %v5814
    %v6274 = vpop.f32.mrf.mxu0
    %v6275 = vadd.f32 %v6262, %v6274
    %v6276 = vpop.f32.mrf.mxu0
    %6277 = vdwg.mxu0
    %6278 = vmatpush.bf16.msra.mxu0 %v6161
    %6279 = vmatpush.bf16.msra.mxu0 %v6160
    %6280 = vmatpush.bf16.msra.mxu0 %v6159
    %6281 = vmatpush.bf16.msra.mxu0 %v6158
    %6282 = vmatpush.bf16.msra.mxu0 %v6157
    %6283 = vmatpush.bf16.msra.mxu0 %v6156
    %6284 = vmatpush.bf16.msra.mxu0 %v6155
    %6285 = vmatpush.bf16.msra.mxu0 %v6154
    %6286 = vmatmul.bf16.gmra.mxu0 %v5815
    %v6287 = vpop.f32.mrf.mxu0
    %v6288 = vadd.f32 %v6275, %v6287
    %v6289 = vpop.f32.mrf.mxu0
    %6290 = vdwg.mxu0
    %6291 = vmatpush.bf16.msra.mxu0 %v6169
    %6292 = vmatpush.bf16.msra.mxu0 %v6168
    %6293 = vmatpush.bf16.msra.mxu0 %v6167
    %6294 = vmatpush.bf16.msra.mxu0 %v6166
    %6295 = vmatpush.bf16.msra.mxu0 %v6165
    %6296 = vmatpush.bf16.msra.mxu0 %v6164
    %6297 = vmatpush.bf16.msra.mxu0 %v6163
    %6298 = vmatpush.bf16.msra.mxu0 %v6162
    %6299 = vmatmul.bf16.gmra.mxu0 %v5816
    %v6300 = vpop.f32.mrf.mxu0
    %v6301 = vadd.f32 %v6288, %v6300
    %v6302 = vpop.f32.mrf.mxu0
    %6303 = vdwg.mxu0
    %6304 = vmatpush.bf16.msra.mxu0 0
    %6305 = vmatpush.bf16.msra.mxu0 0
    %6306 = vmatpush.bf16.msra.mxu0 0
    %6307 = vmatpush.bf16.msra.mxu0 0
    %6308 = vmatpush.bf16.msra.mxu0 0
    %6309 = vmatpush.bf16.msra.mxu0 0
    %6310 = vmatpush.bf16.msra.mxu0 %v6171
    %6311 = vmatpush.bf16.msra.mxu0 %v6170
    %6312 = vmatmul.bf16.gmra.mxu0 %v6224
    %v6313 = vpop.f32.mrf.mxu0
    %v6314 = vadd.f32 %v6301, %v6313
    %v6315 = vpop.f32.mrf.mxu0
    %6316 = vdwg.mxu0
    %v6317 = vmax.f32 %v6314, 0.0
    %v6318 = vld [vmem:[%s11] sm:$0xff]
    %v6319 = vld [vmem:[%s11 + $0x8] sm:$0xff]
    %v6320 = vld [vmem:[%s11 + $0x10] sm:$0xff]
    %v6321 = vld [vmem:[%s11 + $0x18] sm:$0xff]
    %v6322 = vld [vmem:[%s1] sm:$0xff]
    %v6323 = vld [vmem:[#allocation13] sm:$0xf]
    %vm6324 = vcmask 31744
    %v6326 = vsel %vm6324, %v6322, 0
    %v6329 = vsel %vm496, %v6323, 0
    %6331 = vmatpush.msra.mxu0 0.0
    %6332 = vmatpush.msra.mxu0 0.0
    %6333 = vmatpush.msra.mxu0 0.0
    %6334 = vmatpush.msra.mxu0 0.0
    %6335 = vmatpush.msra.mxu0 0.0
    %6336 = vmatpush.msra.mxu0 0.0
    %6337 = vmatpush.msra.mxu0 0.0
    %6338 = vmatpush.msra.mxu0 0.0
    %6339 = vmatpush.msra.mxu0 0.0
    %6340 = vmatpush.msra.mxu0 0.0
    %6341 = vmatpush.msra.mxu0 0.0
    %6342 = vmatpush.msra.mxu0 0.0
    %6343 = vmatpush.msra.mxu0 0.0
    %6344 = vmatpush.msra.mxu0 0.0
    %6345 = vmatpush.msra.mxu0 0.0
    %6346 = vmatpush.msra.mxu0 %v6329
    %6347 = vmatmul.f32.gmra.mxu0 %v6326
    %v6348 = vpop.f32.mrf.mxu0
    %v6349 = vadd.f32 0.0, %v6348
    %6350 = vdwg.mxu0
    %v6352 = vsel %vm6222, %v6317, 0
    %6354 = vmatpush.msra.mxu0 0.0
    %6355 = vmatpush.msra.mxu0 0.0
    %6356 = vmatpush.msra.mxu0 0.0
    %6357 = vmatpush.msra.mxu0 0.0
    %6358 = vmatpush.msra.mxu0 0.0
    %6359 = vmatpush.msra.mxu0 0.0
    %6360 = vmatpush.msra.mxu0 0.0
    %6361 = vmatpush.msra.mxu0 0.0
    %6362 = vmatpush.msra.mxu0 0.0
    %6363 = vmatpush.msra.mxu0 0.0
    %6364 = vmatpush.msra.mxu0 0.0
    %6365 = vmatpush.msra.mxu0 0.0
    %6366 = vmatpush.msra.mxu0 %v6321
    %6367 = vmatpush.msra.mxu0 %v6320
    %6368 = vmatpush.msra.mxu0 %v6319
    %6369 = vmatpush.msra.mxu0 %v6318
    %6370 = vmatmul.f32.gmra.mxu0 %v6352
    %v6371 = vpop.f32.mrf.mxu0
    %v6372 = vadd.f32 %v6349, %v6371
    %6373 = vdwg.mxu0
    %v6374 = vld [vmem:[#allocation15] sm:$0x1]
    %v6376 = vperm.slane %v6374, 0
    %v6378 = vadd.f32 %v6372, %v6376
    %v6379 = vmax.f32 %v6378, 0.0
    %v6380 = vld [vmem:[%s14] sm:$0xff]
    %v6381 = vld [vmem:[%s14 + $0x8] sm:$0xff]
    %v6382 = vld [vmem:[#allocation16] sm:$0x1]
    %v6384 = vperm.slane %v6382, 0
    %v6387 = vsel %vm5163, %v6379, 0
    %6389 = vmatpush.msra.mxu0 0.0
    %6390 = vmatpush.msra.mxu0 0.0
    %6391 = vmatpush.msra.mxu0 0.0
    %6392 = vmatpush.msra.mxu0 0.0
    %6393 = vmatpush.msra.mxu0 0.0
    %6394 = vmatpush.msra.mxu0 0.0
    %6395 = vmatpush.msra.mxu0 0.0
    %6396 = vmatpush.msra.mxu0 0.0
    %6397 = vmatpush.msra.mxu0 0.0
    %6398 = vmatpush.msra.mxu0 0.0
    %6399 = vmatpush.msra.mxu0 0.0
    %6400 = vmatpush.msra.mxu0 0.0
    %6401 = vmatpush.msra.mxu0 0.0
    %6402 = vmatpush.msra.mxu0 0.0
    %6403 = vmatpush.msra.mxu0 %v6381
    %6404 = vmatpush.msra.mxu0 %v6380
    %6405 = vmatmul.f32.gmra.mxu0 %v6387
    %v6406 = vpop.f32.mrf.mxu0
    %v6407 = vadd.f32 %v6384, %v6406
    %6408 = vdwg.mxu0
    %v6409 = vsub.f32 0.0, %v6407
    %v6410 = vmul.f32 %v6409, 1.442695
    %v6411 = vpow.pop %v6410
    %v6412 = vadd.f32 %v6411, 1.0
    %v6413 = vrcp.pop %v6412
    %v6414 = vld [vmem:[%s2] sm:$0xff]
    %vm6415 = vcmp.gt.f32.partialorder %v6414, 0.0
    %6417 = vrot.lane.b32.xlu0 %v6407, 127
    %v6418 = vpop.permute.xlu0 %6417
    %v6420 = vsel %vm6415, %v6418, -inf
    %vm6421 = vcmask 23552
    %v6422 = vsel %vm6421, %v6420, -inf
    %6423 = vmax.xlane.f32.xlu0 %v6422
    %v6424 = vpop.xlane.xlu0 %6423
    %v6425 = vsub.f32 %v6420, %v6424
    %v6426 = vmul.f32 %v6425, 1.442695
    %v6427 = vpow.pop %v6426
    %v6428 = vsel %vm6421, %v6427, 0.0
    %6429 = vadd.xlane.f32.xlu0 %v6428
    %v6430 = vpop.xlane.xlu0 %6429
    %v6431 = vrcp.pop %v6430
    %v6432 = vmul.f32 %v6430, %v6431
    %v6433 = vsub.f32 1.0, %v6432
    %v6434 = vmul.f32 %v6431, %v6433
    %v6435 = vadd.f32 %v6431, %v6434
    %vm6436 = vweird.f32 %v6430
    %vm6437 = vweird.f32 %v6431
    %vm6438 = vmor %vm6436, %vm6437
    %v6439 = vsel %vm6438, %v6431, %v6435
    %v6440 = vand.u32 2147483647, %v6430
    %vm6441 = vcmp.eq.f32.partialorder %v6440, 8.507059e+37
    %v6442 = vand.u32 %v6430, 2147483648
    %v6443 = vor.u32 1.1754944e-38, %v6442
    %v6444 = vsel %vm6441, %v6443, %v6439
    %v6445 = vmul.f32 %v6427, %v6444
    %vm6446 = vcmask 7168
    %6447 = vst.msk [vmem:[%s16] sm:$0xff] %vm6446, %v6413
    %6449 = vrot.lane.b32.xlu0 %v6445, 1
    %v6450 = vpop.permute.xlu0 %6449
    %vm6452 = vcmask 31752
    %6453 = vst.msk [vmem:[%s16] sm:$0xff] %vm6452, %v6450
    // Predicated region
    $region106: #{tpu_custom_call.1} parent=1 // pred_check
      _
    $region107: #{tpu_custom_call.1} parent=1 // pred_check_branch
      %6455 = sbr.rel (0) target = $region109
    $region108: #{tpu_custom_call.1} parent=1 // pred_region
      _
    $region109: #{tpu_custom_call.1} parent=1 // pred_fallthru
      _
    // Predicated region
    $region110: #{tpu_custom_call.1} parent=1 // pred_check
      _
    $region111: #{tpu_custom_call.1} parent=1 // pred_check_branch
      %6457 = sbr.rel (0) target = $region113
    $region112: #{tpu_custom_call.1} parent=1 // pred_region
      _
    $region113: #{tpu_custom_call.1} parent=1 // pred_fallthru
      _
    %6458 = vsyncpa [#allocation3], 1
    %6459 = vsyncpa [#allocation5], 1
    %6460 = vsyncpa [#allocation8], 1
    %6461 = vsyncpa [#allocation11], 1
    %6462 = vsyncpa [#allocation14], 1
    %6463 = vsyncpa [#allocation17], 1

</llo_original>
